<compile_context>
chip_gen: v7x
topology: tpu7x:2x2x1
jax: 0.10.0
libtpu: 0.0.40
codegen_flags: <defaults>
</compile_context>

<pallas_src>
import functools

import jax
import jax.numpy as jnp
from jax.experimental import pallas as pl
from jax.experimental.pallas import tpu as pltpu

# arch -> layer input widths (input is always 2; last Linear maps to outSize)
_ARCH_DIMS = {
    1: (2, 25, 50, 100, 50),
    2: (2, 75, 75, 75, 25),
    3: (2, 75, 75, 25),
}


def _prelu(v, a):
    # PyTorch PReLU (single shared slope): max(0, x) + a * min(0, x)
    return jnp.where(v >= 0, v, a * v)


def _make_kernel(n_layers, batch_major_out):
    def kernel(a_ref, x_ref, *refs):
        # refs = (w1, b1, ..., wn, bn, o_ref); activations are feature-major.
        o_ref = refs[-1]
        h = x_ref[...]                                   # (in_dim, block_b)
        for li in range(n_layers):
            w = refs[2 * li][...]                        # (out, in)  PyTorch layout
            b = refs[2 * li + 1][...]                    # (out, 1) -> lane broadcast
            if li == 0 and w.shape[1] == 2:
                # K=2 matmul wastes the MXU; two VPU broadcast-FMAs instead.
                h = w[:, 0:1] * h[0:1, :] + w[:, 1:2] * h[1:2, :] + b
            else:
                h = jnp.dot(w, h, preferred_element_type=jnp.float32,
                            precision=jax.lax.Precision.HIGHEST) + b
            if li < n_layers - 1:
                h = _prelu(h, a_ref[li])                 # scalar slope from SMEM
        if batch_major_out:
            # In-kernel transpose on the XLU: store (block_b, out_size) tiles so
            # no extra full-output HBM transpose pass is needed outside.
            o_ref[...] = h.T.astype(o_ref.dtype)
        else:
            o_ref[...] = h.astype(o_ref.dtype)
    return kernel


def _resident_spec(shape):
    # Same full tile every grid step: weights / biases stay VMEM-resident.
    nd = len(shape)
    return pl.BlockSpec(shape, lambda i, _nd=nd: (0,) * _nd)


@functools.partial(jax.jit,
                   static_argnames=("block_b", "out_dtype", "feature_major_out"))
def pod_nn_forward(x, params, block_b=8192, out_dtype=jnp.float32,
                   feature_major_out=False):
    """x: (B, 2) f32.  params: w1..wn (out,in), b1..bn (out,1), prelu (n-1,).

    Returns (B, out_size) by default (batch-major, like the PyTorch module), or
    (out_size, B) feature-major when feature_major_out=True (lane-dense stores).
    """
    B, in_dim = x.shape
    n_layers = len([k for k in params if k.startswith("w")])
    out_size = params[f"w{n_layers}"].shape[0]
    out_dtype = jnp.dtype(out_dtype)

    # Clamp the tile to the 128-rounded batch so small batches don't over-pad;
    # keep it a multiple of 128 (lane width).
    block_b = max(128, min((block_b // 128) * 128, pl.cdiv(B, 128) * 128))
    num_tiles = pl.cdiv(B, block_b)
    Bp = num_tiles * block_b

    # Feature-major activations: batch on the lane axis, zero-padded to Bp.
    xT = x.T
    if Bp != B:
        xT = jnp.pad(xT, ((0, 0), (0, Bp - B)))          # (in_dim, Bp)

    in_specs = [
        pl.BlockSpec((n_layers - 1,), lambda i: (0,),
                     memory_space=pltpu.MemorySpace.SMEM),  # packed PReLU slopes
        pl.BlockSpec((in_dim, block_b), lambda i: (0, i)),  # activation tile
    ]
    args = [params["prelu"], xT]
    flops = 0
    param_bytes = 0
    for li in range(1, n_layers + 1):
        w = params[f"w{li}"]
        b = params[f"b{li}"]
        in_specs += [_resident_spec(w.shape), _resident_spec(b.shape)]
        args += [w, b]
        flops += 2 * Bp * int(w.shape[0]) * int(w.shape[1])
        param_bytes += 4 * (int(w.size) + int(b.size))

    if feature_major_out:
        out_shape = jax.ShapeDtypeStruct((out_size, Bp), out_dtype)
        out_spec = pl.BlockSpec((out_size, block_b), lambda i: (0, i))
    else:
        out_shape = jax.ShapeDtypeStruct((Bp, out_size), out_dtype)
        out_spec = pl.BlockSpec((block_b, out_size), lambda i: (i, 0))

    cost = pl.CostEstimate(
        flops=flops,
        transcendentals=0,
        bytes_accessed=(4 * Bp * in_dim
                        + out_dtype.itemsize * Bp * out_size
                        + param_bytes),
    )

    out = pl.pallas_call(
        _make_kernel(n_layers, batch_major_out=not feature_major_out),
        out_shape=out_shape,
        grid=(num_tiles,),
        in_specs=in_specs,
        out_specs=out_spec,
        compiler_params=pltpu.CompilerParams(
            dimension_semantics=("parallel",),
            # ~16 MB of live VMEM at block_b=16384 (arch 1); 32 MiB is safe on
            # v5e/v6e (128 MiB physical) and v7x (64 MiB physical).
            vmem_limit_bytes=32 * 1024 * 1024,
        ),
        cost_estimate=cost,
    )(*args)

    if feature_major_out:
        return out[:, :B]                                # (out_size, B)
    return out[:B]                                       # (B, out_size)


def init_params(key, out_size, arch=1):
    """Deterministic synthetic init matching the chosen arch's layer shapes."""
    dims = _ARCH_DIMS[arch] + (out_size,)
    n_layers = len(dims) - 1
    params = {}
    for li in range(n_layers):
        key, kw, kb = jax.random.split(key, 3)
        fan_in, fan_out = dims[li], dims[li + 1]
        bound = fan_in ** -0.5
        # PyTorch-native weight layout: (out, in)
        params[f"w{li + 1}"] = jax.random.uniform(
            kw, (fan_out, fan_in), jnp.float32, -bound, bound)
        params[f"b{li + 1}"] = jax.random.uniform(
            kb, (fan_out, 1), jnp.float32, -bound, bound)
    # PyTorch PReLU default: one shared slope per PReLU, init 0.25
    params["prelu"] = jnp.full((n_layers - 1,), 0.25, jnp.float32)
    return params


def reference_forward(x, params):
    n_layers = len([k for k in params if k.startswith("w")])
    h = x
    for li in range(1, n_layers + 1):
        h = jnp.dot(h, params[f"w{li}"].T,
                    precision=jax.lax.Precision.HIGHEST) + params[f"b{li}"][:, 0]
        if li < n_layers:
            a = params["prelu"][li - 1]
            h = jnp.where(h >= 0, h, a * h)
    return h


if __name__ == "__main__":
    key = jax.random.PRNGKey(0)
    out_size = 32
    batch = 256

    kx, kp = jax.random.split(key)
    x = jax.random.normal(kx, (batch, 2), jnp.float32)
    params = init_params(kp, out_size, arch=1)
    ref = reference_forward(x, params)

    # Default path (large-tile config; clamped to the small demo batch).
    out = jax.block_until_ready(pod_nn_forward(x, params))
    assert out.shape == (batch, out_size)
    assert jnp.allclose(out, ref, atol=1e-4, rtol=1e-4), "batch-major mismatch"

    # Multi-tile grid (2 x 128 tiles -> both TensorCores on megacore parts).
    out2 = jax.block_until_ready(pod_nn_forward(x, params, block_b=128))
    assert jnp.allclose(out2, ref, atol=1e-4, rtol=1e-4), "multi-tile mismatch"

    # Feature-major output path (fully lane-dense stores, no transpose at all).
    out_fm = jax.block_until_ready(
        pod_nn_forward(x, params, block_b=128, feature_major_out=True))
    assert out_fm.shape == (out_size, batch)
    assert jnp.allclose(out_fm.T, ref, atol=1e-4, rtol=1e-4), "feature-major mismatch"

    print("KERNEL_OK")
</pallas_src>

<mosaic_0001>
module attributes {stable_mosaic.version = 11 : i64} {
  func.func @kernel(%arg0: i32, %arg1: memref<4xf32, #tpu.memory_space<smem>>, %arg2: memref<2x256xf32, #tpu.memory_space<vmem>>, %arg3: memref<25x2xf32, #tpu.memory_space<vmem>>, %arg4: memref<25x1xf32, #tpu.memory_space<vmem>>, %arg5: memref<50x25xf32, #tpu.memory_space<vmem>>, %arg6: memref<50x1xf32, #tpu.memory_space<vmem>>, %arg7: memref<100x50xf32, #tpu.memory_space<vmem>>, %arg8: memref<100x1xf32, #tpu.memory_space<vmem>>, %arg9: memref<50x100xf32, #tpu.memory_space<vmem>>, %arg10: memref<50x1xf32, #tpu.memory_space<vmem>>, %arg11: memref<32x50xf32, #tpu.memory_space<vmem>>, %arg12: memref<32x1xf32, #tpu.memory_space<vmem>>, %arg13: memref<256x32xf32, #tpu.memory_space<vmem>>) attributes {dimension_semantics = [#tpu.dimension_semantics<parallel>], iteration_bounds = array<i64: 1>, scalar_prefetch = 0 : i64, scratch_operands = 0 : i64, tpu.core_type = #tpu.core_type<tc>, window_params = [{transform_indices = @transform_0, window_bounds = array<i64: 4>}, {transform_indices = @transform_1, window_bounds = array<i64: 2, 256>}, {pipeline_mode = #tpu.pipeline_mode<synchronous>, transform_indices = @transform_2, window_bounds = array<i64: 25, 2>}, {pipeline_mode = #tpu.pipeline_mode<synchronous>, transform_indices = @transform_3, window_bounds = array<i64: 25, 1>}, {pipeline_mode = #tpu.pipeline_mode<synchronous>, transform_indices = @transform_4, window_bounds = array<i64: 50, 25>}, {pipeline_mode = #tpu.pipeline_mode<synchronous>, transform_indices = @transform_5, window_bounds = array<i64: 50, 1>}, {pipeline_mode = #tpu.pipeline_mode<synchronous>, transform_indices = @transform_6, window_bounds = array<i64: 100, 50>}, {pipeline_mode = #tpu.pipeline_mode<synchronous>, transform_indices = @transform_7, window_bounds = array<i64: 100, 1>}, {pipeline_mode = #tpu.pipeline_mode<synchronous>, transform_indices = @transform_8, window_bounds = array<i64: 50, 100>}, {pipeline_mode = #tpu.pipeline_mode<synchronous>, transform_indices = @transform_9, window_bounds = array<i64: 50, 1>}, {pipeline_mode = #tpu.pipeline_mode<synchronous>, transform_indices = @transform_10, window_bounds = array<i64: 32, 50>}, {pipeline_mode = #tpu.pipeline_mode<synchronous>, transform_indices = @transform_11, window_bounds = array<i64: 32, 1>}, {transform_indices = @transform_12, window_bounds = array<i64: 256, 32>}]} {
    %c0 = arith.constant 0 : index
    %c0_0 = arith.constant 0 : index
    %0 = vector.load %arg2[%c0, %c0_0] : memref<2x256xf32, #tpu.memory_space<vmem>>, vector<2x256xf32>
    %c0_1 = arith.constant 0 : index
    %c0_2 = arith.constant 0 : index
    %1 = vector.load %arg3[%c0_1, %c0_2] : memref<25x2xf32, #tpu.memory_space<vmem>>, vector<25x2xf32>
    %c0_3 = arith.constant 0 : index
    %c0_4 = arith.constant 0 : index
    %2 = vector.load %arg4[%c0_3, %c0_4] : memref<25x1xf32, #tpu.memory_space<vmem>>, vector<25x1xf32>
    %3 = vector.extract_strided_slice %1 {offsets = [0, 0], sizes = [25, 1], strides = [1, 1]} : vector<25x2xf32> to vector<25x1xf32>
    %4 = vector.extract_strided_slice %0 {offsets = [0, 0], sizes = [1, 256], strides = [1, 1]} : vector<2x256xf32> to vector<1x256xf32>
    %5 = vector.broadcast %3 : vector<25x1xf32> to vector<25x256xf32>
    %6 = vector.broadcast %4 : vector<1x256xf32> to vector<25x256xf32>
    %7 = arith.mulf %5, %6 : vector<25x256xf32>
    %8 = vector.extract_strided_slice %1 {offsets = [0, 1], sizes = [25, 1], strides = [1, 1]} : vector<25x2xf32> to vector<25x1xf32>
    %9 = vector.extract_strided_slice %0 {offsets = [1, 0], sizes = [1, 256], strides = [1, 1]} : vector<2x256xf32> to vector<1x256xf32>
    %10 = vector.broadcast %8 : vector<25x1xf32> to vector<25x256xf32>
    %11 = vector.broadcast %9 : vector<1x256xf32> to vector<25x256xf32>
    %12 = arith.mulf %10, %11 : vector<25x256xf32>
    %13 = arith.addf %7, %12 : vector<25x256xf32>
    %14 = vector.broadcast %2 : vector<25x1xf32> to vector<25x256xf32>
    %15 = arith.addf %13, %14 : vector<25x256xf32>
    %c0_5 = arith.constant 0 : index
    %16 = memref.load %arg1[%c0_5] : memref<4xf32, #tpu.memory_space<smem>>
    %cst = arith.constant 0.000000e+00 : f32
    %17 = vector.broadcast %cst : f32 to vector<25x256xf32>
    %18 = arith.cmpf oge, %15, %17 : vector<25x256xf32>
    %19 = vector.broadcast %16 : f32 to vector<25x256xf32>
    %20 = arith.mulf %19, %15 : vector<25x256xf32>
    %21 = arith.select %18, %15, %20 : vector<25x256xi1>, vector<25x256xf32>
    %c0_6 = arith.constant 0 : index
    %c0_7 = arith.constant 0 : index
    %22 = vector.load %arg5[%c0_6, %c0_7] : memref<50x25xf32, #tpu.memory_space<vmem>>, vector<50x25xf32>
    %c0_8 = arith.constant 0 : index
    %c0_9 = arith.constant 0 : index
    %23 = vector.load %arg6[%c0_8, %c0_9] : memref<50x1xf32, #tpu.memory_space<vmem>>, vector<50x1xf32>
    %cst_10 = arith.constant dense<0.000000e+00> : vector<50x256xf32>
    %24 = tpu.matmul %22, %21, %cst_10 {dimension_numbers = #tpu.dot_dimension_numbers<[1], [0], [0], [1], [0, 0, 1, 1], [], []>, precision = #tpu.contract_precision<fp32>} : vector<50x25xf32>, vector<25x256xf32>, vector<50x256xf32> -> vector<50x256xf32>
    %25 = vector.broadcast %23 : vector<50x1xf32> to vector<50x256xf32>
    %26 = arith.addf %24, %25 : vector<50x256xf32>
    %c1 = arith.constant 1 : index
    %27 = memref.load %arg1[%c1] : memref<4xf32, #tpu.memory_space<smem>>
    %cst_11 = arith.constant 0.000000e+00 : f32
    %28 = vector.broadcast %cst_11 : f32 to vector<50x256xf32>
    %29 = arith.cmpf oge, %26, %28 : vector<50x256xf32>
    %30 = vector.broadcast %27 : f32 to vector<50x256xf32>
    %31 = arith.mulf %30, %26 : vector<50x256xf32>
    %32 = arith.select %29, %26, %31 : vector<50x256xi1>, vector<50x256xf32>
    %c0_12 = arith.constant 0 : index
    %c0_13 = arith.constant 0 : index
    %33 = vector.load %arg7[%c0_12, %c0_13] : memref<100x50xf32, #tpu.memory_space<vmem>>, vector<100x50xf32>
    %c0_14 = arith.constant 0 : index
    %c0_15 = arith.constant 0 : index
    %34 = vector.load %arg8[%c0_14, %c0_15] : memref<100x1xf32, #tpu.memory_space<vmem>>, vector<100x1xf32>
    %cst_16 = arith.constant dense<0.000000e+00> : vector<100x256xf32>
    %35 = tpu.matmul %33, %32, %cst_16 {dimension_numbers = #tpu.dot_dimension_numbers<[1], [0], [0], [1], [0, 0, 1, 1], [], []>, precision = #tpu.contract_precision<fp32>} : vector<100x50xf32>, vector<50x256xf32>, vector<100x256xf32> -> vector<100x256xf32>
    %36 = vector.broadcast %34 : vector<100x1xf32> to vector<100x256xf32>
    %37 = arith.addf %35, %36 : vector<100x256xf32>
    %c2 = arith.constant 2 : index
    %38 = memref.load %arg1[%c2] : memref<4xf32, #tpu.memory_space<smem>>
    %cst_17 = arith.constant 0.000000e+00 : f32
    %39 = vector.broadcast %cst_17 : f32 to vector<100x256xf32>
    %40 = arith.cmpf oge, %37, %39 : vector<100x256xf32>
    %41 = vector.broadcast %38 : f32 to vector<100x256xf32>
    %42 = arith.mulf %41, %37 : vector<100x256xf32>
    %43 = arith.select %40, %37, %42 : vector<100x256xi1>, vector<100x256xf32>
    %c0_18 = arith.constant 0 : index
    %c0_19 = arith.constant 0 : index
    %44 = vector.load %arg9[%c0_18, %c0_19] : memref<50x100xf32, #tpu.memory_space<vmem>>, vector<50x100xf32>
    %c0_20 = arith.constant 0 : index
    %c0_21 = arith.constant 0 : index
    %45 = vector.load %arg10[%c0_20, %c0_21] : memref<50x1xf32, #tpu.memory_space<vmem>>, vector<50x1xf32>
    %cst_22 = arith.constant dense<0.000000e+00> : vector<50x256xf32>
    %46 = tpu.matmul %44, %43, %cst_22 {dimension_numbers = #tpu.dot_dimension_numbers<[1], [0], [0], [1], [0, 0, 1, 1], [], []>, precision = #tpu.contract_precision<fp32>} : vector<50x100xf32>, vector<100x256xf32>, vector<50x256xf32> -> vector<50x256xf32>
    %47 = vector.broadcast %45 : vector<50x1xf32> to vector<50x256xf32>
    %48 = arith.addf %46, %47 : vector<50x256xf32>
    %c3 = arith.constant 3 : index
    %49 = memref.load %arg1[%c3] : memref<4xf32, #tpu.memory_space<smem>>
    %cst_23 = arith.constant 0.000000e+00 : f32
    %50 = vector.broadcast %cst_23 : f32 to vector<50x256xf32>
    %51 = arith.cmpf oge, %48, %50 : vector<50x256xf32>
    %52 = vector.broadcast %49 : f32 to vector<50x256xf32>
    %53 = arith.mulf %52, %48 : vector<50x256xf32>
    %54 = arith.select %51, %48, %53 : vector<50x256xi1>, vector<50x256xf32>
    %c0_24 = arith.constant 0 : index
    %c0_25 = arith.constant 0 : index
    %55 = vector.load %arg11[%c0_24, %c0_25] : memref<32x50xf32, #tpu.memory_space<vmem>>, vector<32x50xf32>
    %c0_26 = arith.constant 0 : index
    %c0_27 = arith.constant 0 : index
    %56 = vector.load %arg12[%c0_26, %c0_27] : memref<32x1xf32, #tpu.memory_space<vmem>>, vector<32x1xf32>
    %cst_28 = arith.constant dense<0.000000e+00> : vector<32x256xf32>
    %57 = tpu.matmul %55, %54, %cst_28 {dimension_numbers = #tpu.dot_dimension_numbers<[1], [0], [0], [1], [0, 0, 1, 1], [], []>, precision = #tpu.contract_precision<fp32>} : vector<32x50xf32>, vector<50x256xf32>, vector<32x256xf32> -> vector<32x256xf32>
    %58 = vector.broadcast %56 : vector<32x1xf32> to vector<32x256xf32>
    %59 = arith.addf %57, %58 : vector<32x256xf32>
    %60 = tpu.transpose %59, [1, 0] : vector<32x256xf32> -> vector<256x32xf32>
    %c0_29 = arith.constant 0 : index
    %c0_30 = arith.constant 0 : index
    %61 = vector.load %arg13[%c0_29, %c0_30] : memref<256x32xf32, #tpu.memory_space<vmem>>, vector<256x32xf32>
    tpu.vector_store %arg13[%c0_29, %c0_30], %60 {strides = array<i32>} : memref<256x32xf32, #tpu.memory_space<vmem>>, vector<256x32xf32>,
    return
  }
  func.func @transform_0(%arg0: i32) -> i32 {
    %c0_i32 = arith.constant 0 : i32
    %c0_i32_0 = arith.constant 0 : i32
    return %c0_i32 : i32
  }
  func.func @transform_1(%arg0: i32) -> (i32, i32) {
    %c0_i32 = arith.constant 0 : i32
    %c0_i32_0 = arith.constant 0 : i32
    return %c0_i32, %arg0 : i32, i32
  }
  func.func @transform_2(%arg0: i32) -> (i32, i32) {
    %c0_i32 = arith.constant 0 : i32
    %c0_i32_0 = arith.constant 0 : i32
    %c0_i32_1 = arith.constant 0 : i32
    return %c0_i32, %c0_i32_0 : i32, i32
  }
  func.func @transform_3(%arg0: i32) -> (i32, i32) {
    %c0_i32 = arith.constant 0 : i32
    %c0_i32_0 = arith.constant 0 : i32
    %c0_i32_1 = arith.constant 0 : i32
    return %c0_i32, %c0_i32_0 : i32, i32
  }
  func.func @transform_4(%arg0: i32) -> (i32, i32) {
    %c0_i32 = arith.constant 0 : i32
    %c0_i32_0 = arith.constant 0 : i32
    %c0_i32_1 = arith.constant 0 : i32
    return %c0_i32, %c0_i32_0 : i32, i32
  }
  func.func @transform_5(%arg0: i32) -> (i32, i32) {
    %c0_i32 = arith.constant 0 : i32
    %c0_i32_0 = arith.constant 0 : i32
    %c0_i32_1 = arith.constant 0 : i32
    return %c0_i32, %c0_i32_0 : i32, i32
  }
  func.func @transform_6(%arg0: i32) -> (i32, i32) {
    %c0_i32 = arith.constant 0 : i32
    %c0_i32_0 = arith.constant 0 : i32
    %c0_i32_1 = arith.constant 0 : i32
    return %c0_i32, %c0_i32_0 : i32, i32
  }
  func.func @transform_7(%arg0: i32) -> (i32, i32) {
    %c0_i32 = arith.constant 0 : i32
    %c0_i32_0 = arith.constant 0 : i32
    %c0_i32_1 = arith.constant 0 : i32
    return %c0_i32, %c0_i32_0 : i32, i32
  }
  func.func @transform_8(%arg0: i32) -> (i32, i32) {
    %c0_i32 = arith.constant 0 : i32
    %c0_i32_0 = arith.constant 0 : i32
    %c0_i32_1 = arith.constant 0 : i32
    return %c0_i32, %c0_i32_0 : i32, i32
  }
  func.func @transform_9(%arg0: i32) -> (i32, i32) {
    %c0_i32 = arith.constant 0 : i32
    %c0_i32_0 = arith.constant 0 : i32
    %c0_i32_1 = arith.constant 0 : i32
    return %c0_i32, %c0_i32_0 : i32, i32
  }
  func.func @transform_10(%arg0: i32) -> (i32, i32) {
    %c0_i32 = arith.constant 0 : i32
    %c0_i32_0 = arith.constant 0 : i32
    %c0_i32_1 = arith.constant 0 : i32
    return %c0_i32, %c0_i32_0 : i32, i32
  }
  func.func @transform_11(%arg0: i32) -> (i32, i32) {
    %c0_i32 = arith.constant 0 : i32
    %c0_i32_0 = arith.constant 0 : i32
    %c0_i32_1 = arith.constant 0 : i32
    return %c0_i32, %c0_i32_0 : i32, i32
  }
  func.func @transform_12(%arg0: i32) -> (i32, i32) {
    %c0_i32 = arith.constant 0 : i32
    %c0_i32_0 = arith.constant 0 : i32
    return %arg0, %c0_i32 : i32, i32
  }
}

</mosaic_0001>

<llo_original>
// kernel: pod_nn_forward.1
$region0: #{pod_nn_forward.1}
  #allocation0 [shape = 'u32[]', space=smem, size = 0x4, offset = 0x4, fixed_abs, tag = 'smem constant byte address 0x4 - core index']
  #allocation1 [shape = 'u32[144,128]{1,0:T(1,128)}', space=vmem, size = 0x12000, scoped, tag = 'internal scratch']
  %s0 = inlined_call_operand.vmem [shape: f32[4], index: 0, kind: input, shape index: {}]
  %s1 = inlined_call_operand.vmem [shape: f32[2,256], index: 1, kind: input, shape index: {}]
  %s2 = inlined_call_operand.vmem [shape: f32[25,2], index: 2, kind: input, shape index: {}]
  %s3 = inlined_call_operand.vmem [shape: f32[25,1], index: 3, kind: input, shape index: {}]
  %s4 = inlined_call_operand.vmem [shape: f32[50,25], index: 4, kind: input, shape index: {}]
  %s5 = inlined_call_operand.vmem [shape: f32[50,1], index: 5, kind: input, shape index: {}]
  %s6 = inlined_call_operand.vmem [shape: f32[100,50], index: 6, kind: input, shape index: {}]
  %s7 = inlined_call_operand.vmem [shape: f32[100,1], index: 7, kind: input, shape index: {}]
  %s8 = inlined_call_operand.vmem [shape: f32[50,100], index: 8, kind: input, shape index: {}]
  %s9 = inlined_call_operand.vmem [shape: f32[50,1], index: 9, kind: input, shape index: {}]
  %s10 = inlined_call_operand.vmem [shape: f32[32,50], index: 10, kind: input, shape index: {}]
  %s11 = inlined_call_operand.vmem [shape: f32[32,1], index: 11, kind: input, shape index: {}]
  %s12 = inlined_call_operand.vmem [shape: f32[256,32], index: 12, kind: output, shape index: {}]
  %s13 = sld [smem:[#allocation0]]
  $region62: #{pod_nn_forward.1} parent=0
    _
  %s15 = ssub.s32 1, %s13
  %s16 = scalar_select 0, %s15, %s13
  $region1: #{pod_nn_forward.1} parent=0
    #allocation2 [shape = 'u8[512]{0}', space=smem, size = 0x200, scoped, tag = 'input window, operand 0, single buffered']
    #allocation3 [shape = 's32[1]{0}', space=sflag, size = 0x4, scoped, tag = 'scoped memory for pod_nn_forward.1']
    %17 = vsyncpa [#allocation3], 0
    // Predicated region
    $region2: #{pod_nn_forward.1} parent=1 // pred_check
      _
    $region3: #{pod_nn_forward.1} parent=1 // pred_check_branch
      %19 = sbr.rel (0) target = $region5
    $region4: #{pod_nn_forward.1} parent=1 // pred_region
      %s21 = ssub.s32 16, 16
      %22 = vsyncadd [#allocation3], %s21
      %s24 = sshll.u32 %s0, 4
      %s25 = int_to_ptr.vmem [resolvable:$true] %s24
      %27 = dma.vmem_to_smem %s25, 16, [#allocation2], [#allocation3]
    $region5: #{pod_nn_forward.1} parent=1 // pred_fallthru
      _
    // Predicated region
    $region6: #{pod_nn_forward.1} parent=1 // pred_check
      _
    $region7: #{pod_nn_forward.1} parent=1 // pred_check_branch
      %29 = sbr.rel (0) target = $region9
    $region8: #{pod_nn_forward.1} parent=1 // pred_region
      _
    $region9: #{pod_nn_forward.1} parent=1 // pred_fallthru
      _
    // Predicated region
    $region10: #{pod_nn_forward.1} parent=1 // pred_check
      _
    $region11: #{pod_nn_forward.1} parent=1 // pred_check_branch
      %31 = sbr.rel (0) target = $region13
    $region12: #{pod_nn_forward.1} parent=1 // pred_region
      _
    $region13: #{pod_nn_forward.1} parent=1 // pred_fallthru
      _
    // Predicated region
    $region14: #{pod_nn_forward.1} parent=1 // pred_check
      _
    $region15: #{pod_nn_forward.1} parent=1 // pred_check_branch
      %33 = sbr.rel (0) target = $region17
    $region16: #{pod_nn_forward.1} parent=1 // pred_region
      _
    $region17: #{pod_nn_forward.1} parent=1 // pred_fallthru
      _
    // Predicated region
    $region18: #{pod_nn_forward.1} parent=1 // pred_check
      _
    $region19: #{pod_nn_forward.1} parent=1 // pred_check_branch
      %35 = sbr.rel (0) target = $region21
    $region20: #{pod_nn_forward.1} parent=1 // pred_region
      _
    $region21: #{pod_nn_forward.1} parent=1 // pred_fallthru
      _
    // Predicated region
    $region22: #{pod_nn_forward.1} parent=1 // pred_check
      _
    $region23: #{pod_nn_forward.1} parent=1 // pred_check_branch
      %37 = sbr.rel (0) target = $region25
    $region24: #{pod_nn_forward.1} parent=1 // pred_region
      _
    $region25: #{pod_nn_forward.1} parent=1 // pred_fallthru
      _
    // Predicated region
    $region26: #{pod_nn_forward.1} parent=1 // pred_check
      _
    $region27: #{pod_nn_forward.1} parent=1 // pred_check_branch
      %39 = sbr.rel (0) target = $region29
    $region28: #{pod_nn_forward.1} parent=1 // pred_region
      _
    $region29: #{pod_nn_forward.1} parent=1 // pred_fallthru
      _
    // Predicated region
    $region30: #{pod_nn_forward.1} parent=1 // pred_check
      _
    $region31: #{pod_nn_forward.1} parent=1 // pred_check_branch
      %41 = sbr.rel (0) target = $region33
    $region32: #{pod_nn_forward.1} parent=1 // pred_region
      _
    $region33: #{pod_nn_forward.1} parent=1 // pred_fallthru
      _
    // Predicated region
    $region34: #{pod_nn_forward.1} parent=1 // pred_check
      _
    $region35: #{pod_nn_forward.1} parent=1 // pred_check_branch
      %43 = sbr.rel (0) target = $region37
    $region36: #{pod_nn_forward.1} parent=1 // pred_region
      _
    $region37: #{pod_nn_forward.1} parent=1 // pred_fallthru
      _
    // Predicated region
    $region38: #{pod_nn_forward.1} parent=1 // pred_check
      _
    $region39: #{pod_nn_forward.1} parent=1 // pred_check_branch
      %45 = sbr.rel (0) target = $region41
    $region40: #{pod_nn_forward.1} parent=1 // pred_region
      _
    $region41: #{pod_nn_forward.1} parent=1 // pred_fallthru
      _
    // Predicated region
    $region42: #{pod_nn_forward.1} parent=1 // pred_check
      _
    $region43: #{pod_nn_forward.1} parent=1 // pred_check_branch
      %47 = sbr.rel (0) target = $region45
    $region44: #{pod_nn_forward.1} parent=1 // pred_region
      _
    $region45: #{pod_nn_forward.1} parent=1 // pred_fallthru
      _
    // Predicated region
    $region46: #{pod_nn_forward.1} parent=1 // pred_check
      _
    $region47: #{pod_nn_forward.1} parent=1 // pred_check_branch
      %49 = sbr.rel (0) target = $region49
    $region48: #{pod_nn_forward.1} parent=1 // pred_region
      _
    $region49: #{pod_nn_forward.1} parent=1 // pred_fallthru
      _
    // Predicated region
    $region50: #{pod_nn_forward.1} parent=1 // pred_check
      _
    $region51: #{pod_nn_forward.1} parent=1 // pred_check_branch
      %51 = sbr.rel (0) target = $region53
    $region52: #{pod_nn_forward.1} parent=1 // pred_region
      %52 = dma.done [#allocation3], 16
    $region53: #{pod_nn_forward.1} parent=1 // pred_fallthru
      _
    %53 = sfence
    %v54 = vld [vmem:[%s1] sm:$0xf]
    %v55 = vld [vmem:[%s2] sm:$0xff]
    %v56 = vld [vmem:[%s2 + $0x8] sm:$0xff]
    %v57 = vld [vmem:[%s2 + $0x10] sm:$0xff]
    %v58 = vld [vmem:[%s2 + $0x18] sm:$0x1]
    %v59 = vld [vmem:[%s3] sm:$0xff]
    %v60 = vld [vmem:[%s3 + $0x8] sm:$0xff]
    %v61 = vld [vmem:[%s3 + $0x10] sm:$0xff]
    %v62 = vld [vmem:[%s3 + $0x18] sm:$0x1]
    %64 = vset.pattern.permute.xlu0 0
    %65 = vperm.xlu0 %64, %v55
    %v66 = vpop.permute.xlu0 %65
    %69 = vset.pattern.permute.xlu0 0
    %70 = vperm.xlu0 %69, %v56
    %v71 = vpop.permute.xlu0 %70
    %74 = vset.pattern.permute.xlu0 0
    %75 = vperm.xlu0 %74, %v57
    %v76 = vpop.permute.xlu0 %75
    %79 = vset.pattern.permute.xlu0 0
    %80 = vperm.xlu0 %79, %v58
    %v81 = vpop.permute.xlu0 %80
    %v84 = vlaneseq
    %v85 = vshrl.u32 %v84, 7
    %v86 = vsub.s32 0, %v85
    %v87 = vrot.slane %v54, %v86
    %v88 = vlaneseq
    %v89 = vshrl.u32 %v88, 7
    %v90 = vsub.s32 2, %v89
    %v91 = vrot.slane %v54, %v90
    %v94 = vlaneseq
    %v95 = vshrl.u32 %v94, 7
    %v96 = vsub.s32 0, %v95
    %v97 = vrot.slane %v87, %v96
    %v98 = vlaneseq
    %v99 = vshrl.u32 %v98, 7
    %v100 = vsub.s32 0, %v99
    %v101 = vrot.slane %v91, %v100
    %v102 = vmul.f32 %v66, %v97
    %v103 = vmul.f32 %v66, %v101
    %v104 = vmul.f32 %v71, %v97
    %v105 = vmul.f32 %v71, %v101
    %v106 = vmul.f32 %v76, %v97
    %v107 = vmul.f32 %v76, %v101
    %v108 = vmul.f32 %v81, %v97
    %v109 = vmul.f32 %v81, %v101
    %110 = vset.pattern.permute.xlu0 1
    %111 = vperm.xlu0 %110, %v55
    %v112 = vpop.permute.xlu0 %111
    %114 = vset.pattern.permute.xlu0 1
    %115 = vperm.xlu0 %114, %v56
    %v116 = vpop.permute.xlu0 %115
    %118 = vset.pattern.permute.xlu0 1
    %119 = vperm.xlu0 %118, %v57
    %v120 = vpop.permute.xlu0 %119
    %122 = vset.pattern.permute.xlu0 1
    %123 = vperm.xlu0 %122, %v58
    %v124 = vpop.permute.xlu0 %123
    %v126 = vlaneseq
    %v127 = vshrl.u32 %v126, 7
    %v128 = vsub.s32 1, %v127
    %v129 = vrot.slane %v54, %v128
    %v130 = vlaneseq
    %v131 = vshrl.u32 %v130, 7
    %v132 = vsub.s32 3, %v131
    %v133 = vrot.slane %v54, %v132
    %v136 = vlaneseq
    %v137 = vshrl.u32 %v136, 7
    %v138 = vsub.s32 1, %v137
    %v139 = vrot.slane %v129, %v138
    %v140 = vlaneseq
    %v141 = vshrl.u32 %v140, 7
    %v142 = vsub.s32 1, %v141
    %v143 = vrot.slane %v133, %v142
    %v144 = vmul.f32 %v112, %v139
    %v145 = vmul.f32 %v112, %v143
    %v146 = vmul.f32 %v116, %v139
    %v147 = vmul.f32 %v116, %v143
    %v148 = vmul.f32 %v120, %v139
    %v149 = vmul.f32 %v120, %v143
    %v150 = vmul.f32 %v124, %v139
    %v151 = vmul.f32 %v124, %v143
    %v152 = vadd.f32 %v102, %v144
    %v153 = vadd.f32 %v103, %v145
    %v154 = vadd.f32 %v104, %v146
    %v155 = vadd.f32 %v105, %v147
    %v156 = vadd.f32 %v106, %v148
    %v157 = vadd.f32 %v107, %v149
    %v158 = vadd.f32 %v108, %v150
    %v159 = vadd.f32 %v109, %v151
    %161 = vset.pattern.permute.xlu0 0
    %162 = vperm.xlu0 %161, %v59
    %v163 = vpop.permute.xlu0 %162
    %166 = vset.pattern.permute.xlu0 0
    %167 = vperm.xlu0 %166, %v60
    %v168 = vpop.permute.xlu0 %167
    %171 = vset.pattern.permute.xlu0 0
    %172 = vperm.xlu0 %171, %v61
    %v173 = vpop.permute.xlu0 %172
    %176 = vset.pattern.permute.xlu0 0
    %177 = vperm.xlu0 %176, %v62
    %v178 = vpop.permute.xlu0 %177
    %v180 = vadd.f32 %v152, %v163
    %v181 = vadd.f32 %v153, %v163
    %v182 = vadd.f32 %v154, %v168
    %v183 = vadd.f32 %v155, %v168
    %v184 = vadd.f32 %v156, %v173
    %v185 = vadd.f32 %v157, %v173
    %v186 = vadd.f32 %v158, %v178
    %v187 = vadd.f32 %v159, %v178
    %s188 = sld [smem:[#allocation2]]
    %vm189 = vcmp.ge.f32.partialorder %v180, 0.0
    %vm190 = vcmp.ge.f32.partialorder %v181, 0.0
    %vm191 = vcmp.ge.f32.partialorder %v182, 0.0
    %vm192 = vcmp.ge.f32.partialorder %v183, 0.0
    %vm193 = vcmp.ge.f32.partialorder %v184, 0.0
    %vm194 = vcmp.ge.f32.partialorder %v185, 0.0
    %vm195 = vcmp.ge.f32.partialorder %v186, 0.0
    %vm196 = vcmp.ge.f32.partialorder %v187, 0.0
    %v197 = vstv %s188
    %v198 = vmul.f32 %v197, %v180
    %v199 = vmul.f32 %v197, %v181
    %v200 = vmul.f32 %v197, %v182
    %v201 = vmul.f32 %v197, %v183
    %v202 = vmul.f32 %v197, %v184
    %v203 = vmul.f32 %v197, %v185
    %v204 = vmul.f32 %v197, %v186
    %v205 = vmul.f32 %v197, %v187
    %v206 = vsel %vm189, %v180, %v198
    %v207 = vsel %vm190, %v181, %v199
    %v208 = vsel %vm191, %v182, %v200
    %v209 = vsel %vm192, %v183, %v201
    %v210 = vsel %vm193, %v184, %v202
    %v211 = vsel %vm194, %v185, %v203
    %v212 = vsel %vm195, %v186, %v204
    %v213 = vsel %vm196, %v187, %v205
    %v214 = vld [vmem:[%s4] sm:$0xff]
    %v215 = vld [vmem:[%s4 + $0x8] sm:$0xff]
    %v216 = vld [vmem:[%s4 + $0x10] sm:$0xff]
    %v217 = vld [vmem:[%s4 + $0x18] sm:$0xff]
    %v218 = vld [vmem:[%s4 + $0x20] sm:$0xff]
    %v219 = vld [vmem:[%s4 + $0x28] sm:$0xff]
    %v220 = vld [vmem:[%s4 + $0x30] sm:$0x3]
    %v221 = vld [vmem:[%s5] sm:$0xff]
    %v222 = vld [vmem:[%s5 + $0x8] sm:$0xff]
    %v223 = vld [vmem:[%s5 + $0x10] sm:$0xff]
    %v224 = vld [vmem:[%s5 + $0x18] sm:$0xff]
    %v225 = vld [vmem:[%s5 + $0x20] sm:$0xff]
    %v226 = vld [vmem:[%s5 + $0x28] sm:$0xff]
    %v227 = vld [vmem:[%s5 + $0x30] sm:$0x3]
    %229 = vset.pattern.permute.xlu0 0
    %230 = vperm.xlu0 %229, %v221
    %v231 = vpop.permute.xlu0 %230
    %234 = vset.pattern.permute.xlu0 0
    %235 = vperm.xlu0 %234, %v222
    %v236 = vpop.permute.xlu0 %235
    %239 = vset.pattern.permute.xlu0 0
    %240 = vperm.xlu0 %239, %v223
    %v241 = vpop.permute.xlu0 %240
    %244 = vset.pattern.permute.xlu0 0
    %245 = vperm.xlu0 %244, %v224
    %v246 = vpop.permute.xlu0 %245
    %249 = vset.pattern.permute.xlu0 0
    %250 = vperm.xlu0 %249, %v225
    %v251 = vpop.permute.xlu0 %250
    %254 = vset.pattern.permute.xlu0 0
    %255 = vperm.xlu0 %254, %v226
    %v256 = vpop.permute.xlu0 %255
    %259 = vset.pattern.permute.xlu0 0
    %260 = vperm.xlu0 %259, %v227
    %v261 = vpop.permute.xlu0 %260
    %vm263 = vcmask 203776
    %v265 = vsel %vm263, %v214, 0
    %v268 = vsel %vm263, %v215, 0
    %v271 = vsel %vm263, %v216, 0
    %v274 = vsel %vm263, %v217, 0
    %v277 = vsel %vm263, %v218, 0
    %v280 = vsel %vm263, %v219, 0
    %v283 = vsel %vm263, %v220, 0
    %vm285 = vcmask 1040384
    %v287 = vsel %vm285, %v212, 0
    %v290 = vsel %vm285, %v213, 0
    %v292 = vand.u32 %v207, 4294901760
    %293 = vmatprep.subr.mxu0 %v292
    %v294 = vand.u32 %v206, 4294901760
    %295 = vmatpush1.msra.mxu0 %v294
    %v296 = vand.u32 %v209, 4294901760
    %297 = vmatprep.subr.mxu0 %v296
    %v298 = vand.u32 %v208, 4294901760
    %299 = vmatpush1.msra.mxu0 %v298
    %v300 = vand.u32 %v211, 4294901760
    %301 = vmatprep.subr.mxu0 %v300
    %v302 = vand.u32 %v210, 4294901760
    %303 = vmatpush1.msra.mxu0 %v302
    %v304 = vand.u32 %v290, 4294901760
    %305 = vmatprep.subr.mxu0 %v304
    %v306 = vand.u32 %v287, 4294901760
    %307 = vmatpush1.msra.mxu0 %v306
    %308 = vmatprep.subr.mxu0 0.0
    %309 = vmatpush1.msra.mxu0 0.0
    %310 = vmatprep.subr.mxu0 0.0
    %311 = vmatpush1.msra.mxu0 0.0
    %312 = vmatprep.subr.mxu0 0.0
    %313 = vmatpush1.msra.mxu0 0.0
    %314 = vmatprep.subr.mxu0 0.0
    %315 = vmatpush1.msra.mxu0 0.0
    %316 = vmatprep.subr.mxu0 0.0
    %317 = vmatpush1.msra.mxu0 0.0
    %318 = vmatprep.subr.mxu0 0.0
    %319 = vmatpush1.msra.mxu0 0.0
    %320 = vmatprep.subr.mxu0 0.0
    %321 = vmatpush1.msra.mxu0 0.0
    %322 = vmatprep.subr.mxu0 0.0
    %323 = vmatpush1.msra.mxu0 0.0
    %324 = vmatprep.subr.mxu0 0.0
    %325 = vmatpush1.msra.mxu0 0.0
    %326 = vmatprep.subr.mxu0 0.0
    %327 = vmatpush1.msra.mxu0 0.0
    %328 = vmatprep.subr.mxu0 0.0
    %329 = vmatpush1.msra.mxu0 0.0
    %330 = vmatprep.subr.mxu0 0.0
    %331 = vmatpush1.msra.mxu0 0.0
    %332 = vmatprep.subr.mxu0 0.0
    %333 = vmatpush1.msra.mxu0 0.0
    %334 = vmatprep.subr.mxu0 0.0
    %335 = vmatpush1.msra.mxu0 0.0
    %336 = vmatprep.subr.mxu0 0.0
    %337 = vmatpush1.msra.mxu0 0.0
    %338 = vmatprep.subr.mxu0 0.0
    %339 = vmatpush1.msra.mxu0 0.0
    %340 = vmatprep.subr.mxu0 0.0
    %341 = vmatpush1.msra.mxu0 0.0
    %342 = vmatprep.subr.mxu0 0.0
    %343 = vmatpush1.msra.mxu0 0.0
    %344 = vmatprep.subr.mxu0 0.0
    %345 = vmatpush1.msra.mxu0 0.0
    %346 = vmatprep.subr.mxu0 0.0
    %347 = vmatpush1.msra.mxu0 0.0
    %348 = vmatprep.subr.mxu0 0.0
    %349 = vmatpush1.msra.mxu0 0.0
    %350 = vmatprep.subr.mxu0 0.0
    %351 = vmatpush1.msra.mxu0 0.0
    %352 = vmatprep.subr.mxu0 0.0
    %353 = vmatpush1.msra.mxu0 0.0
    %354 = vmatprep.subr.mxu0 0.0
    %355 = vmatpush1.msra.mxu0 0.0
    %356 = vmatprep.subr.mxu0 0.0
    %357 = vmatpush1.msra.mxu0 0.0
    %358 = vmatprep.subr.mxu0 0.0
    %359 = vmatpush1.msra.mxu0 0.0
    %360 = vmatprep.subr.mxu0 0.0
    %361 = vmatpush1.msra.mxu0 0.0
    %362 = vmatprep.subr.mxu0 0.0
    %363 = vmatpush1.msra.mxu0 0.0
    %364 = vmatprep.mubr.f32.mxu0 0.0
    %v365 = vand.u32 %v265, 4294901760
    %v366 = vsub.f32 %v265, %v365
    %v367 = vand.u32 %v366, 4294901760
    %v368 = vsub.f32 %v366, %v367
    %v369 = vand.u32 %v368, 4294901760
    %370 = vmatmul.mubr.f32.gmra.mrb[0].mxu0 %v369
    %v371 = vpop.f32.mrb[0].mxu0
    %v372 = vadd.f32 %v231, %v371
    %v373 = vpop.f32.mrb[0].mxu0
    %v374 = vadd.f32 %v231, %v373
    %375 = vmatprep.mubr.f32.mxu0 0.0
    %v376 = vand.u32 %v268, 4294901760
    %v377 = vsub.f32 %v268, %v376
    %v378 = vand.u32 %v377, 4294901760
    %v379 = vsub.f32 %v377, %v378
    %v380 = vand.u32 %v379, 4294901760
    %381 = vmatmul.mubr.f32.gmra.mrb[0].mxu0 %v380
    %v382 = vpop.f32.mrb[0].mxu0
    %v383 = vadd.f32 %v236, %v382
    %v384 = vpop.f32.mrb[0].mxu0
    %v385 = vadd.f32 %v236, %v384
    %386 = vmatprep.mubr.f32.mxu0 0.0
    %v387 = vand.u32 %v271, 4294901760
    %v388 = vsub.f32 %v271, %v387
    %v389 = vand.u32 %v388, 4294901760
    %v390 = vsub.f32 %v388, %v389
    %v391 = vand.u32 %v390, 4294901760
    %392 = vmatmul.mubr.f32.gmra.mrb[0].mxu0 %v391
    %v393 = vpop.f32.mrb[0].mxu0
    %v394 = vadd.f32 %v241, %v393
    %v395 = vpop.f32.mrb[0].mxu0
    %v396 = vadd.f32 %v241, %v395
    %397 = vmatprep.mubr.f32.mxu0 0.0
    %v398 = vand.u32 %v274, 4294901760
    %v399 = vsub.f32 %v274, %v398
    %v400 = vand.u32 %v399, 4294901760
    %v401 = vsub.f32 %v399, %v400
    %v402 = vand.u32 %v401, 4294901760
    %403 = vmatmul.mubr.f32.gmra.mrb[0].mxu0 %v402
    %v404 = vpop.f32.mrb[0].mxu0
    %v405 = vadd.f32 %v246, %v404
    %v406 = vpop.f32.mrb[0].mxu0
    %v407 = vadd.f32 %v246, %v406
    %408 = vmatprep.mubr.f32.mxu0 0.0
    %v409 = vand.u32 %v277, 4294901760
    %v410 = vsub.f32 %v277, %v409
    %v411 = vand.u32 %v410, 4294901760
    %v412 = vsub.f32 %v410, %v411
    %v413 = vand.u32 %v412, 4294901760
    %414 = vmatmul.mubr.f32.gmra.mrb[0].mxu0 %v413
    %v415 = vpop.f32.mrb[0].mxu0
    %v416 = vadd.f32 %v251, %v415
    %v417 = vpop.f32.mrb[0].mxu0
    %v418 = vadd.f32 %v251, %v417
    %419 = vmatprep.mubr.f32.mxu0 0.0
    %v420 = vand.u32 %v280, 4294901760
    %v421 = vsub.f32 %v280, %v420
    %v422 = vand.u32 %v421, 4294901760
    %v423 = vsub.f32 %v421, %v422
    %v424 = vand.u32 %v423, 4294901760
    %425 = vmatmul.mubr.f32.gmra.mrb[0].mxu0 %v424
    %v426 = vpop.f32.mrb[0].mxu0
    %v427 = vadd.f32 %v256, %v426
    %v428 = vpop.f32.mrb[0].mxu0
    %v429 = vadd.f32 %v256, %v428
    %430 = vmatprep.mubr.f32.mxu0 0.0
    %v431 = vand.u32 %v283, 4294901760
    %v432 = vsub.f32 %v283, %v431
    %v433 = vand.u32 %v432, 4294901760
    %v434 = vsub.f32 %v432, %v433
    %v435 = vand.u32 %v434, 4294901760
    %436 = vmatmul.mubr.f32.gmra.mrb[0].mxu0 %v435
    %v437 = vpop.f32.mrb[0].mxu0
    %v438 = vadd.f32 %v261, %v437
    %v439 = vpop.f32.mrb[0].mxu0
    %v440 = vadd.f32 %v261, %v439
    %441 = vdwg.mxu0
    %v442 = vand.u32 %v207, 4294901760
    %v443 = vsub.f32 %v207, %v442
    %v444 = vand.u32 %v443, 4294901760
    %v445 = vsub.f32 %v443, %v444
    %v446 = vand.u32 %v445, 4294901760
    %447 = vmatprep.subr.mxu0 %v446
    %v448 = vand.u32 %v206, 4294901760
    %v449 = vsub.f32 %v206, %v448
    %v450 = vand.u32 %v449, 4294901760
    %v451 = vsub.f32 %v449, %v450
    %v452 = vand.u32 %v451, 4294901760
    %453 = vmatpush1.msra.mxu0 %v452
    %v454 = vand.u32 %v209, 4294901760
    %v455 = vsub.f32 %v209, %v454
    %v456 = vand.u32 %v455, 4294901760
    %v457 = vsub.f32 %v455, %v456
    %v458 = vand.u32 %v457, 4294901760
    %459 = vmatprep.subr.mxu0 %v458
    %v460 = vand.u32 %v208, 4294901760
    %v461 = vsub.f32 %v208, %v460
    %v462 = vand.u32 %v461, 4294901760
    %v463 = vsub.f32 %v461, %v462
    %v464 = vand.u32 %v463, 4294901760
    %465 = vmatpush1.msra.mxu0 %v464
    %v466 = vand.u32 %v211, 4294901760
    %v467 = vsub.f32 %v211, %v466
    %v468 = vand.u32 %v467, 4294901760
    %v469 = vsub.f32 %v467, %v468
    %v470 = vand.u32 %v469, 4294901760
    %471 = vmatprep.subr.mxu0 %v470
    %v472 = vand.u32 %v210, 4294901760
    %v473 = vsub.f32 %v210, %v472
    %v474 = vand.u32 %v473, 4294901760
    %v475 = vsub.f32 %v473, %v474
    %v476 = vand.u32 %v475, 4294901760
    %477 = vmatpush1.msra.mxu0 %v476
    %v478 = vand.u32 %v290, 4294901760
    %v479 = vsub.f32 %v290, %v478
    %v480 = vand.u32 %v479, 4294901760
    %v481 = vsub.f32 %v479, %v480
    %v482 = vand.u32 %v481, 4294901760
    %483 = vmatprep.subr.mxu0 %v482
    %v484 = vand.u32 %v287, 4294901760
    %v485 = vsub.f32 %v287, %v484
    %v486 = vand.u32 %v485, 4294901760
    %v487 = vsub.f32 %v485, %v486
    %v488 = vand.u32 %v487, 4294901760
    %489 = vmatpush1.msra.mxu0 %v488
    %490 = vmatprep.subr.mxu0 0.0
    %491 = vmatpush1.msra.mxu0 0.0
    %492 = vmatprep.subr.mxu0 0.0
    %493 = vmatpush1.msra.mxu0 0.0
    %494 = vmatprep.subr.mxu0 0.0
    %495 = vmatpush1.msra.mxu0 0.0
    %496 = vmatprep.subr.mxu0 0.0
    %497 = vmatpush1.msra.mxu0 0.0
    %498 = vmatprep.subr.mxu0 0.0
    %499 = vmatpush1.msra.mxu0 0.0
    %500 = vmatprep.subr.mxu0 0.0
    %501 = vmatpush1.msra.mxu0 0.0
    %502 = vmatprep.subr.mxu0 0.0
    %503 = vmatpush1.msra.mxu0 0.0
    %504 = vmatprep.subr.mxu0 0.0
    %505 = vmatpush1.msra.mxu0 0.0
    %506 = vmatprep.subr.mxu0 0.0
    %507 = vmatpush1.msra.mxu0 0.0
    %508 = vmatprep.subr.mxu0 0.0
    %509 = vmatpush1.msra.mxu0 0.0
    %510 = vmatprep.subr.mxu0 0.0
    %511 = vmatpush1.msra.mxu0 0.0
    %512 = vmatprep.subr.mxu0 0.0
    %513 = vmatpush1.msra.mxu0 0.0
    %514 = vmatprep.subr.mxu0 0.0
    %515 = vmatpush1.msra.mxu0 0.0
    %516 = vmatprep.subr.mxu0 0.0
    %517 = vmatpush1.msra.mxu0 0.0
    %518 = vmatprep.subr.mxu0 0.0
    %519 = vmatpush1.msra.mxu0 0.0
    %520 = vmatprep.subr.mxu0 0.0
    %521 = vmatpush1.msra.mxu0 0.0
    %522 = vmatprep.subr.mxu0 0.0
    %523 = vmatpush1.msra.mxu0 0.0
    %524 = vmatprep.subr.mxu0 0.0
    %525 = vmatpush1.msra.mxu0 0.0
    %526 = vmatprep.subr.mxu0 0.0
    %527 = vmatpush1.msra.mxu0 0.0
    %528 = vmatprep.subr.mxu0 0.0
    %529 = vmatpush1.msra.mxu0 0.0
    %530 = vmatprep.subr.mxu0 0.0
    %531 = vmatpush1.msra.mxu0 0.0
    %532 = vmatprep.subr.mxu0 0.0
    %533 = vmatpush1.msra.mxu0 0.0
    %534 = vmatprep.subr.mxu0 0.0
    %535 = vmatpush1.msra.mxu0 0.0
    %536 = vmatprep.subr.mxu0 0.0
    %537 = vmatpush1.msra.mxu0 0.0
    %538 = vmatprep.subr.mxu0 0.0
    %539 = vmatpush1.msra.mxu0 0.0
    %540 = vmatprep.subr.mxu0 0.0
    %541 = vmatpush1.msra.mxu0 0.0
    %542 = vmatprep.subr.mxu0 0.0
    %543 = vmatpush1.msra.mxu0 0.0
    %544 = vmatprep.subr.mxu0 0.0
    %545 = vmatpush1.msra.mxu0 0.0
    %546 = vmatprep.mubr.f32.mxu0 0.0
    %v547 = vand.u32 %v265, 4294901760
    %548 = vmatmul.mubr.f32.gmra.mrb[0].mxu0 %v547
    %v549 = vpop.f32.mrb[0].mxu0
    %v550 = vadd.f32 %v372, %v549
    %v551 = vpop.f32.mrb[0].mxu0
    %v552 = vadd.f32 %v374, %v551
    %553 = vmatprep.mubr.f32.mxu0 0.0
    %v554 = vand.u32 %v268, 4294901760
    %555 = vmatmul.mubr.f32.gmra.mrb[0].mxu0 %v554
    %v556 = vpop.f32.mrb[0].mxu0
    %v557 = vadd.f32 %v383, %v556
    %v558 = vpop.f32.mrb[0].mxu0
    %v559 = vadd.f32 %v385, %v558
    %560 = vmatprep.mubr.f32.mxu0 0.0
    %v561 = vand.u32 %v271, 4294901760
    %562 = vmatmul.mubr.f32.gmra.mrb[0].mxu0 %v561
    %v563 = vpop.f32.mrb[0].mxu0
    %v564 = vadd.f32 %v394, %v563
    %v565 = vpop.f32.mrb[0].mxu0
    %v566 = vadd.f32 %v396, %v565
    %567 = vmatprep.mubr.f32.mxu0 0.0
    %v568 = vand.u32 %v274, 4294901760
    %569 = vmatmul.mubr.f32.gmra.mrb[0].mxu0 %v568
    %v570 = vpop.f32.mrb[0].mxu0
    %v571 = vadd.f32 %v405, %v570
    %v572 = vpop.f32.mrb[0].mxu0
    %v573 = vadd.f32 %v407, %v572
    %574 = vmatprep.mubr.f32.mxu0 0.0
    %v575 = vand.u32 %v277, 4294901760
    %576 = vmatmul.mubr.f32.gmra.mrb[0].mxu0 %v575
    %v577 = vpop.f32.mrb[0].mxu0
    %v578 = vadd.f32 %v416, %v577
    %v579 = vpop.f32.mrb[0].mxu0
    %v580 = vadd.f32 %v418, %v579
    %581 = vmatprep.mubr.f32.mxu0 0.0
    %v582 = vand.u32 %v280, 4294901760
    %583 = vmatmul.mubr.f32.gmra.mrb[0].mxu0 %v582
    %v584 = vpop.f32.mrb[0].mxu0
    %v585 = vadd.f32 %v427, %v584
    %v586 = vpop.f32.mrb[0].mxu0
    %v587 = vadd.f32 %v429, %v586
    %588 = vmatprep.mubr.f32.mxu0 0.0
    %v589 = vand.u32 %v283, 4294901760
    %590 = vmatmul.mubr.f32.gmra.mrb[0].mxu0 %v589
    %v591 = vpop.f32.mrb[0].mxu0
    %v592 = vadd.f32 %v438, %v591
    %v593 = vpop.f32.mrb[0].mxu0
    %v594 = vadd.f32 %v440, %v593
    %595 = vdwg.mxu0
    %v596 = vand.u32 %v207, 4294901760
    %v597 = vsub.f32 %v207, %v596
    %598 = vmatprep.subr.mxu0 %v597
    %v599 = vand.u32 %v206, 4294901760
    %v600 = vsub.f32 %v206, %v599
    %601 = vmatpush1.msra.mxu0 %v600
    %v602 = vand.u32 %v209, 4294901760
    %v603 = vsub.f32 %v209, %v602
    %604 = vmatprep.subr.mxu0 %v603
    %v605 = vand.u32 %v208, 4294901760
    %v606 = vsub.f32 %v208, %v605
    %607 = vmatpush1.msra.mxu0 %v606
    %v608 = vand.u32 %v211, 4294901760
    %v609 = vsub.f32 %v211, %v608
    %610 = vmatprep.subr.mxu0 %v609
    %v611 = vand.u32 %v210, 4294901760
    %v612 = vsub.f32 %v210, %v611
    %613 = vmatpush1.msra.mxu0 %v612
    %v614 = vand.u32 %v290, 4294901760
    %v615 = vsub.f32 %v290, %v614
    %616 = vmatprep.subr.mxu0 %v615
    %v617 = vand.u32 %v287, 4294901760
    %v618 = vsub.f32 %v287, %v617
    %619 = vmatpush1.msra.mxu0 %v618
    %620 = vmatprep.subr.mxu0 0.0
    %621 = vmatpush1.msra.mxu0 0.0
    %622 = vmatprep.subr.mxu0 0.0
    %623 = vmatpush1.msra.mxu0 0.0
    %624 = vmatprep.subr.mxu0 0.0
    %625 = vmatpush1.msra.mxu0 0.0
    %626 = vmatprep.subr.mxu0 0.0
    %627 = vmatpush1.msra.mxu0 0.0
    %628 = vmatprep.subr.mxu0 0.0
    %629 = vmatpush1.msra.mxu0 0.0
    %630 = vmatprep.subr.mxu0 0.0
    %631 = vmatpush1.msra.mxu0 0.0
    %632 = vmatprep.subr.mxu0 0.0
    %633 = vmatpush1.msra.mxu0 0.0
    %634 = vmatprep.subr.mxu0 0.0
    %635 = vmatpush1.msra.mxu0 0.0
    %636 = vmatprep.subr.mxu0 0.0
    %637 = vmatpush1.msra.mxu0 0.0
    %638 = vmatprep.subr.mxu0 0.0
    %639 = vmatpush1.msra.mxu0 0.0
    %640 = vmatprep.subr.mxu0 0.0
    %641 = vmatpush1.msra.mxu0 0.0
    %642 = vmatprep.subr.mxu0 0.0
    %643 = vmatpush1.msra.mxu0 0.0
    %644 = vmatprep.subr.mxu0 0.0
    %645 = vmatpush1.msra.mxu0 0.0
    %646 = vmatprep.subr.mxu0 0.0
    %647 = vmatpush1.msra.mxu0 0.0
    %648 = vmatprep.subr.mxu0 0.0
    %649 = vmatpush1.msra.mxu0 0.0
    %650 = vmatprep.subr.mxu0 0.0
    %651 = vmatpush1.msra.mxu0 0.0
    %652 = vmatprep.subr.mxu0 0.0
    %653 = vmatpush1.msra.mxu0 0.0
    %654 = vmatprep.subr.mxu0 0.0
    %655 = vmatpush1.msra.mxu0 0.0
    %656 = vmatprep.subr.mxu0 0.0
    %657 = vmatpush1.msra.mxu0 0.0
    %658 = vmatprep.subr.mxu0 0.0
    %659 = vmatpush1.msra.mxu0 0.0
    %660 = vmatprep.subr.mxu0 0.0
    %661 = vmatpush1.msra.mxu0 0.0
    %662 = vmatprep.subr.mxu0 0.0
    %663 = vmatpush1.msra.mxu0 0.0
    %664 = vmatprep.subr.mxu0 0.0
    %665 = vmatpush1.msra.mxu0 0.0
    %666 = vmatprep.subr.mxu0 0.0
    %667 = vmatpush1.msra.mxu0 0.0
    %668 = vmatprep.subr.mxu0 0.0
    %669 = vmatpush1.msra.mxu0 0.0
    %670 = vmatprep.subr.mxu0 0.0
    %671 = vmatpush1.msra.mxu0 0.0
    %672 = vmatprep.subr.mxu0 0.0
    %673 = vmatpush1.msra.mxu0 0.0
    %674 = vmatprep.subr.mxu0 0.0
    %675 = vmatpush1.msra.mxu0 0.0
    %676 = vmatprep.mubr.f32.mxu0 0.0
    %v677 = vand.u32 %v265, 4294901760
    %v678 = vsub.f32 %v265, %v677
    %679 = vmatmul.mubr.f32.gmra.mrb[0].mxu0 %v678
    %v680 = vpop.f32.mrb[0].mxu0
    %v681 = vadd.f32 %v550, %v680
    %v682 = vpop.f32.mrb[0].mxu0
    %v683 = vadd.f32 %v552, %v682
    %684 = vmatprep.mubr.f32.mxu0 0.0
    %v685 = vand.u32 %v268, 4294901760
    %v686 = vsub.f32 %v268, %v685
    %687 = vmatmul.mubr.f32.gmra.mrb[0].mxu0 %v686
    %v688 = vpop.f32.mrb[0].mxu0
    %v689 = vadd.f32 %v557, %v688
    %v690 = vpop.f32.mrb[0].mxu0
    %v691 = vadd.f32 %v559, %v690
    %692 = vmatprep.mubr.f32.mxu0 0.0
    %v693 = vand.u32 %v271, 4294901760
    %v694 = vsub.f32 %v271, %v693
    %695 = vmatmul.mubr.f32.gmra.mrb[0].mxu0 %v694
    %v696 = vpop.f32.mrb[0].mxu0
    %v697 = vadd.f32 %v564, %v696
    %v698 = vpop.f32.mrb[0].mxu0
    %v699 = vadd.f32 %v566, %v698
    %700 = vmatprep.mubr.f32.mxu0 0.0
    %v701 = vand.u32 %v274, 4294901760
    %v702 = vsub.f32 %v274, %v701
    %703 = vmatmul.mubr.f32.gmra.mrb[0].mxu0 %v702
    %v704 = vpop.f32.mrb[0].mxu0
    %v705 = vadd.f32 %v571, %v704
    %v706 = vpop.f32.mrb[0].mxu0
    %v707 = vadd.f32 %v573, %v706
    %708 = vmatprep.mubr.f32.mxu0 0.0
    %v709 = vand.u32 %v277, 4294901760
    %v710 = vsub.f32 %v277, %v709
    %711 = vmatmul.mubr.f32.gmra.mrb[0].mxu0 %v710
    %v712 = vpop.f32.mrb[0].mxu0
    %v713 = vadd.f32 %v578, %v712
    %v714 = vpop.f32.mrb[0].mxu0
    %v715 = vadd.f32 %v580, %v714
    %716 = vmatprep.mubr.f32.mxu0 0.0
    %v717 = vand.u32 %v280, 4294901760
    %v718 = vsub.f32 %v280, %v717
    %719 = vmatmul.mubr.f32.gmra.mrb[0].mxu0 %v718
    %v720 = vpop.f32.mrb[0].mxu0
    %v721 = vadd.f32 %v585, %v720
    %v722 = vpop.f32.mrb[0].mxu0
    %v723 = vadd.f32 %v587, %v722
    %724 = vmatprep.mubr.f32.mxu0 0.0
    %v725 = vand.u32 %v283, 4294901760
    %v726 = vsub.f32 %v283, %v725
    %727 = vmatmul.mubr.f32.gmra.mrb[0].mxu0 %v726
    %v728 = vpop.f32.mrb[0].mxu0
    %v729 = vadd.f32 %v592, %v728
    %v730 = vpop.f32.mrb[0].mxu0
    %v731 = vadd.f32 %v594, %v730
    %732 = vdwg.mxu0
    %v733 = vand.u32 %v207, 4294901760
    %734 = vmatprep.subr.mxu0 %v733
    %v735 = vand.u32 %v206, 4294901760
    %736 = vmatpush1.msra.mxu0 %v735
    %v737 = vand.u32 %v209, 4294901760
    %738 = vmatprep.subr.mxu0 %v737
    %v739 = vand.u32 %v208, 4294901760
    %740 = vmatpush1.msra.mxu0 %v739
    %v741 = vand.u32 %v211, 4294901760
    %742 = vmatprep.subr.mxu0 %v741
    %v743 = vand.u32 %v210, 4294901760
    %744 = vmatpush1.msra.mxu0 %v743
    %v745 = vand.u32 %v290, 4294901760
    %746 = vmatprep.subr.mxu0 %v745
    %v747 = vand.u32 %v287, 4294901760
    %748 = vmatpush1.msra.mxu0 %v747
    %749 = vmatprep.subr.mxu0 0.0
    %750 = vmatpush1.msra.mxu0 0.0
    %751 = vmatprep.subr.mxu0 0.0
    %752 = vmatpush1.msra.mxu0 0.0
    %753 = vmatprep.subr.mxu0 0.0
    %754 = vmatpush1.msra.mxu0 0.0
    %755 = vmatprep.subr.mxu0 0.0
    %756 = vmatpush1.msra.mxu0 0.0
    %757 = vmatprep.subr.mxu0 0.0
    %758 = vmatpush1.msra.mxu0 0.0
    %759 = vmatprep.subr.mxu0 0.0
    %760 = vmatpush1.msra.mxu0 0.0
    %761 = vmatprep.subr.mxu0 0.0
    %762 = vmatpush1.msra.mxu0 0.0
    %763 = vmatprep.subr.mxu0 0.0
    %764 = vmatpush1.msra.mxu0 0.0
    %765 = vmatprep.subr.mxu0 0.0
    %766 = vmatpush1.msra.mxu0 0.0
    %767 = vmatprep.subr.mxu0 0.0
    %768 = vmatpush1.msra.mxu0 0.0
    %769 = vmatprep.subr.mxu0 0.0
    %770 = vmatpush1.msra.mxu0 0.0
    %771 = vmatprep.subr.mxu0 0.0
    %772 = vmatpush1.msra.mxu0 0.0
    %773 = vmatprep.subr.mxu0 0.0
    %774 = vmatpush1.msra.mxu0 0.0
    %775 = vmatprep.subr.mxu0 0.0
    %776 = vmatpush1.msra.mxu0 0.0
    %777 = vmatprep.subr.mxu0 0.0
    %778 = vmatpush1.msra.mxu0 0.0
    %779 = vmatprep.subr.mxu0 0.0
    %780 = vmatpush1.msra.mxu0 0.0
    %781 = vmatprep.subr.mxu0 0.0
    %782 = vmatpush1.msra.mxu0 0.0
    %783 = vmatprep.subr.mxu0 0.0
    %784 = vmatpush1.msra.mxu0 0.0
    %785 = vmatprep.subr.mxu0 0.0
    %786 = vmatpush1.msra.mxu0 0.0
    %787 = vmatprep.subr.mxu0 0.0
    %788 = vmatpush1.msra.mxu0 0.0
    %789 = vmatprep.subr.mxu0 0.0
    %790 = vmatpush1.msra.mxu0 0.0
    %791 = vmatprep.subr.mxu0 0.0
    %792 = vmatpush1.msra.mxu0 0.0
    %793 = vmatprep.subr.mxu0 0.0
    %794 = vmatpush1.msra.mxu0 0.0
    %795 = vmatprep.subr.mxu0 0.0
    %796 = vmatpush1.msra.mxu0 0.0
    %797 = vmatprep.subr.mxu0 0.0
    %798 = vmatpush1.msra.mxu0 0.0
    %799 = vmatprep.subr.mxu0 0.0
    %800 = vmatpush1.msra.mxu0 0.0
    %801 = vmatprep.subr.mxu0 0.0
    %802 = vmatpush1.msra.mxu0 0.0
    %803 = vmatprep.subr.mxu0 0.0
    %804 = vmatpush1.msra.mxu0 0.0
    %805 = vmatprep.mubr.f32.mxu0 0.0
    %v806 = vand.u32 %v265, 4294901760
    %v807 = vsub.f32 %v265, %v806
    %v808 = vand.u32 %v807, 4294901760
    %809 = vmatmul.mubr.f32.gmra.mrb[0].mxu0 %v808
    %v810 = vpop.f32.mrb[0].mxu0
    %v811 = vadd.f32 %v681, %v810
    %v812 = vpop.f32.mrb[0].mxu0
    %v813 = vadd.f32 %v683, %v812
    %814 = vmatprep.mubr.f32.mxu0 0.0
    %v815 = vand.u32 %v268, 4294901760
    %v816 = vsub.f32 %v268, %v815
    %v817 = vand.u32 %v816, 4294901760
    %818 = vmatmul.mubr.f32.gmra.mrb[0].mxu0 %v817
    %v819 = vpop.f32.mrb[0].mxu0
    %v820 = vadd.f32 %v689, %v819
    %v821 = vpop.f32.mrb[0].mxu0
    %v822 = vadd.f32 %v691, %v821
    %823 = vmatprep.mubr.f32.mxu0 0.0
    %v824 = vand.u32 %v271, 4294901760
    %v825 = vsub.f32 %v271, %v824
    %v826 = vand.u32 %v825, 4294901760
    %827 = vmatmul.mubr.f32.gmra.mrb[0].mxu0 %v826
    %v828 = vpop.f32.mrb[0].mxu0
    %v829 = vadd.f32 %v697, %v828
    %v830 = vpop.f32.mrb[0].mxu0
    %v831 = vadd.f32 %v699, %v830
    %832 = vmatprep.mubr.f32.mxu0 0.0
    %v833 = vand.u32 %v274, 4294901760
    %v834 = vsub.f32 %v274, %v833
    %v835 = vand.u32 %v834, 4294901760
    %836 = vmatmul.mubr.f32.gmra.mrb[0].mxu0 %v835
    %v837 = vpop.f32.mrb[0].mxu0
    %v838 = vadd.f32 %v705, %v837
    %v839 = vpop.f32.mrb[0].mxu0
    %v840 = vadd.f32 %v707, %v839
    %841 = vmatprep.mubr.f32.mxu0 0.0
    %v842 = vand.u32 %v277, 4294901760
    %v843 = vsub.f32 %v277, %v842
    %v844 = vand.u32 %v843, 4294901760
    %845 = vmatmul.mubr.f32.gmra.mrb[0].mxu0 %v844
    %v846 = vpop.f32.mrb[0].mxu0
    %v847 = vadd.f32 %v713, %v846
    %v848 = vpop.f32.mrb[0].mxu0
    %v849 = vadd.f32 %v715, %v848
    %850 = vmatprep.mubr.f32.mxu0 0.0
    %v851 = vand.u32 %v280, 4294901760
    %v852 = vsub.f32 %v280, %v851
    %v853 = vand.u32 %v852, 4294901760
    %854 = vmatmul.mubr.f32.gmra.mrb[0].mxu0 %v853
    %v855 = vpop.f32.mrb[0].mxu0
    %v856 = vadd.f32 %v721, %v855
    %v857 = vpop.f32.mrb[0].mxu0
    %v858 = vadd.f32 %v723, %v857
    %859 = vmatprep.mubr.f32.mxu0 0.0
    %v860 = vand.u32 %v283, 4294901760
    %v861 = vsub.f32 %v283, %v860
    %v862 = vand.u32 %v861, 4294901760
    %863 = vmatmul.mubr.f32.gmra.mrb[0].mxu0 %v862
    %v864 = vpop.f32.mrb[0].mxu0
    %v865 = vadd.f32 %v729, %v864
    %v866 = vpop.f32.mrb[0].mxu0
    %v867 = vadd.f32 %v731, %v866
    %868 = vdwg.mxu0
    %v869 = vand.u32 %v207, 4294901760
    %v870 = vsub.f32 %v207, %v869
    %v871 = vand.u32 %v870, 4294901760
    %872 = vmatprep.subr.mxu0 %v871
    %v873 = vand.u32 %v206, 4294901760
    %v874 = vsub.f32 %v206, %v873
    %v875 = vand.u32 %v874, 4294901760
    %876 = vmatpush1.msra.mxu0 %v875
    %v877 = vand.u32 %v209, 4294901760
    %v878 = vsub.f32 %v209, %v877
    %v879 = vand.u32 %v878, 4294901760
    %880 = vmatprep.subr.mxu0 %v879
    %v881 = vand.u32 %v208, 4294901760
    %v882 = vsub.f32 %v208, %v881
    %v883 = vand.u32 %v882, 4294901760
    %884 = vmatpush1.msra.mxu0 %v883
    %v885 = vand.u32 %v211, 4294901760
    %v886 = vsub.f32 %v211, %v885
    %v887 = vand.u32 %v886, 4294901760
    %888 = vmatprep.subr.mxu0 %v887
    %v889 = vand.u32 %v210, 4294901760
    %v890 = vsub.f32 %v210, %v889
    %v891 = vand.u32 %v890, 4294901760
    %892 = vmatpush1.msra.mxu0 %v891
    %v893 = vand.u32 %v290, 4294901760
    %v894 = vsub.f32 %v290, %v893
    %v895 = vand.u32 %v894, 4294901760
    %896 = vmatprep.subr.mxu0 %v895
    %v897 = vand.u32 %v287, 4294901760
    %v898 = vsub.f32 %v287, %v897
    %v899 = vand.u32 %v898, 4294901760
    %900 = vmatpush1.msra.mxu0 %v899
    %901 = vmatprep.subr.mxu0 0.0
    %902 = vmatpush1.msra.mxu0 0.0
    %903 = vmatprep.subr.mxu0 0.0
    %904 = vmatpush1.msra.mxu0 0.0
    %905 = vmatprep.subr.mxu0 0.0
    %906 = vmatpush1.msra.mxu0 0.0
    %907 = vmatprep.subr.mxu0 0.0
    %908 = vmatpush1.msra.mxu0 0.0
    %909 = vmatprep.subr.mxu0 0.0
    %910 = vmatpush1.msra.mxu0 0.0
    %911 = vmatprep.subr.mxu0 0.0
    %912 = vmatpush1.msra.mxu0 0.0
    %913 = vmatprep.subr.mxu0 0.0
    %914 = vmatpush1.msra.mxu0 0.0
    %915 = vmatprep.subr.mxu0 0.0
    %916 = vmatpush1.msra.mxu0 0.0
    %917 = vmatprep.subr.mxu0 0.0
    %918 = vmatpush1.msra.mxu0 0.0
    %919 = vmatprep.subr.mxu0 0.0
    %920 = vmatpush1.msra.mxu0 0.0
    %921 = vmatprep.subr.mxu0 0.0
    %922 = vmatpush1.msra.mxu0 0.0
    %923 = vmatprep.subr.mxu0 0.0
    %924 = vmatpush1.msra.mxu0 0.0
    %925 = vmatprep.subr.mxu0 0.0
    %926 = vmatpush1.msra.mxu0 0.0
    %927 = vmatprep.subr.mxu0 0.0
    %928 = vmatpush1.msra.mxu0 0.0
    %929 = vmatprep.subr.mxu0 0.0
    %930 = vmatpush1.msra.mxu0 0.0
    %931 = vmatprep.subr.mxu0 0.0
    %932 = vmatpush1.msra.mxu0 0.0
    %933 = vmatprep.subr.mxu0 0.0
    %934 = vmatpush1.msra.mxu0 0.0
    %935 = vmatprep.subr.mxu0 0.0
    %936 = vmatpush1.msra.mxu0 0.0
    %937 = vmatprep.subr.mxu0 0.0
    %938 = vmatpush1.msra.mxu0 0.0
    %939 = vmatprep.subr.mxu0 0.0
    %940 = vmatpush1.msra.mxu0 0.0
    %941 = vmatprep.subr.mxu0 0.0
    %942 = vmatpush1.msra.mxu0 0.0
    %943 = vmatprep.subr.mxu0 0.0
    %944 = vmatpush1.msra.mxu0 0.0
    %945 = vmatprep.subr.mxu0 0.0
    %946 = vmatpush1.msra.mxu0 0.0
    %947 = vmatprep.subr.mxu0 0.0
    %948 = vmatpush1.msra.mxu0 0.0
    %949 = vmatprep.subr.mxu0 0.0
    %950 = vmatpush1.msra.mxu0 0.0
    %951 = vmatprep.subr.mxu0 0.0
    %952 = vmatpush1.msra.mxu0 0.0
    %953 = vmatprep.subr.mxu0 0.0
    %954 = vmatpush1.msra.mxu0 0.0
    %955 = vmatprep.subr.mxu0 0.0
    %956 = vmatpush1.msra.mxu0 0.0
    %957 = vmatprep.mubr.f32.mxu0 0.0
    %v958 = vand.u32 %v265, 4294901760
    %959 = vmatmul.mubr.f32.gmra.mrb[0].mxu0 %v958
    %v960 = vpop.f32.mrb[0].mxu0
    %v961 = vadd.f32 %v811, %v960
    %v962 = vpop.f32.mrb[0].mxu0
    %v963 = vadd.f32 %v813, %v962
    %964 = vmatprep.mubr.f32.mxu0 0.0
    %v965 = vand.u32 %v268, 4294901760
    %966 = vmatmul.mubr.f32.gmra.mrb[0].mxu0 %v965
    %v967 = vpop.f32.mrb[0].mxu0
    %v968 = vadd.f32 %v820, %v967
    %v969 = vpop.f32.mrb[0].mxu0
    %v970 = vadd.f32 %v822, %v969
    %971 = vmatprep.mubr.f32.mxu0 0.0
    %v972 = vand.u32 %v271, 4294901760
    %973 = vmatmul.mubr.f32.gmra.mrb[0].mxu0 %v972
    %v974 = vpop.f32.mrb[0].mxu0
    %v975 = vadd.f32 %v829, %v974
    %v976 = vpop.f32.mrb[0].mxu0
    %v977 = vadd.f32 %v831, %v976
    %978 = vmatprep.mubr.f32.mxu0 0.0
    %v979 = vand.u32 %v274, 4294901760
    %980 = vmatmul.mubr.f32.gmra.mrb[0].mxu0 %v979
    %v981 = vpop.f32.mrb[0].mxu0
    %v982 = vadd.f32 %v838, %v981
    %v983 = vpop.f32.mrb[0].mxu0
    %v984 = vadd.f32 %v840, %v983
    %985 = vmatprep.mubr.f32.mxu0 0.0
    %v986 = vand.u32 %v277, 4294901760
    %987 = vmatmul.mubr.f32.gmra.mrb[0].mxu0 %v986
    %v988 = vpop.f32.mrb[0].mxu0
    %v989 = vadd.f32 %v847, %v988
    %v990 = vpop.f32.mrb[0].mxu0
    %v991 = vadd.f32 %v849, %v990
    %992 = vmatprep.mubr.f32.mxu0 0.0
    %v993 = vand.u32 %v280, 4294901760
    %994 = vmatmul.mubr.f32.gmra.mrb[0].mxu0 %v993
    %v995 = vpop.f32.mrb[0].mxu0
    %v996 = vadd.f32 %v856, %v995
    %v997 = vpop.f32.mrb[0].mxu0
    %v998 = vadd.f32 %v858, %v997
    %999 = vmatprep.mubr.f32.mxu0 0.0
    %v1000 = vand.u32 %v283, 4294901760
    %1001 = vmatmul.mubr.f32.gmra.mrb[0].mxu0 %v1000
    %v1002 = vpop.f32.mrb[0].mxu0
    %v1003 = vadd.f32 %v865, %v1002
    %v1004 = vpop.f32.mrb[0].mxu0
    %v1005 = vadd.f32 %v867, %v1004
    %1006 = vdwg.mxu0
    %v1007 = vand.u32 %v207, 4294901760
    %1008 = vmatprep.subr.mxu0 %v1007
    %v1009 = vand.u32 %v206, 4294901760
    %1010 = vmatpush1.msra.mxu0 %v1009
    %v1011 = vand.u32 %v209, 4294901760
    %1012 = vmatprep.subr.mxu0 %v1011
    %v1013 = vand.u32 %v208, 4294901760
    %1014 = vmatpush1.msra.mxu0 %v1013
    %v1015 = vand.u32 %v211, 4294901760
    %1016 = vmatprep.subr.mxu0 %v1015
    %v1017 = vand.u32 %v210, 4294901760
    %1018 = vmatpush1.msra.mxu0 %v1017
    %v1019 = vand.u32 %v290, 4294901760
    %1020 = vmatprep.subr.mxu0 %v1019
    %v1021 = vand.u32 %v287, 4294901760
    %1022 = vmatpush1.msra.mxu0 %v1021
    %1023 = vmatprep.subr.mxu0 0.0
    %1024 = vmatpush1.msra.mxu0 0.0
    %1025 = vmatprep.subr.mxu0 0.0
    %1026 = vmatpush1.msra.mxu0 0.0
    %1027 = vmatprep.subr.mxu0 0.0
    %1028 = vmatpush1.msra.mxu0 0.0
    %1029 = vmatprep.subr.mxu0 0.0
    %1030 = vmatpush1.msra.mxu0 0.0
    %1031 = vmatprep.subr.mxu0 0.0
    %1032 = vmatpush1.msra.mxu0 0.0
    %1033 = vmatprep.subr.mxu0 0.0
    %1034 = vmatpush1.msra.mxu0 0.0
    %1035 = vmatprep.subr.mxu0 0.0
    %1036 = vmatpush1.msra.mxu0 0.0
    %1037 = vmatprep.subr.mxu0 0.0
    %1038 = vmatpush1.msra.mxu0 0.0
    %1039 = vmatprep.subr.mxu0 0.0
    %1040 = vmatpush1.msra.mxu0 0.0
    %1041 = vmatprep.subr.mxu0 0.0
    %1042 = vmatpush1.msra.mxu0 0.0
    %1043 = vmatprep.subr.mxu0 0.0
    %1044 = vmatpush1.msra.mxu0 0.0
    %1045 = vmatprep.subr.mxu0 0.0
    %1046 = vmatpush1.msra.mxu0 0.0
    %1047 = vmatprep.subr.mxu0 0.0
    %1048 = vmatpush1.msra.mxu0 0.0
    %1049 = vmatprep.subr.mxu0 0.0
    %1050 = vmatpush1.msra.mxu0 0.0
    %1051 = vmatprep.subr.mxu0 0.0
    %1052 = vmatpush1.msra.mxu0 0.0
    %1053 = vmatprep.subr.mxu0 0.0
    %1054 = vmatpush1.msra.mxu0 0.0
    %1055 = vmatprep.subr.mxu0 0.0
    %1056 = vmatpush1.msra.mxu0 0.0
    %1057 = vmatprep.subr.mxu0 0.0
    %1058 = vmatpush1.msra.mxu0 0.0
    %1059 = vmatprep.subr.mxu0 0.0
    %1060 = vmatpush1.msra.mxu0 0.0
    %1061 = vmatprep.subr.mxu0 0.0
    %1062 = vmatpush1.msra.mxu0 0.0
    %1063 = vmatprep.subr.mxu0 0.0
    %1064 = vmatpush1.msra.mxu0 0.0
    %1065 = vmatprep.subr.mxu0 0.0
    %1066 = vmatpush1.msra.mxu0 0.0
    %1067 = vmatprep.subr.mxu0 0.0
    %1068 = vmatpush1.msra.mxu0 0.0
    %1069 = vmatprep.subr.mxu0 0.0
    %1070 = vmatpush1.msra.mxu0 0.0
    %1071 = vmatprep.subr.mxu0 0.0
    %1072 = vmatpush1.msra.mxu0 0.0
    %1073 = vmatprep.subr.mxu0 0.0
    %1074 = vmatpush1.msra.mxu0 0.0
    %1075 = vmatprep.subr.mxu0 0.0
    %1076 = vmatpush1.msra.mxu0 0.0
    %1077 = vmatprep.subr.mxu0 0.0
    %1078 = vmatpush1.msra.mxu0 0.0
    %1079 = vmatprep.mubr.f32.mxu0 0.0
    %v1080 = vand.u32 %v265, 4294901760
    %1081 = vmatmul.mubr.f32.gmra.mrb[0].mxu0 %v1080
    %v1082 = vpop.f32.mrb[0].mxu0
    %v1083 = vadd.f32 %v961, %v1082
    %v1084 = vpop.f32.mrb[0].mxu0
    %v1085 = vadd.f32 %v963, %v1084
    %1086 = vmatprep.mubr.f32.mxu0 0.0
    %v1087 = vand.u32 %v268, 4294901760
    %1088 = vmatmul.mubr.f32.gmra.mrb[0].mxu0 %v1087
    %v1089 = vpop.f32.mrb[0].mxu0
    %v1090 = vadd.f32 %v968, %v1089
    %v1091 = vpop.f32.mrb[0].mxu0
    %v1092 = vadd.f32 %v970, %v1091
    %1093 = vmatprep.mubr.f32.mxu0 0.0
    %v1094 = vand.u32 %v271, 4294901760
    %1095 = vmatmul.mubr.f32.gmra.mrb[0].mxu0 %v1094
    %v1096 = vpop.f32.mrb[0].mxu0
    %v1097 = vadd.f32 %v975, %v1096
    %v1098 = vpop.f32.mrb[0].mxu0
    %v1099 = vadd.f32 %v977, %v1098
    %1100 = vmatprep.mubr.f32.mxu0 0.0
    %v1101 = vand.u32 %v274, 4294901760
    %1102 = vmatmul.mubr.f32.gmra.mrb[0].mxu0 %v1101
    %v1103 = vpop.f32.mrb[0].mxu0
    %v1104 = vadd.f32 %v982, %v1103
    %v1105 = vpop.f32.mrb[0].mxu0
    %v1106 = vadd.f32 %v984, %v1105
    %1107 = vmatprep.mubr.f32.mxu0 0.0
    %v1108 = vand.u32 %v277, 4294901760
    %1109 = vmatmul.mubr.f32.gmra.mrb[0].mxu0 %v1108
    %v1110 = vpop.f32.mrb[0].mxu0
    %v1111 = vadd.f32 %v989, %v1110
    %v1112 = vpop.f32.mrb[0].mxu0
    %v1113 = vadd.f32 %v991, %v1112
    %1114 = vmatprep.mubr.f32.mxu0 0.0
    %v1115 = vand.u32 %v280, 4294901760
    %1116 = vmatmul.mubr.f32.gmra.mrb[0].mxu0 %v1115
    %v1117 = vpop.f32.mrb[0].mxu0
    %v1118 = vadd.f32 %v996, %v1117
    %v1119 = vpop.f32.mrb[0].mxu0
    %v1120 = vadd.f32 %v998, %v1119
    %1121 = vmatprep.mubr.f32.mxu0 0.0
    %v1122 = vand.u32 %v283, 4294901760
    %1123 = vmatmul.mubr.f32.gmra.mrb[0].mxu0 %v1122
    %v1124 = vpop.f32.mrb[0].mxu0
    %v1125 = vadd.f32 %v1003, %v1124
    %v1126 = vpop.f32.mrb[0].mxu0
    %v1127 = vadd.f32 %v1005, %v1126
    %1128 = vdwg.mxu0
    %s1129 = sld [smem:[#allocation2 + $0x1]]
    %vm1130 = vcmp.ge.f32.partialorder %v1083, 0.0
    %vm1131 = vcmp.ge.f32.partialorder %v1085, 0.0
    %vm1132 = vcmp.ge.f32.partialorder %v1090, 0.0
    %vm1133 = vcmp.ge.f32.partialorder %v1092, 0.0
    %vm1134 = vcmp.ge.f32.partialorder %v1097, 0.0
    %vm1135 = vcmp.ge.f32.partialorder %v1099, 0.0
    %vm1136 = vcmp.ge.f32.partialorder %v1104, 0.0
    %vm1137 = vcmp.ge.f32.partialorder %v1106, 0.0
    %vm1138 = vcmp.ge.f32.partialorder %v1111, 0.0
    %vm1139 = vcmp.ge.f32.partialorder %v1113, 0.0
    %vm1140 = vcmp.ge.f32.partialorder %v1118, 0.0
    %vm1141 = vcmp.ge.f32.partialorder %v1120, 0.0
    %vm1142 = vcmp.ge.f32.partialorder %v1125, 0.0
    %vm1143 = vcmp.ge.f32.partialorder %v1127, 0.0
    %v1144 = vstv %s1129
    %v1145 = vmul.f32 %v1144, %v1083
    %v1146 = vmul.f32 %v1144, %v1085
    %v1147 = vmul.f32 %v1144, %v1090
    %v1148 = vmul.f32 %v1144, %v1092
    %v1149 = vmul.f32 %v1144, %v1097
    %v1150 = vmul.f32 %v1144, %v1099
    %v1151 = vmul.f32 %v1144, %v1104
    %v1152 = vmul.f32 %v1144, %v1106
    %v1153 = vmul.f32 %v1144, %v1111
    %v1154 = vmul.f32 %v1144, %v1113
    %v1155 = vmul.f32 %v1144, %v1118
    %v1156 = vmul.f32 %v1144, %v1120
    %v1157 = vmul.f32 %v1144, %v1125
    %v1158 = vmul.f32 %v1144, %v1127
    %v1159 = vsel %vm1130, %v1083, %v1145
    %v1160 = vsel %vm1131, %v1085, %v1146
    %v1161 = vsel %vm1132, %v1090, %v1147
    %v1162 = vsel %vm1133, %v1092, %v1148
    %v1163 = vsel %vm1134, %v1097, %v1149
    %v1164 = vsel %vm1135, %v1099, %v1150
    %v1165 = vsel %vm1136, %v1104, %v1151
    %v1166 = vsel %vm1137, %v1106, %v1152
    %v1167 = vsel %vm1138, %v1111, %v1153
    %v1168 = vsel %vm1139, %v1113, %v1154
    %v1169 = vsel %vm1140, %v1118, %v1155
    %v1170 = vsel %vm1141, %v1120, %v1156
    %v1171 = vsel %vm1142, %v1125, %v1157
    %v1172 = vsel %vm1143, %v1127, %v1158
    %v1173 = vld [vmem:[%s6] sm:$0xff]
    %v1174 = vld [vmem:[%s6 + $0x8] sm:$0xff]
    %v1175 = vld [vmem:[%s6 + $0x10] sm:$0xff]
    %v1176 = vld [vmem:[%s6 + $0x18] sm:$0xff]
    %v1177 = vld [vmem:[%s6 + $0x20] sm:$0xff]
    %v1178 = vld [vmem:[%s6 + $0x28] sm:$0xff]
    %v1179 = vld [vmem:[%s6 + $0x30] sm:$0xff]
    %v1180 = vld [vmem:[%s6 + $0x38] sm:$0xff]
    %v1181 = vld [vmem:[%s6 + $0x40] sm:$0xff]
    %v1182 = vld [vmem:[%s6 + $0x48] sm:$0xff]
    %v1183 = vld [vmem:[%s6 + $0x50] sm:$0xff]
    %v1184 = vld [vmem:[%s6 + $0x58] sm:$0xff]
    %v1185 = vld [vmem:[%s6 + $0x60] sm:$0xf]
    %v1186 = vld [vmem:[%s7] sm:$0xff]
    %v1187 = vld [vmem:[%s7 + $0x8] sm:$0xff]
    %v1188 = vld [vmem:[%s7 + $0x10] sm:$0xff]
    %v1189 = vld [vmem:[%s7 + $0x18] sm:$0xff]
    %v1190 = vld [vmem:[%s7 + $0x20] sm:$0xff]
    %v1191 = vld [vmem:[%s7 + $0x28] sm:$0xff]
    %v1192 = vld [vmem:[%s7 + $0x30] sm:$0xff]
    %v1193 = vld [vmem:[%s7 + $0x38] sm:$0xff]
    %v1194 = vld [vmem:[%s7 + $0x40] sm:$0xff]
    %v1195 = vld [vmem:[%s7 + $0x48] sm:$0xff]
    %v1196 = vld [vmem:[%s7 + $0x50] sm:$0xff]
    %v1197 = vld [vmem:[%s7 + $0x58] sm:$0xff]
    %v1198 = vld [vmem:[%s7 + $0x60] sm:$0xf]
    %1200 = vset.pattern.permute.xlu0 0
    %1201 = vperm.xlu0 %1200, %v1186
    %v1202 = vpop.permute.xlu0 %1201
    %1205 = vset.pattern.permute.xlu0 0
    %1206 = vperm.xlu0 %1205, %v1187
    %v1207 = vpop.permute.xlu0 %1206
    %1210 = vset.pattern.permute.xlu0 0
    %1211 = vperm.xlu0 %1210, %v1188
    %v1212 = vpop.permute.xlu0 %1211
    %1215 = vset.pattern.permute.xlu0 0
    %1216 = vperm.xlu0 %1215, %v1189
    %v1217 = vpop.permute.xlu0 %1216
    %1220 = vset.pattern.permute.xlu0 0
    %1221 = vperm.xlu0 %1220, %v1190
    %v1222 = vpop.permute.xlu0 %1221
    %1225 = vset.pattern.permute.xlu0 0
    %1226 = vperm.xlu0 %1225, %v1191
    %v1227 = vpop.permute.xlu0 %1226
    %1230 = vset.pattern.permute.xlu0 0
    %1231 = vperm.xlu0 %1230, %v1192
    %v1232 = vpop.permute.xlu0 %1231
    %1235 = vset.pattern.permute.xlu0 0
    %1236 = vperm.xlu0 %1235, %v1193
    %v1237 = vpop.permute.xlu0 %1236
    %1240 = vset.pattern.permute.xlu0 0
    %1241 = vperm.xlu0 %1240, %v1194
    %v1242 = vpop.permute.xlu0 %1241
    %1245 = vset.pattern.permute.xlu0 0
    %1246 = vperm.xlu0 %1245, %v1195
    %v1247 = vpop.permute.xlu0 %1246
    %1250 = vset.pattern.permute.xlu0 0
    %1251 = vperm.xlu0 %1250, %v1196
    %v1252 = vpop.permute.xlu0 %1251
    %1255 = vset.pattern.permute.xlu0 0
    %1256 = vperm.xlu0 %1255, %v1197
    %v1257 = vpop.permute.xlu0 %1256
    %1260 = vset.pattern.permute.xlu0 0
    %1261 = vperm.xlu0 %1260, %v1198
    %v1262 = vpop.permute.xlu0 %1261
    %vm1264 = vcmask 408576
    %v1266 = vsel %vm1264, %v1173, 0
    %v1269 = vsel %vm1264, %v1174, 0
    %v1272 = vsel %vm1264, %v1175, 0
    %v1275 = vsel %vm1264, %v1176, 0
    %v1278 = vsel %vm1264, %v1177, 0
    %v1281 = vsel %vm1264, %v1178, 0
    %v1284 = vsel %vm1264, %v1179, 0
    %v1287 = vsel %vm1264, %v1180, 0
    %v1290 = vsel %vm1264, %v1181, 0
    %v1293 = vsel %vm1264, %v1182, 0
    %v1296 = vsel %vm1264, %v1183, 0
    %v1299 = vsel %vm1264, %v1184, 0
    %v1302 = vsel %vm1264, %v1185, 0
    %vm1304 = vcmask 1041408
    %v1306 = vsel %vm1304, %v1171, 0
    %v1309 = vsel %vm1304, %v1172, 0
    %v1311 = vand.u32 %v1160, 4294901760
    %1312 = vmatprep.subr.mxu0 %v1311
    %v1313 = vand.u32 %v1159, 4294901760
    %1314 = vmatpush1.msra.mxu0 %v1313
    %v1315 = vand.u32 %v1162, 4294901760
    %1316 = vmatprep.subr.mxu0 %v1315
    %v1317 = vand.u32 %v1161, 4294901760
    %1318 = vmatpush1.msra.mxu0 %v1317
    %v1319 = vand.u32 %v1164, 4294901760
    %1320 = vmatprep.subr.mxu0 %v1319
    %v1321 = vand.u32 %v1163, 4294901760
    %1322 = vmatpush1.msra.mxu0 %v1321
    %v1323 = vand.u32 %v1166, 4294901760
    %1324 = vmatprep.subr.mxu0 %v1323
    %v1325 = vand.u32 %v1165, 4294901760
    %1326 = vmatpush1.msra.mxu0 %v1325
    %v1327 = vand.u32 %v1168, 4294901760
    %1328 = vmatprep.subr.mxu0 %v1327
    %v1329 = vand.u32 %v1167, 4294901760
    %1330 = vmatpush1.msra.mxu0 %v1329
    %v1331 = vand.u32 %v1170, 4294901760
    %1332 = vmatprep.subr.mxu0 %v1331
    %v1333 = vand.u32 %v1169, 4294901760
    %1334 = vmatpush1.msra.mxu0 %v1333
    %v1335 = vand.u32 %v1309, 4294901760
    %1336 = vmatprep.subr.mxu0 %v1335
    %v1337 = vand.u32 %v1306, 4294901760
    %1338 = vmatpush1.msra.mxu0 %v1337
    %1339 = vmatprep.subr.mxu0 0.0
    %1340 = vmatpush1.msra.mxu0 0.0
    %1341 = vmatprep.subr.mxu0 0.0
    %1342 = vmatpush1.msra.mxu0 0.0
    %1343 = vmatprep.subr.mxu0 0.0
    %1344 = vmatpush1.msra.mxu0 0.0
    %1345 = vmatprep.subr.mxu0 0.0
    %1346 = vmatpush1.msra.mxu0 0.0
    %1347 = vmatprep.subr.mxu0 0.0
    %1348 = vmatpush1.msra.mxu0 0.0
    %1349 = vmatprep.subr.mxu0 0.0
    %1350 = vmatpush1.msra.mxu0 0.0
    %1351 = vmatprep.subr.mxu0 0.0
    %1352 = vmatpush1.msra.mxu0 0.0
    %1353 = vmatprep.subr.mxu0 0.0
    %1354 = vmatpush1.msra.mxu0 0.0
    %1355 = vmatprep.subr.mxu0 0.0
    %1356 = vmatpush1.msra.mxu0 0.0
    %1357 = vmatprep.subr.mxu0 0.0
    %1358 = vmatpush1.msra.mxu0 0.0
    %1359 = vmatprep.subr.mxu0 0.0
    %1360 = vmatpush1.msra.mxu0 0.0
    %1361 = vmatprep.subr.mxu0 0.0
    %1362 = vmatpush1.msra.mxu0 0.0
    %1363 = vmatprep.subr.mxu0 0.0
    %1364 = vmatpush1.msra.mxu0 0.0
    %1365 = vmatprep.subr.mxu0 0.0
    %1366 = vmatpush1.msra.mxu0 0.0
    %1367 = vmatprep.subr.mxu0 0.0
    %1368 = vmatpush1.msra.mxu0 0.0
    %1369 = vmatprep.subr.mxu0 0.0
    %1370 = vmatpush1.msra.mxu0 0.0
    %1371 = vmatprep.subr.mxu0 0.0
    %1372 = vmatpush1.msra.mxu0 0.0
    %1373 = vmatprep.subr.mxu0 0.0
    %1374 = vmatpush1.msra.mxu0 0.0
    %1375 = vmatprep.subr.mxu0 0.0
    %1376 = vmatpush1.msra.mxu0 0.0
    %1377 = vmatprep.subr.mxu0 0.0
    %1378 = vmatpush1.msra.mxu0 0.0
    %1379 = vmatprep.subr.mxu0 0.0
    %1380 = vmatpush1.msra.mxu0 0.0
    %1381 = vmatprep.subr.mxu0 0.0
    %1382 = vmatpush1.msra.mxu0 0.0
    %1383 = vmatprep.subr.mxu0 0.0
    %1384 = vmatpush1.msra.mxu0 0.0
    %1385 = vmatprep.subr.mxu0 0.0
    %1386 = vmatpush1.msra.mxu0 0.0
    %1387 = vmatprep.subr.mxu0 0.0
    %1388 = vmatpush1.msra.mxu0 0.0
    %1389 = vmatprep.mubr.f32.mxu0 0.0
    %v1390 = vand.u32 %v1266, 4294901760
    %v1391 = vsub.f32 %v1266, %v1390
    %v1392 = vand.u32 %v1391, 4294901760
    %v1393 = vsub.f32 %v1391, %v1392
    %v1394 = vand.u32 %v1393, 4294901760
    %1395 = vmatmul.mubr.f32.gmra.mrb[0].mxu0 %v1394
    %v1396 = vpop.f32.mrb[0].mxu0
    %v1397 = vadd.f32 %v1202, %v1396
    %v1398 = vpop.f32.mrb[0].mxu0
    %v1399 = vadd.f32 %v1202, %v1398
    %1400 = vmatprep.mubr.f32.mxu0 0.0
    %v1401 = vand.u32 %v1269, 4294901760
    %v1402 = vsub.f32 %v1269, %v1401
    %v1403 = vand.u32 %v1402, 4294901760
    %v1404 = vsub.f32 %v1402, %v1403
    %v1405 = vand.u32 %v1404, 4294901760
    %1406 = vmatmul.mubr.f32.gmra.mrb[0].mxu0 %v1405
    %v1407 = vpop.f32.mrb[0].mxu0
    %v1408 = vadd.f32 %v1207, %v1407
    %v1409 = vpop.f32.mrb[0].mxu0
    %v1410 = vadd.f32 %v1207, %v1409
    %1411 = vmatprep.mubr.f32.mxu0 0.0
    %v1412 = vand.u32 %v1272, 4294901760
    %v1413 = vsub.f32 %v1272, %v1412
    %v1414 = vand.u32 %v1413, 4294901760
    %v1415 = vsub.f32 %v1413, %v1414
    %v1416 = vand.u32 %v1415, 4294901760
    %1417 = vmatmul.mubr.f32.gmra.mrb[0].mxu0 %v1416
    %v1418 = vpop.f32.mrb[0].mxu0
    %v1419 = vadd.f32 %v1212, %v1418
    %v1420 = vpop.f32.mrb[0].mxu0
    %v1421 = vadd.f32 %v1212, %v1420
    %1422 = vmatprep.mubr.f32.mxu0 0.0
    %v1423 = vand.u32 %v1275, 4294901760
    %v1424 = vsub.f32 %v1275, %v1423
    %v1425 = vand.u32 %v1424, 4294901760
    %v1426 = vsub.f32 %v1424, %v1425
    %v1427 = vand.u32 %v1426, 4294901760
    %1428 = vmatmul.mubr.f32.gmra.mrb[0].mxu0 %v1427
    %v1429 = vpop.f32.mrb[0].mxu0
    %v1430 = vadd.f32 %v1217, %v1429
    %v1431 = vpop.f32.mrb[0].mxu0
    %v1432 = vadd.f32 %v1217, %v1431
    %1433 = vmatprep.mubr.f32.mxu0 0.0
    %v1434 = vand.u32 %v1278, 4294901760
    %v1435 = vsub.f32 %v1278, %v1434
    %v1436 = vand.u32 %v1435, 4294901760
    %v1437 = vsub.f32 %v1435, %v1436
    %v1438 = vand.u32 %v1437, 4294901760
    %1439 = vmatmul.mubr.f32.gmra.mrb[0].mxu0 %v1438
    %v1440 = vpop.f32.mrb[0].mxu0
    %v1441 = vadd.f32 %v1222, %v1440
    %v1442 = vpop.f32.mrb[0].mxu0
    %v1443 = vadd.f32 %v1222, %v1442
    %1444 = vmatprep.mubr.f32.mxu0 0.0
    %v1445 = vand.u32 %v1281, 4294901760
    %v1446 = vsub.f32 %v1281, %v1445
    %v1447 = vand.u32 %v1446, 4294901760
    %v1448 = vsub.f32 %v1446, %v1447
    %v1449 = vand.u32 %v1448, 4294901760
    %1450 = vmatmul.mubr.f32.gmra.mrb[0].mxu0 %v1449
    %v1451 = vpop.f32.mrb[0].mxu0
    %v1452 = vadd.f32 %v1227, %v1451
    %v1453 = vpop.f32.mrb[0].mxu0
    %v1454 = vadd.f32 %v1227, %v1453
    %1455 = vmatprep.mubr.f32.mxu0 0.0
    %v1456 = vand.u32 %v1284, 4294901760
    %v1457 = vsub.f32 %v1284, %v1456
    %v1458 = vand.u32 %v1457, 4294901760
    %v1459 = vsub.f32 %v1457, %v1458
    %v1460 = vand.u32 %v1459, 4294901760
    %1461 = vmatmul.mubr.f32.gmra.mrb[0].mxu0 %v1460
    %v1462 = vpop.f32.mrb[0].mxu0
    %v1463 = vadd.f32 %v1232, %v1462
    %v1464 = vpop.f32.mrb[0].mxu0
    %v1465 = vadd.f32 %v1232, %v1464
    %1466 = vmatprep.mubr.f32.mxu0 0.0
    %v1467 = vand.u32 %v1287, 4294901760
    %v1468 = vsub.f32 %v1287, %v1467
    %v1469 = vand.u32 %v1468, 4294901760
    %v1470 = vsub.f32 %v1468, %v1469
    %v1471 = vand.u32 %v1470, 4294901760
    %1472 = vmatmul.mubr.f32.gmra.mrb[0].mxu0 %v1471
    %v1473 = vpop.f32.mrb[0].mxu0
    %v1474 = vadd.f32 %v1237, %v1473
    %v1475 = vpop.f32.mrb[0].mxu0
    %v1476 = vadd.f32 %v1237, %v1475
    %1477 = vmatprep.mubr.f32.mxu0 0.0
    %v1478 = vand.u32 %v1290, 4294901760
    %v1479 = vsub.f32 %v1290, %v1478
    %v1480 = vand.u32 %v1479, 4294901760
    %v1481 = vsub.f32 %v1479, %v1480
    %v1482 = vand.u32 %v1481, 4294901760
    %1483 = vmatmul.mubr.f32.gmra.mrb[0].mxu0 %v1482
    %v1484 = vpop.f32.mrb[0].mxu0
    %v1485 = vadd.f32 %v1242, %v1484
    %v1486 = vpop.f32.mrb[0].mxu0
    %v1487 = vadd.f32 %v1242, %v1486
    %1488 = vmatprep.mubr.f32.mxu0 0.0
    %v1489 = vand.u32 %v1293, 4294901760
    %v1490 = vsub.f32 %v1293, %v1489
    %v1491 = vand.u32 %v1490, 4294901760
    %v1492 = vsub.f32 %v1490, %v1491
    %v1493 = vand.u32 %v1492, 4294901760
    %1494 = vmatmul.mubr.f32.gmra.mrb[0].mxu0 %v1493
    %v1495 = vpop.f32.mrb[0].mxu0
    %v1496 = vadd.f32 %v1247, %v1495
    %v1497 = vpop.f32.mrb[0].mxu0
    %v1498 = vadd.f32 %v1247, %v1497
    %1499 = vmatprep.mubr.f32.mxu0 0.0
    %v1500 = vand.u32 %v1296, 4294901760
    %v1501 = vsub.f32 %v1296, %v1500
    %v1502 = vand.u32 %v1501, 4294901760
    %v1503 = vsub.f32 %v1501, %v1502
    %v1504 = vand.u32 %v1503, 4294901760
    %1505 = vmatmul.mubr.f32.gmra.mrb[0].mxu0 %v1504
    %v1506 = vpop.f32.mrb[0].mxu0
    %v1507 = vadd.f32 %v1252, %v1506
    %v1508 = vpop.f32.mrb[0].mxu0
    %v1509 = vadd.f32 %v1252, %v1508
    %1510 = vmatprep.mubr.f32.mxu0 0.0
    %v1511 = vand.u32 %v1299, 4294901760
    %v1512 = vsub.f32 %v1299, %v1511
    %v1513 = vand.u32 %v1512, 4294901760
    %v1514 = vsub.f32 %v1512, %v1513
    %v1515 = vand.u32 %v1514, 4294901760
    %1516 = vmatmul.mubr.f32.gmra.mrb[0].mxu0 %v1515
    %v1517 = vpop.f32.mrb[0].mxu0
    %v1518 = vadd.f32 %v1257, %v1517
    %v1519 = vpop.f32.mrb[0].mxu0
    %v1520 = vadd.f32 %v1257, %v1519
    %1521 = vmatprep.mubr.f32.mxu0 0.0
    %v1522 = vand.u32 %v1302, 4294901760
    %v1523 = vsub.f32 %v1302, %v1522
    %v1524 = vand.u32 %v1523, 4294901760
    %v1525 = vsub.f32 %v1523, %v1524
    %v1526 = vand.u32 %v1525, 4294901760
    %1527 = vmatmul.mubr.f32.gmra.mrb[0].mxu0 %v1526
    %v1528 = vpop.f32.mrb[0].mxu0
    %v1529 = vadd.f32 %v1262, %v1528
    %v1530 = vpop.f32.mrb[0].mxu0
    %v1531 = vadd.f32 %v1262, %v1530
    %1532 = vdwg.mxu0
    %v1533 = vand.u32 %v1160, 4294901760
    %v1534 = vsub.f32 %v1160, %v1533
    %v1535 = vand.u32 %v1534, 4294901760
    %v1536 = vsub.f32 %v1534, %v1535
    %v1537 = vand.u32 %v1536, 4294901760
    %1538 = vmatprep.subr.mxu0 %v1537
    %v1539 = vand.u32 %v1159, 4294901760
    %v1540 = vsub.f32 %v1159, %v1539
    %v1541 = vand.u32 %v1540, 4294901760
    %v1542 = vsub.f32 %v1540, %v1541
    %v1543 = vand.u32 %v1542, 4294901760
    %1544 = vmatpush1.msra.mxu0 %v1543
    %v1545 = vand.u32 %v1162, 4294901760
    %v1546 = vsub.f32 %v1162, %v1545
    %v1547 = vand.u32 %v1546, 4294901760
    %v1548 = vsub.f32 %v1546, %v1547
    %v1549 = vand.u32 %v1548, 4294901760
    %1550 = vmatprep.subr.mxu0 %v1549
    %v1551 = vand.u32 %v1161, 4294901760
    %v1552 = vsub.f32 %v1161, %v1551
    %v1553 = vand.u32 %v1552, 4294901760
    %v1554 = vsub.f32 %v1552, %v1553
    %v1555 = vand.u32 %v1554, 4294901760
    %1556 = vmatpush1.msra.mxu0 %v1555
    %v1557 = vand.u32 %v1164, 4294901760
    %v1558 = vsub.f32 %v1164, %v1557
    %v1559 = vand.u32 %v1558, 4294901760
    %v1560 = vsub.f32 %v1558, %v1559
    %v1561 = vand.u32 %v1560, 4294901760
    %1562 = vmatprep.subr.mxu0 %v1561
    %v1563 = vand.u32 %v1163, 4294901760
    %v1564 = vsub.f32 %v1163, %v1563
    %v1565 = vand.u32 %v1564, 4294901760
    %v1566 = vsub.f32 %v1564, %v1565
    %v1567 = vand.u32 %v1566, 4294901760
    %1568 = vmatpush1.msra.mxu0 %v1567
    %v1569 = vand.u32 %v1166, 4294901760
    %v1570 = vsub.f32 %v1166, %v1569
    %v1571 = vand.u32 %v1570, 4294901760
    %v1572 = vsub.f32 %v1570, %v1571
    %v1573 = vand.u32 %v1572, 4294901760
    %1574 = vmatprep.subr.mxu0 %v1573
    %v1575 = vand.u32 %v1165, 4294901760
    %v1576 = vsub.f32 %v1165, %v1575
    %v1577 = vand.u32 %v1576, 4294901760
    %v1578 = vsub.f32 %v1576, %v1577
    %v1579 = vand.u32 %v1578, 4294901760
    %1580 = vmatpush1.msra.mxu0 %v1579
    %v1581 = vand.u32 %v1168, 4294901760
    %v1582 = vsub.f32 %v1168, %v1581
    %v1583 = vand.u32 %v1582, 4294901760
    %v1584 = vsub.f32 %v1582, %v1583
    %v1585 = vand.u32 %v1584, 4294901760
    %1586 = vmatprep.subr.mxu0 %v1585
    %v1587 = vand.u32 %v1167, 4294901760
    %v1588 = vsub.f32 %v1167, %v1587
    %v1589 = vand.u32 %v1588, 4294901760
    %v1590 = vsub.f32 %v1588, %v1589
    %v1591 = vand.u32 %v1590, 4294901760
    %1592 = vmatpush1.msra.mxu0 %v1591
    %v1593 = vand.u32 %v1170, 4294901760
    %v1594 = vsub.f32 %v1170, %v1593
    %v1595 = vand.u32 %v1594, 4294901760
    %v1596 = vsub.f32 %v1594, %v1595
    %v1597 = vand.u32 %v1596, 4294901760
    %1598 = vmatprep.subr.mxu0 %v1597
    %v1599 = vand.u32 %v1169, 4294901760
    %v1600 = vsub.f32 %v1169, %v1599
    %v1601 = vand.u32 %v1600, 4294901760
    %v1602 = vsub.f32 %v1600, %v1601
    %v1603 = vand.u32 %v1602, 4294901760
    %1604 = vmatpush1.msra.mxu0 %v1603
    %v1605 = vand.u32 %v1309, 4294901760
    %v1606 = vsub.f32 %v1309, %v1605
    %v1607 = vand.u32 %v1606, 4294901760
    %v1608 = vsub.f32 %v1606, %v1607
    %v1609 = vand.u32 %v1608, 4294901760
    %1610 = vmatprep.subr.mxu0 %v1609
    %v1611 = vand.u32 %v1306, 4294901760
    %v1612 = vsub.f32 %v1306, %v1611
    %v1613 = vand.u32 %v1612, 4294901760
    %v1614 = vsub.f32 %v1612, %v1613
    %v1615 = vand.u32 %v1614, 4294901760
    %1616 = vmatpush1.msra.mxu0 %v1615
    %1617 = vmatprep.subr.mxu0 0.0
    %1618 = vmatpush1.msra.mxu0 0.0
    %1619 = vmatprep.subr.mxu0 0.0
    %1620 = vmatpush1.msra.mxu0 0.0
    %1621 = vmatprep.subr.mxu0 0.0
    %1622 = vmatpush1.msra.mxu0 0.0
    %1623 = vmatprep.subr.mxu0 0.0
    %1624 = vmatpush1.msra.mxu0 0.0
    %1625 = vmatprep.subr.mxu0 0.0
    %1626 = vmatpush1.msra.mxu0 0.0
    %1627 = vmatprep.subr.mxu0 0.0
    %1628 = vmatpush1.msra.mxu0 0.0
    %1629 = vmatprep.subr.mxu0 0.0
    %1630 = vmatpush1.msra.mxu0 0.0
    %1631 = vmatprep.subr.mxu0 0.0
    %1632 = vmatpush1.msra.mxu0 0.0
    %1633 = vmatprep.subr.mxu0 0.0
    %1634 = vmatpush1.msra.mxu0 0.0
    %1635 = vmatprep.subr.mxu0 0.0
    %1636 = vmatpush1.msra.mxu0 0.0
    %1637 = vmatprep.subr.mxu0 0.0
    %1638 = vmatpush1.msra.mxu0 0.0
    %1639 = vmatprep.subr.mxu0 0.0
    %1640 = vmatpush1.msra.mxu0 0.0
    %1641 = vmatprep.subr.mxu0 0.0
    %1642 = vmatpush1.msra.mxu0 0.0
    %1643 = vmatprep.subr.mxu0 0.0
    %1644 = vmatpush1.msra.mxu0 0.0
    %1645 = vmatprep.subr.mxu0 0.0
    %1646 = vmatpush1.msra.mxu0 0.0
    %1647 = vmatprep.subr.mxu0 0.0
    %1648 = vmatpush1.msra.mxu0 0.0
    %1649 = vmatprep.subr.mxu0 0.0
    %1650 = vmatpush1.msra.mxu0 0.0
    %1651 = vmatprep.subr.mxu0 0.0
    %1652 = vmatpush1.msra.mxu0 0.0
    %1653 = vmatprep.subr.mxu0 0.0
    %1654 = vmatpush1.msra.mxu0 0.0
    %1655 = vmatprep.subr.mxu0 0.0
    %1656 = vmatpush1.msra.mxu0 0.0
    %1657 = vmatprep.subr.mxu0 0.0
    %1658 = vmatpush1.msra.mxu0 0.0
    %1659 = vmatprep.subr.mxu0 0.0
    %1660 = vmatpush1.msra.mxu0 0.0
    %1661 = vmatprep.subr.mxu0 0.0
    %1662 = vmatpush1.msra.mxu0 0.0
    %1663 = vmatprep.subr.mxu0 0.0
    %1664 = vmatpush1.msra.mxu0 0.0
    %1665 = vmatprep.subr.mxu0 0.0
    %1666 = vmatpush1.msra.mxu0 0.0
    %1667 = vmatprep.mubr.f32.mxu0 0.0
    %v1668 = vand.u32 %v1266, 4294901760
    %1669 = vmatmul.mubr.f32.gmra.mrb[0].mxu0 %v1668
    %v1670 = vpop.f32.mrb[0].mxu0
    %v1671 = vadd.f32 %v1397, %v1670
    %v1672 = vpop.f32.mrb[0].mxu0
    %v1673 = vadd.f32 %v1399, %v1672
    %1674 = vmatprep.mubr.f32.mxu0 0.0
    %v1675 = vand.u32 %v1269, 4294901760
    %1676 = vmatmul.mubr.f32.gmra.mrb[0].mxu0 %v1675
    %v1677 = vpop.f32.mrb[0].mxu0
    %v1678 = vadd.f32 %v1408, %v1677
    %v1679 = vpop.f32.mrb[0].mxu0
    %v1680 = vadd.f32 %v1410, %v1679
    %1681 = vmatprep.mubr.f32.mxu0 0.0
    %v1682 = vand.u32 %v1272, 4294901760
    %1683 = vmatmul.mubr.f32.gmra.mrb[0].mxu0 %v1682
    %v1684 = vpop.f32.mrb[0].mxu0
    %v1685 = vadd.f32 %v1419, %v1684
    %v1686 = vpop.f32.mrb[0].mxu0
    %v1687 = vadd.f32 %v1421, %v1686
    %1688 = vmatprep.mubr.f32.mxu0 0.0
    %v1689 = vand.u32 %v1275, 4294901760
    %1690 = vmatmul.mubr.f32.gmra.mrb[0].mxu0 %v1689
    %v1691 = vpop.f32.mrb[0].mxu0
    %v1692 = vadd.f32 %v1430, %v1691
    %v1693 = vpop.f32.mrb[0].mxu0
    %v1694 = vadd.f32 %v1432, %v1693
    %1695 = vmatprep.mubr.f32.mxu0 0.0
    %v1696 = vand.u32 %v1278, 4294901760
    %1697 = vmatmul.mubr.f32.gmra.mrb[0].mxu0 %v1696
    %v1698 = vpop.f32.mrb[0].mxu0
    %v1699 = vadd.f32 %v1441, %v1698
    %v1700 = vpop.f32.mrb[0].mxu0
    %v1701 = vadd.f32 %v1443, %v1700
    %1702 = vmatprep.mubr.f32.mxu0 0.0
    %v1703 = vand.u32 %v1281, 4294901760
    %1704 = vmatmul.mubr.f32.gmra.mrb[0].mxu0 %v1703
    %v1705 = vpop.f32.mrb[0].mxu0
    %v1706 = vadd.f32 %v1452, %v1705
    %v1707 = vpop.f32.mrb[0].mxu0
    %v1708 = vadd.f32 %v1454, %v1707
    %1709 = vmatprep.mubr.f32.mxu0 0.0
    %v1710 = vand.u32 %v1284, 4294901760
    %1711 = vmatmul.mubr.f32.gmra.mrb[0].mxu0 %v1710
    %v1712 = vpop.f32.mrb[0].mxu0
    %v1713 = vadd.f32 %v1463, %v1712
    %v1714 = vpop.f32.mrb[0].mxu0
    %v1715 = vadd.f32 %v1465, %v1714
    %1716 = vmatprep.mubr.f32.mxu0 0.0
    %v1717 = vand.u32 %v1287, 4294901760
    %1718 = vmatmul.mubr.f32.gmra.mrb[0].mxu0 %v1717
    %v1719 = vpop.f32.mrb[0].mxu0
    %v1720 = vadd.f32 %v1474, %v1719
    %v1721 = vpop.f32.mrb[0].mxu0
    %v1722 = vadd.f32 %v1476, %v1721
    %1723 = vmatprep.mubr.f32.mxu0 0.0
    %v1724 = vand.u32 %v1290, 4294901760
    %1725 = vmatmul.mubr.f32.gmra.mrb[0].mxu0 %v1724
    %v1726 = vpop.f32.mrb[0].mxu0
    %v1727 = vadd.f32 %v1485, %v1726
    %v1728 = vpop.f32.mrb[0].mxu0
    %v1729 = vadd.f32 %v1487, %v1728
    %1730 = vmatprep.mubr.f32.mxu0 0.0
    %v1731 = vand.u32 %v1293, 4294901760
    %1732 = vmatmul.mubr.f32.gmra.mrb[0].mxu0 %v1731
    %v1733 = vpop.f32.mrb[0].mxu0
    %v1734 = vadd.f32 %v1496, %v1733
    %v1735 = vpop.f32.mrb[0].mxu0
    %v1736 = vadd.f32 %v1498, %v1735
    %1737 = vmatprep.mubr.f32.mxu0 0.0
    %v1738 = vand.u32 %v1296, 4294901760
    %1739 = vmatmul.mubr.f32.gmra.mrb[0].mxu0 %v1738
    %v1740 = vpop.f32.mrb[0].mxu0
    %v1741 = vadd.f32 %v1507, %v1740
    %v1742 = vpop.f32.mrb[0].mxu0
    %v1743 = vadd.f32 %v1509, %v1742
    %1744 = vmatprep.mubr.f32.mxu0 0.0
    %v1745 = vand.u32 %v1299, 4294901760
    %1746 = vmatmul.mubr.f32.gmra.mrb[0].mxu0 %v1745
    %v1747 = vpop.f32.mrb[0].mxu0
    %v1748 = vadd.f32 %v1518, %v1747
    %v1749 = vpop.f32.mrb[0].mxu0
    %v1750 = vadd.f32 %v1520, %v1749
    %1751 = vmatprep.mubr.f32.mxu0 0.0
    %v1752 = vand.u32 %v1302, 4294901760
    %1753 = vmatmul.mubr.f32.gmra.mrb[0].mxu0 %v1752
    %v1754 = vpop.f32.mrb[0].mxu0
    %v1755 = vadd.f32 %v1529, %v1754
    %v1756 = vpop.f32.mrb[0].mxu0
    %v1757 = vadd.f32 %v1531, %v1756
    %1758 = vdwg.mxu0
    %v1759 = vand.u32 %v1160, 4294901760
    %v1760 = vsub.f32 %v1160, %v1759
    %1761 = vmatprep.subr.mxu0 %v1760
    %v1762 = vand.u32 %v1159, 4294901760
    %v1763 = vsub.f32 %v1159, %v1762
    %1764 = vmatpush1.msra.mxu0 %v1763
    %v1765 = vand.u32 %v1162, 4294901760
    %v1766 = vsub.f32 %v1162, %v1765
    %1767 = vmatprep.subr.mxu0 %v1766
    %v1768 = vand.u32 %v1161, 4294901760
    %v1769 = vsub.f32 %v1161, %v1768
    %1770 = vmatpush1.msra.mxu0 %v1769
    %v1771 = vand.u32 %v1164, 4294901760
    %v1772 = vsub.f32 %v1164, %v1771
    %1773 = vmatprep.subr.mxu0 %v1772
    %v1774 = vand.u32 %v1163, 4294901760
    %v1775 = vsub.f32 %v1163, %v1774
    %1776 = vmatpush1.msra.mxu0 %v1775
    %v1777 = vand.u32 %v1166, 4294901760
    %v1778 = vsub.f32 %v1166, %v1777
    %1779 = vmatprep.subr.mxu0 %v1778
    %v1780 = vand.u32 %v1165, 4294901760
    %v1781 = vsub.f32 %v1165, %v1780
    %1782 = vmatpush1.msra.mxu0 %v1781
    %v1783 = vand.u32 %v1168, 4294901760
    %v1784 = vsub.f32 %v1168, %v1783
    %1785 = vmatprep.subr.mxu0 %v1784
    %v1786 = vand.u32 %v1167, 4294901760
    %v1787 = vsub.f32 %v1167, %v1786
    %1788 = vmatpush1.msra.mxu0 %v1787
    %v1789 = vand.u32 %v1170, 4294901760
    %v1790 = vsub.f32 %v1170, %v1789
    %1791 = vmatprep.subr.mxu0 %v1790
    %v1792 = vand.u32 %v1169, 4294901760
    %v1793 = vsub.f32 %v1169, %v1792
    %1794 = vmatpush1.msra.mxu0 %v1793
    %v1795 = vand.u32 %v1309, 4294901760
    %v1796 = vsub.f32 %v1309, %v1795
    %1797 = vmatprep.subr.mxu0 %v1796
    %v1798 = vand.u32 %v1306, 4294901760
    %v1799 = vsub.f32 %v1306, %v1798
    %1800 = vmatpush1.msra.mxu0 %v1799
    %1801 = vmatprep.subr.mxu0 0.0
    %1802 = vmatpush1.msra.mxu0 0.0
    %1803 = vmatprep.subr.mxu0 0.0
    %1804 = vmatpush1.msra.mxu0 0.0
    %1805 = vmatprep.subr.mxu0 0.0
    %1806 = vmatpush1.msra.mxu0 0.0
    %1807 = vmatprep.subr.mxu0 0.0
    %1808 = vmatpush1.msra.mxu0 0.0
    %1809 = vmatprep.subr.mxu0 0.0
    %1810 = vmatpush1.msra.mxu0 0.0
    %1811 = vmatprep.subr.mxu0 0.0
    %1812 = vmatpush1.msra.mxu0 0.0
    %1813 = vmatprep.subr.mxu0 0.0
    %1814 = vmatpush1.msra.mxu0 0.0
    %1815 = vmatprep.subr.mxu0 0.0
    %1816 = vmatpush1.msra.mxu0 0.0
    %1817 = vmatprep.subr.mxu0 0.0
    %1818 = vmatpush1.msra.mxu0 0.0
    %1819 = vmatprep.subr.mxu0 0.0
    %1820 = vmatpush1.msra.mxu0 0.0
    %1821 = vmatprep.subr.mxu0 0.0
    %1822 = vmatpush1.msra.mxu0 0.0
    %1823 = vmatprep.subr.mxu0 0.0
    %1824 = vmatpush1.msra.mxu0 0.0
    %1825 = vmatprep.subr.mxu0 0.0
    %1826 = vmatpush1.msra.mxu0 0.0
    %1827 = vmatprep.subr.mxu0 0.0
    %1828 = vmatpush1.msra.mxu0 0.0
    %1829 = vmatprep.subr.mxu0 0.0
    %1830 = vmatpush1.msra.mxu0 0.0
    %1831 = vmatprep.subr.mxu0 0.0
    %1832 = vmatpush1.msra.mxu0 0.0
    %1833 = vmatprep.subr.mxu0 0.0
    %1834 = vmatpush1.msra.mxu0 0.0
    %1835 = vmatprep.subr.mxu0 0.0
    %1836 = vmatpush1.msra.mxu0 0.0
    %1837 = vmatprep.subr.mxu0 0.0
    %1838 = vmatpush1.msra.mxu0 0.0
    %1839 = vmatprep.subr.mxu0 0.0
    %1840 = vmatpush1.msra.mxu0 0.0
    %1841 = vmatprep.subr.mxu0 0.0
    %1842 = vmatpush1.msra.mxu0 0.0
    %1843 = vmatprep.subr.mxu0 0.0
    %1844 = vmatpush1.msra.mxu0 0.0
    %1845 = vmatprep.subr.mxu0 0.0
    %1846 = vmatpush1.msra.mxu0 0.0
    %1847 = vmatprep.subr.mxu0 0.0
    %1848 = vmatpush1.msra.mxu0 0.0
    %1849 = vmatprep.subr.mxu0 0.0
    %1850 = vmatpush1.msra.mxu0 0.0
    %1851 = vmatprep.mubr.f32.mxu0 0.0
    %v1852 = vand.u32 %v1266, 4294901760
    %v1853 = vsub.f32 %v1266, %v1852
    %1854 = vmatmul.mubr.f32.gmra.mrb[0].mxu0 %v1853
    %v1855 = vpop.f32.mrb[0].mxu0
    %v1856 = vadd.f32 %v1671, %v1855
    %v1857 = vpop.f32.mrb[0].mxu0
    %v1858 = vadd.f32 %v1673, %v1857
    %1859 = vmatprep.mubr.f32.mxu0 0.0
    %v1860 = vand.u32 %v1269, 4294901760
    %v1861 = vsub.f32 %v1269, %v1860
    %1862 = vmatmul.mubr.f32.gmra.mrb[0].mxu0 %v1861
    %v1863 = vpop.f32.mrb[0].mxu0
    %v1864 = vadd.f32 %v1678, %v1863
    %v1865 = vpop.f32.mrb[0].mxu0
    %v1866 = vadd.f32 %v1680, %v1865
    %1867 = vmatprep.mubr.f32.mxu0 0.0
    %v1868 = vand.u32 %v1272, 4294901760
    %v1869 = vsub.f32 %v1272, %v1868
    %1870 = vmatmul.mubr.f32.gmra.mrb[0].mxu0 %v1869
    %v1871 = vpop.f32.mrb[0].mxu0
    %v1872 = vadd.f32 %v1685, %v1871
    %v1873 = vpop.f32.mrb[0].mxu0
    %v1874 = vadd.f32 %v1687, %v1873
    %1875 = vmatprep.mubr.f32.mxu0 0.0
    %v1876 = vand.u32 %v1275, 4294901760
    %v1877 = vsub.f32 %v1275, %v1876
    %1878 = vmatmul.mubr.f32.gmra.mrb[0].mxu0 %v1877
    %v1879 = vpop.f32.mrb[0].mxu0
    %v1880 = vadd.f32 %v1692, %v1879
    %v1881 = vpop.f32.mrb[0].mxu0
    %v1882 = vadd.f32 %v1694, %v1881
    %1883 = vmatprep.mubr.f32.mxu0 0.0
    %v1884 = vand.u32 %v1278, 4294901760
    %v1885 = vsub.f32 %v1278, %v1884
    %1886 = vmatmul.mubr.f32.gmra.mrb[0].mxu0 %v1885
    %v1887 = vpop.f32.mrb[0].mxu0
    %v1888 = vadd.f32 %v1699, %v1887
    %v1889 = vpop.f32.mrb[0].mxu0
    %v1890 = vadd.f32 %v1701, %v1889
    %1891 = vmatprep.mubr.f32.mxu0 0.0
    %v1892 = vand.u32 %v1281, 4294901760
    %v1893 = vsub.f32 %v1281, %v1892
    %1894 = vmatmul.mubr.f32.gmra.mrb[0].mxu0 %v1893
    %v1895 = vpop.f32.mrb[0].mxu0
    %v1896 = vadd.f32 %v1706, %v1895
    %v1897 = vpop.f32.mrb[0].mxu0
    %v1898 = vadd.f32 %v1708, %v1897
    %1899 = vmatprep.mubr.f32.mxu0 0.0
    %v1900 = vand.u32 %v1284, 4294901760
    %v1901 = vsub.f32 %v1284, %v1900
    %1902 = vmatmul.mubr.f32.gmra.mrb[0].mxu0 %v1901
    %v1903 = vpop.f32.mrb[0].mxu0
    %v1904 = vadd.f32 %v1713, %v1903
    %v1905 = vpop.f32.mrb[0].mxu0
    %v1906 = vadd.f32 %v1715, %v1905
    %1907 = vmatprep.mubr.f32.mxu0 0.0
    %v1908 = vand.u32 %v1287, 4294901760
    %v1909 = vsub.f32 %v1287, %v1908
    %1910 = vmatmul.mubr.f32.gmra.mrb[0].mxu0 %v1909
    %v1911 = vpop.f32.mrb[0].mxu0
    %v1912 = vadd.f32 %v1720, %v1911
    %v1913 = vpop.f32.mrb[0].mxu0
    %v1914 = vadd.f32 %v1722, %v1913
    %1915 = vmatprep.mubr.f32.mxu0 0.0
    %v1916 = vand.u32 %v1290, 4294901760
    %v1917 = vsub.f32 %v1290, %v1916
    %1918 = vmatmul.mubr.f32.gmra.mrb[0].mxu0 %v1917
    %v1919 = vpop.f32.mrb[0].mxu0
    %v1920 = vadd.f32 %v1727, %v1919
    %v1921 = vpop.f32.mrb[0].mxu0
    %v1922 = vadd.f32 %v1729, %v1921
    %1923 = vmatprep.mubr.f32.mxu0 0.0
    %v1924 = vand.u32 %v1293, 4294901760
    %v1925 = vsub.f32 %v1293, %v1924
    %1926 = vmatmul.mubr.f32.gmra.mrb[0].mxu0 %v1925
    %v1927 = vpop.f32.mrb[0].mxu0
    %v1928 = vadd.f32 %v1734, %v1927
    %v1929 = vpop.f32.mrb[0].mxu0
    %v1930 = vadd.f32 %v1736, %v1929
    %1931 = vmatprep.mubr.f32.mxu0 0.0
    %v1932 = vand.u32 %v1296, 4294901760
    %v1933 = vsub.f32 %v1296, %v1932
    %1934 = vmatmul.mubr.f32.gmra.mrb[0].mxu0 %v1933
    %v1935 = vpop.f32.mrb[0].mxu0
    %v1936 = vadd.f32 %v1741, %v1935
    %v1937 = vpop.f32.mrb[0].mxu0
    %v1938 = vadd.f32 %v1743, %v1937
    %1939 = vmatprep.mubr.f32.mxu0 0.0
    %v1940 = vand.u32 %v1299, 4294901760
    %v1941 = vsub.f32 %v1299, %v1940
    %1942 = vmatmul.mubr.f32.gmra.mrb[0].mxu0 %v1941
    %v1943 = vpop.f32.mrb[0].mxu0
    %v1944 = vadd.f32 %v1748, %v1943
    %v1945 = vpop.f32.mrb[0].mxu0
    %v1946 = vadd.f32 %v1750, %v1945
    %1947 = vmatprep.mubr.f32.mxu0 0.0
    %v1948 = vand.u32 %v1302, 4294901760
    %v1949 = vsub.f32 %v1302, %v1948
    %1950 = vmatmul.mubr.f32.gmra.mrb[0].mxu0 %v1949
    %v1951 = vpop.f32.mrb[0].mxu0
    %v1952 = vadd.f32 %v1755, %v1951
    %v1953 = vpop.f32.mrb[0].mxu0
    %v1954 = vadd.f32 %v1757, %v1953
    %1955 = vdwg.mxu0
    %v1956 = vand.u32 %v1160, 4294901760
    %1957 = vmatprep.subr.mxu0 %v1956
    %v1958 = vand.u32 %v1159, 4294901760
    %1959 = vmatpush1.msra.mxu0 %v1958
    %v1960 = vand.u32 %v1162, 4294901760
    %1961 = vmatprep.subr.mxu0 %v1960
    %v1962 = vand.u32 %v1161, 4294901760
    %1963 = vmatpush1.msra.mxu0 %v1962
    %v1964 = vand.u32 %v1164, 4294901760
    %1965 = vmatprep.subr.mxu0 %v1964
    %v1966 = vand.u32 %v1163, 4294901760
    %1967 = vmatpush1.msra.mxu0 %v1966
    %v1968 = vand.u32 %v1166, 4294901760
    %1969 = vmatprep.subr.mxu0 %v1968
    %v1970 = vand.u32 %v1165, 4294901760
    %1971 = vmatpush1.msra.mxu0 %v1970
    %v1972 = vand.u32 %v1168, 4294901760
    %1973 = vmatprep.subr.mxu0 %v1972
    %v1974 = vand.u32 %v1167, 4294901760
    %1975 = vmatpush1.msra.mxu0 %v1974
    %v1976 = vand.u32 %v1170, 4294901760
    %1977 = vmatprep.subr.mxu0 %v1976
    %v1978 = vand.u32 %v1169, 4294901760
    %1979 = vmatpush1.msra.mxu0 %v1978
    %v1980 = vand.u32 %v1309, 4294901760
    %1981 = vmatprep.subr.mxu0 %v1980
    %v1982 = vand.u32 %v1306, 4294901760
    %1983 = vmatpush1.msra.mxu0 %v1982
    %1984 = vmatprep.subr.mxu0 0.0
    %1985 = vmatpush1.msra.mxu0 0.0
    %1986 = vmatprep.subr.mxu0 0.0
    %1987 = vmatpush1.msra.mxu0 0.0
    %1988 = vmatprep.subr.mxu0 0.0
    %1989 = vmatpush1.msra.mxu0 0.0
    %1990 = vmatprep.subr.mxu0 0.0
    %1991 = vmatpush1.msra.mxu0 0.0
    %1992 = vmatprep.subr.mxu0 0.0
    %1993 = vmatpush1.msra.mxu0 0.0
    %1994 = vmatprep.subr.mxu0 0.0
    %1995 = vmatpush1.msra.mxu0 0.0
    %1996 = vmatprep.subr.mxu0 0.0
    %1997 = vmatpush1.msra.mxu0 0.0
    %1998 = vmatprep.subr.mxu0 0.0
    %1999 = vmatpush1.msra.mxu0 0.0
    %2000 = vmatprep.subr.mxu0 0.0
    %2001 = vmatpush1.msra.mxu0 0.0
    %2002 = vmatprep.subr.mxu0 0.0
    %2003 = vmatpush1.msra.mxu0 0.0
    %2004 = vmatprep.subr.mxu0 0.0
    %2005 = vmatpush1.msra.mxu0 0.0
    %2006 = vmatprep.subr.mxu0 0.0
    %2007 = vmatpush1.msra.mxu0 0.0
    %2008 = vmatprep.subr.mxu0 0.0
    %2009 = vmatpush1.msra.mxu0 0.0
    %2010 = vmatprep.subr.mxu0 0.0
    %2011 = vmatpush1.msra.mxu0 0.0
    %2012 = vmatprep.subr.mxu0 0.0
    %2013 = vmatpush1.msra.mxu0 0.0
    %2014 = vmatprep.subr.mxu0 0.0
    %2015 = vmatpush1.msra.mxu0 0.0
    %2016 = vmatprep.subr.mxu0 0.0
    %2017 = vmatpush1.msra.mxu0 0.0
    %2018 = vmatprep.subr.mxu0 0.0
    %2019 = vmatpush1.msra.mxu0 0.0
    %2020 = vmatprep.subr.mxu0 0.0
    %2021 = vmatpush1.msra.mxu0 0.0
    %2022 = vmatprep.subr.mxu0 0.0
    %2023 = vmatpush1.msra.mxu0 0.0
    %2024 = vmatprep.subr.mxu0 0.0
    %2025 = vmatpush1.msra.mxu0 0.0
    %2026 = vmatprep.subr.mxu0 0.0
    %2027 = vmatpush1.msra.mxu0 0.0
    %2028 = vmatprep.subr.mxu0 0.0
    %2029 = vmatpush1.msra.mxu0 0.0
    %2030 = vmatprep.subr.mxu0 0.0
    %2031 = vmatpush1.msra.mxu0 0.0
    %2032 = vmatprep.subr.mxu0 0.0
    %2033 = vmatpush1.msra.mxu0 0.0
    %2034 = vmatprep.mubr.f32.mxu0 0.0
    %v2035 = vand.u32 %v1266, 4294901760
    %v2036 = vsub.f32 %v1266, %v2035
    %v2037 = vand.u32 %v2036, 4294901760
    %2038 = vmatmul.mubr.f32.gmra.mrb[0].mxu0 %v2037
    %v2039 = vpop.f32.mrb[0].mxu0
    %v2040 = vadd.f32 %v1856, %v2039
    %v2041 = vpop.f32.mrb[0].mxu0
    %v2042 = vadd.f32 %v1858, %v2041
    %2043 = vmatprep.mubr.f32.mxu0 0.0
    %v2044 = vand.u32 %v1269, 4294901760
    %v2045 = vsub.f32 %v1269, %v2044
    %v2046 = vand.u32 %v2045, 4294901760
    %2047 = vmatmul.mubr.f32.gmra.mrb[0].mxu0 %v2046
    %v2048 = vpop.f32.mrb[0].mxu0
    %v2049 = vadd.f32 %v1864, %v2048
    %v2050 = vpop.f32.mrb[0].mxu0
    %v2051 = vadd.f32 %v1866, %v2050
    %2052 = vmatprep.mubr.f32.mxu0 0.0
    %v2053 = vand.u32 %v1272, 4294901760
    %v2054 = vsub.f32 %v1272, %v2053
    %v2055 = vand.u32 %v2054, 4294901760
    %2056 = vmatmul.mubr.f32.gmra.mrb[0].mxu0 %v2055
    %v2057 = vpop.f32.mrb[0].mxu0
    %v2058 = vadd.f32 %v1872, %v2057
    %v2059 = vpop.f32.mrb[0].mxu0
    %v2060 = vadd.f32 %v1874, %v2059
    %2061 = vmatprep.mubr.f32.mxu0 0.0
    %v2062 = vand.u32 %v1275, 4294901760
    %v2063 = vsub.f32 %v1275, %v2062
    %v2064 = vand.u32 %v2063, 4294901760
    %2065 = vmatmul.mubr.f32.gmra.mrb[0].mxu0 %v2064
    %v2066 = vpop.f32.mrb[0].mxu0
    %v2067 = vadd.f32 %v1880, %v2066
    %v2068 = vpop.f32.mrb[0].mxu0
    %v2069 = vadd.f32 %v1882, %v2068
    %2070 = vmatprep.mubr.f32.mxu0 0.0
    %v2071 = vand.u32 %v1278, 4294901760
    %v2072 = vsub.f32 %v1278, %v2071
    %v2073 = vand.u32 %v2072, 4294901760
    %2074 = vmatmul.mubr.f32.gmra.mrb[0].mxu0 %v2073
    %v2075 = vpop.f32.mrb[0].mxu0
    %v2076 = vadd.f32 %v1888, %v2075
    %v2077 = vpop.f32.mrb[0].mxu0
    %v2078 = vadd.f32 %v1890, %v2077
    %2079 = vmatprep.mubr.f32.mxu0 0.0
    %v2080 = vand.u32 %v1281, 4294901760
    %v2081 = vsub.f32 %v1281, %v2080
    %v2082 = vand.u32 %v2081, 4294901760
    %2083 = vmatmul.mubr.f32.gmra.mrb[0].mxu0 %v2082
    %v2084 = vpop.f32.mrb[0].mxu0
    %v2085 = vadd.f32 %v1896, %v2084
    %v2086 = vpop.f32.mrb[0].mxu0
    %v2087 = vadd.f32 %v1898, %v2086
    %2088 = vmatprep.mubr.f32.mxu0 0.0
    %v2089 = vand.u32 %v1284, 4294901760
    %v2090 = vsub.f32 %v1284, %v2089
    %v2091 = vand.u32 %v2090, 4294901760
    %2092 = vmatmul.mubr.f32.gmra.mrb[0].mxu0 %v2091
    %v2093 = vpop.f32.mrb[0].mxu0
    %v2094 = vadd.f32 %v1904, %v2093
    %v2095 = vpop.f32.mrb[0].mxu0
    %v2096 = vadd.f32 %v1906, %v2095
    %2097 = vmatprep.mubr.f32.mxu0 0.0
    %v2098 = vand.u32 %v1287, 4294901760
    %v2099 = vsub.f32 %v1287, %v2098
    %v2100 = vand.u32 %v2099, 4294901760
    %2101 = vmatmul.mubr.f32.gmra.mrb[0].mxu0 %v2100
    %v2102 = vpop.f32.mrb[0].mxu0
    %v2103 = vadd.f32 %v1912, %v2102
    %v2104 = vpop.f32.mrb[0].mxu0
    %v2105 = vadd.f32 %v1914, %v2104
    %2106 = vmatprep.mubr.f32.mxu0 0.0
    %v2107 = vand.u32 %v1290, 4294901760
    %v2108 = vsub.f32 %v1290, %v2107
    %v2109 = vand.u32 %v2108, 4294901760
    %2110 = vmatmul.mubr.f32.gmra.mrb[0].mxu0 %v2109
    %v2111 = vpop.f32.mrb[0].mxu0
    %v2112 = vadd.f32 %v1920, %v2111
    %v2113 = vpop.f32.mrb[0].mxu0
    %v2114 = vadd.f32 %v1922, %v2113
    %2115 = vmatprep.mubr.f32.mxu0 0.0
    %v2116 = vand.u32 %v1293, 4294901760
    %v2117 = vsub.f32 %v1293, %v2116
    %v2118 = vand.u32 %v2117, 4294901760
    %2119 = vmatmul.mubr.f32.gmra.mrb[0].mxu0 %v2118
    %v2120 = vpop.f32.mrb[0].mxu0
    %v2121 = vadd.f32 %v1928, %v2120
    %v2122 = vpop.f32.mrb[0].mxu0
    %v2123 = vadd.f32 %v1930, %v2122
    %2124 = vmatprep.mubr.f32.mxu0 0.0
    %v2125 = vand.u32 %v1296, 4294901760
    %v2126 = vsub.f32 %v1296, %v2125
    %v2127 = vand.u32 %v2126, 4294901760
    %2128 = vmatmul.mubr.f32.gmra.mrb[0].mxu0 %v2127
    %v2129 = vpop.f32.mrb[0].mxu0
    %v2130 = vadd.f32 %v1936, %v2129
    %v2131 = vpop.f32.mrb[0].mxu0
    %v2132 = vadd.f32 %v1938, %v2131
    %2133 = vmatprep.mubr.f32.mxu0 0.0
    %v2134 = vand.u32 %v1299, 4294901760
    %v2135 = vsub.f32 %v1299, %v2134
    %v2136 = vand.u32 %v2135, 4294901760
    %2137 = vmatmul.mubr.f32.gmra.mrb[0].mxu0 %v2136
    %v2138 = vpop.f32.mrb[0].mxu0
    %v2139 = vadd.f32 %v1944, %v2138
    %v2140 = vpop.f32.mrb[0].mxu0
    %v2141 = vadd.f32 %v1946, %v2140
    %2142 = vmatprep.mubr.f32.mxu0 0.0
    %v2143 = vand.u32 %v1302, 4294901760
    %v2144 = vsub.f32 %v1302, %v2143
    %v2145 = vand.u32 %v2144, 4294901760
    %2146 = vmatmul.mubr.f32.gmra.mrb[0].mxu0 %v2145
    %v2147 = vpop.f32.mrb[0].mxu0
    %v2148 = vadd.f32 %v1952, %v2147
    %v2149 = vpop.f32.mrb[0].mxu0
    %v2150 = vadd.f32 %v1954, %v2149
    %2151 = vdwg.mxu0
    %v2152 = vand.u32 %v1160, 4294901760
    %v2153 = vsub.f32 %v1160, %v2152
    %v2154 = vand.u32 %v2153, 4294901760
    %2155 = vmatprep.subr.mxu0 %v2154
    %v2156 = vand.u32 %v1159, 4294901760
    %v2157 = vsub.f32 %v1159, %v2156
    %v2158 = vand.u32 %v2157, 4294901760
    %2159 = vmatpush1.msra.mxu0 %v2158
    %v2160 = vand.u32 %v1162, 4294901760
    %v2161 = vsub.f32 %v1162, %v2160
    %v2162 = vand.u32 %v2161, 4294901760
    %2163 = vmatprep.subr.mxu0 %v2162
    %v2164 = vand.u32 %v1161, 4294901760
    %v2165 = vsub.f32 %v1161, %v2164
    %v2166 = vand.u32 %v2165, 4294901760
    %2167 = vmatpush1.msra.mxu0 %v2166
    %v2168 = vand.u32 %v1164, 4294901760
    %v2169 = vsub.f32 %v1164, %v2168
    %v2170 = vand.u32 %v2169, 4294901760
    %2171 = vmatprep.subr.mxu0 %v2170
    %v2172 = vand.u32 %v1163, 4294901760
    %v2173 = vsub.f32 %v1163, %v2172
    %v2174 = vand.u32 %v2173, 4294901760
    %2175 = vmatpush1.msra.mxu0 %v2174
    %v2176 = vand.u32 %v1166, 4294901760
    %v2177 = vsub.f32 %v1166, %v2176
    %v2178 = vand.u32 %v2177, 4294901760
    %2179 = vmatprep.subr.mxu0 %v2178
    %v2180 = vand.u32 %v1165, 4294901760
    %v2181 = vsub.f32 %v1165, %v2180
    %v2182 = vand.u32 %v2181, 4294901760
    %2183 = vmatpush1.msra.mxu0 %v2182
    %v2184 = vand.u32 %v1168, 4294901760
    %v2185 = vsub.f32 %v1168, %v2184
    %v2186 = vand.u32 %v2185, 4294901760
    %2187 = vmatprep.subr.mxu0 %v2186
    %v2188 = vand.u32 %v1167, 4294901760
    %v2189 = vsub.f32 %v1167, %v2188
    %v2190 = vand.u32 %v2189, 4294901760
    %2191 = vmatpush1.msra.mxu0 %v2190
    %v2192 = vand.u32 %v1170, 4294901760
    %v2193 = vsub.f32 %v1170, %v2192
    %v2194 = vand.u32 %v2193, 4294901760
    %2195 = vmatprep.subr.mxu0 %v2194
    %v2196 = vand.u32 %v1169, 4294901760
    %v2197 = vsub.f32 %v1169, %v2196
    %v2198 = vand.u32 %v2197, 4294901760
    %2199 = vmatpush1.msra.mxu0 %v2198
    %v2200 = vand.u32 %v1309, 4294901760
    %v2201 = vsub.f32 %v1309, %v2200
    %v2202 = vand.u32 %v2201, 4294901760
    %2203 = vmatprep.subr.mxu0 %v2202
    %v2204 = vand.u32 %v1306, 4294901760
    %v2205 = vsub.f32 %v1306, %v2204
    %v2206 = vand.u32 %v2205, 4294901760
    %2207 = vmatpush1.msra.mxu0 %v2206
    %2208 = vmatprep.subr.mxu0 0.0
    %2209 = vmatpush1.msra.mxu0 0.0
    %2210 = vmatprep.subr.mxu0 0.0
    %2211 = vmatpush1.msra.mxu0 0.0
    %2212 = vmatprep.subr.mxu0 0.0
    %2213 = vmatpush1.msra.mxu0 0.0
    %2214 = vmatprep.subr.mxu0 0.0
    %2215 = vmatpush1.msra.mxu0 0.0
    %2216 = vmatprep.subr.mxu0 0.0
    %2217 = vmatpush1.msra.mxu0 0.0
    %2218 = vmatprep.subr.mxu0 0.0
    %2219 = vmatpush1.msra.mxu0 0.0
    %2220 = vmatprep.subr.mxu0 0.0
    %2221 = vmatpush1.msra.mxu0 0.0
    %2222 = vmatprep.subr.mxu0 0.0
    %2223 = vmatpush1.msra.mxu0 0.0
    %2224 = vmatprep.subr.mxu0 0.0
    %2225 = vmatpush1.msra.mxu0 0.0
    %2226 = vmatprep.subr.mxu0 0.0
    %2227 = vmatpush1.msra.mxu0 0.0
    %2228 = vmatprep.subr.mxu0 0.0
    %2229 = vmatpush1.msra.mxu0 0.0
    %2230 = vmatprep.subr.mxu0 0.0
    %2231 = vmatpush1.msra.mxu0 0.0
    %2232 = vmatprep.subr.mxu0 0.0
    %2233 = vmatpush1.msra.mxu0 0.0
    %2234 = vmatprep.subr.mxu0 0.0
    %2235 = vmatpush1.msra.mxu0 0.0
    %2236 = vmatprep.subr.mxu0 0.0
    %2237 = vmatpush1.msra.mxu0 0.0
    %2238 = vmatprep.subr.mxu0 0.0
    %2239 = vmatpush1.msra.mxu0 0.0
    %2240 = vmatprep.subr.mxu0 0.0
    %2241 = vmatpush1.msra.mxu0 0.0
    %2242 = vmatprep.subr.mxu0 0.0
    %2243 = vmatpush1.msra.mxu0 0.0
    %2244 = vmatprep.subr.mxu0 0.0
    %2245 = vmatpush1.msra.mxu0 0.0
    %2246 = vmatprep.subr.mxu0 0.0
    %2247 = vmatpush1.msra.mxu0 0.0
    %2248 = vmatprep.subr.mxu0 0.0
    %2249 = vmatpush1.msra.mxu0 0.0
    %2250 = vmatprep.subr.mxu0 0.0
    %2251 = vmatpush1.msra.mxu0 0.0
    %2252 = vmatprep.subr.mxu0 0.0
    %2253 = vmatpush1.msra.mxu0 0.0
    %2254 = vmatprep.subr.mxu0 0.0
    %2255 = vmatpush1.msra.mxu0 0.0
    %2256 = vmatprep.subr.mxu0 0.0
    %2257 = vmatpush1.msra.mxu0 0.0
    %2258 = vmatprep.mubr.f32.mxu0 0.0
    %v2259 = vand.u32 %v1266, 4294901760
    %2260 = vmatmul.mubr.f32.gmra.mrb[0].mxu0 %v2259
    %v2261 = vpop.f32.mrb[0].mxu0
    %v2262 = vadd.f32 %v2040, %v2261
    %v2263 = vpop.f32.mrb[0].mxu0
    %v2264 = vadd.f32 %v2042, %v2263
    %2265 = vmatprep.mubr.f32.mxu0 0.0
    %v2266 = vand.u32 %v1269, 4294901760
    %2267 = vmatmul.mubr.f32.gmra.mrb[0].mxu0 %v2266
    %v2268 = vpop.f32.mrb[0].mxu0
    %v2269 = vadd.f32 %v2049, %v2268
    %v2270 = vpop.f32.mrb[0].mxu0
    %v2271 = vadd.f32 %v2051, %v2270
    %2272 = vmatprep.mubr.f32.mxu0 0.0
    %v2273 = vand.u32 %v1272, 4294901760
    %2274 = vmatmul.mubr.f32.gmra.mrb[0].mxu0 %v2273
    %v2275 = vpop.f32.mrb[0].mxu0
    %v2276 = vadd.f32 %v2058, %v2275
    %v2277 = vpop.f32.mrb[0].mxu0
    %v2278 = vadd.f32 %v2060, %v2277
    %2279 = vmatprep.mubr.f32.mxu0 0.0
    %v2280 = vand.u32 %v1275, 4294901760
    %2281 = vmatmul.mubr.f32.gmra.mrb[0].mxu0 %v2280
    %v2282 = vpop.f32.mrb[0].mxu0
    %v2283 = vadd.f32 %v2067, %v2282
    %v2284 = vpop.f32.mrb[0].mxu0
    %v2285 = vadd.f32 %v2069, %v2284
    %2286 = vmatprep.mubr.f32.mxu0 0.0
    %v2287 = vand.u32 %v1278, 4294901760
    %2288 = vmatmul.mubr.f32.gmra.mrb[0].mxu0 %v2287
    %v2289 = vpop.f32.mrb[0].mxu0
    %v2290 = vadd.f32 %v2076, %v2289
    %v2291 = vpop.f32.mrb[0].mxu0
    %v2292 = vadd.f32 %v2078, %v2291
    %2293 = vmatprep.mubr.f32.mxu0 0.0
    %v2294 = vand.u32 %v1281, 4294901760
    %2295 = vmatmul.mubr.f32.gmra.mrb[0].mxu0 %v2294
    %v2296 = vpop.f32.mrb[0].mxu0
    %v2297 = vadd.f32 %v2085, %v2296
    %v2298 = vpop.f32.mrb[0].mxu0
    %v2299 = vadd.f32 %v2087, %v2298
    %2300 = vmatprep.mubr.f32.mxu0 0.0
    %v2301 = vand.u32 %v1284, 4294901760
    %2302 = vmatmul.mubr.f32.gmra.mrb[0].mxu0 %v2301
    %v2303 = vpop.f32.mrb[0].mxu0
    %v2304 = vadd.f32 %v2094, %v2303
    %v2305 = vpop.f32.mrb[0].mxu0
    %v2306 = vadd.f32 %v2096, %v2305
    %2307 = vmatprep.mubr.f32.mxu0 0.0
    %v2308 = vand.u32 %v1287, 4294901760
    %2309 = vmatmul.mubr.f32.gmra.mrb[0].mxu0 %v2308
    %v2310 = vpop.f32.mrb[0].mxu0
    %v2311 = vadd.f32 %v2103, %v2310
    %v2312 = vpop.f32.mrb[0].mxu0
    %v2313 = vadd.f32 %v2105, %v2312
    %2314 = vmatprep.mubr.f32.mxu0 0.0
    %v2315 = vand.u32 %v1290, 4294901760
    %2316 = vmatmul.mubr.f32.gmra.mrb[0].mxu0 %v2315
    %v2317 = vpop.f32.mrb[0].mxu0
    %v2318 = vadd.f32 %v2112, %v2317
    %v2319 = vpop.f32.mrb[0].mxu0
    %v2320 = vadd.f32 %v2114, %v2319
    %2321 = vmatprep.mubr.f32.mxu0 0.0
    %v2322 = vand.u32 %v1293, 4294901760
    %2323 = vmatmul.mubr.f32.gmra.mrb[0].mxu0 %v2322
    %v2324 = vpop.f32.mrb[0].mxu0
    %v2325 = vadd.f32 %v2121, %v2324
    %v2326 = vpop.f32.mrb[0].mxu0
    %v2327 = vadd.f32 %v2123, %v2326
    %2328 = vmatprep.mubr.f32.mxu0 0.0
    %v2329 = vand.u32 %v1296, 4294901760
    %2330 = vmatmul.mubr.f32.gmra.mrb[0].mxu0 %v2329
    %v2331 = vpop.f32.mrb[0].mxu0
    %v2332 = vadd.f32 %v2130, %v2331
    %v2333 = vpop.f32.mrb[0].mxu0
    %v2334 = vadd.f32 %v2132, %v2333
    %2335 = vmatprep.mubr.f32.mxu0 0.0
    %v2336 = vand.u32 %v1299, 4294901760
    %2337 = vmatmul.mubr.f32.gmra.mrb[0].mxu0 %v2336
    %v2338 = vpop.f32.mrb[0].mxu0
    %v2339 = vadd.f32 %v2139, %v2338
    %v2340 = vpop.f32.mrb[0].mxu0
    %v2341 = vadd.f32 %v2141, %v2340
    %2342 = vmatprep.mubr.f32.mxu0 0.0
    %v2343 = vand.u32 %v1302, 4294901760
    %2344 = vmatmul.mubr.f32.gmra.mrb[0].mxu0 %v2343
    %v2345 = vpop.f32.mrb[0].mxu0
    %v2346 = vadd.f32 %v2148, %v2345
    %v2347 = vpop.f32.mrb[0].mxu0
    %v2348 = vadd.f32 %v2150, %v2347
    %2349 = vdwg.mxu0
    %v2350 = vand.u32 %v1160, 4294901760
    %2351 = vmatprep.subr.mxu0 %v2350
    %v2352 = vand.u32 %v1159, 4294901760
    %2353 = vmatpush1.msra.mxu0 %v2352
    %v2354 = vand.u32 %v1162, 4294901760
    %2355 = vmatprep.subr.mxu0 %v2354
    %v2356 = vand.u32 %v1161, 4294901760
    %2357 = vmatpush1.msra.mxu0 %v2356
    %v2358 = vand.u32 %v1164, 4294901760
    %2359 = vmatprep.subr.mxu0 %v2358
    %v2360 = vand.u32 %v1163, 4294901760
    %2361 = vmatpush1.msra.mxu0 %v2360
    %v2362 = vand.u32 %v1166, 4294901760
    %2363 = vmatprep.subr.mxu0 %v2362
    %v2364 = vand.u32 %v1165, 4294901760
    %2365 = vmatpush1.msra.mxu0 %v2364
    %v2366 = vand.u32 %v1168, 4294901760
    %2367 = vmatprep.subr.mxu0 %v2366
    %v2368 = vand.u32 %v1167, 4294901760
    %2369 = vmatpush1.msra.mxu0 %v2368
    %v2370 = vand.u32 %v1170, 4294901760
    %2371 = vmatprep.subr.mxu0 %v2370
    %v2372 = vand.u32 %v1169, 4294901760
    %2373 = vmatpush1.msra.mxu0 %v2372
    %v2374 = vand.u32 %v1309, 4294901760
    %2375 = vmatprep.subr.mxu0 %v2374
    %v2376 = vand.u32 %v1306, 4294901760
    %2377 = vmatpush1.msra.mxu0 %v2376
    %2378 = vmatprep.subr.mxu0 0.0
    %2379 = vmatpush1.msra.mxu0 0.0
    %2380 = vmatprep.subr.mxu0 0.0
    %2381 = vmatpush1.msra.mxu0 0.0
    %2382 = vmatprep.subr.mxu0 0.0
    %2383 = vmatpush1.msra.mxu0 0.0
    %2384 = vmatprep.subr.mxu0 0.0
    %2385 = vmatpush1.msra.mxu0 0.0
    %2386 = vmatprep.subr.mxu0 0.0
    %2387 = vmatpush1.msra.mxu0 0.0
    %2388 = vmatprep.subr.mxu0 0.0
    %2389 = vmatpush1.msra.mxu0 0.0
    %2390 = vmatprep.subr.mxu0 0.0
    %2391 = vmatpush1.msra.mxu0 0.0
    %2392 = vmatprep.subr.mxu0 0.0
    %2393 = vmatpush1.msra.mxu0 0.0
    %2394 = vmatprep.subr.mxu0 0.0
    %2395 = vmatpush1.msra.mxu0 0.0
    %2396 = vmatprep.subr.mxu0 0.0
    %2397 = vmatpush1.msra.mxu0 0.0
    %2398 = vmatprep.subr.mxu0 0.0
    %2399 = vmatpush1.msra.mxu0 0.0
    %2400 = vmatprep.subr.mxu0 0.0
    %2401 = vmatpush1.msra.mxu0 0.0
    %2402 = vmatprep.subr.mxu0 0.0
    %2403 = vmatpush1.msra.mxu0 0.0
    %2404 = vmatprep.subr.mxu0 0.0
    %2405 = vmatpush1.msra.mxu0 0.0
    %2406 = vmatprep.subr.mxu0 0.0
    %2407 = vmatpush1.msra.mxu0 0.0
    %2408 = vmatprep.subr.mxu0 0.0
    %2409 = vmatpush1.msra.mxu0 0.0
    %2410 = vmatprep.subr.mxu0 0.0
    %2411 = vmatpush1.msra.mxu0 0.0
    %2412 = vmatprep.subr.mxu0 0.0
    %2413 = vmatpush1.msra.mxu0 0.0
    %2414 = vmatprep.subr.mxu0 0.0
    %2415 = vmatpush1.msra.mxu0 0.0
    %2416 = vmatprep.subr.mxu0 0.0
    %2417 = vmatpush1.msra.mxu0 0.0
    %2418 = vmatprep.subr.mxu0 0.0
    %2419 = vmatpush1.msra.mxu0 0.0
    %2420 = vmatprep.subr.mxu0 0.0
    %2421 = vmatpush1.msra.mxu0 0.0
    %2422 = vmatprep.subr.mxu0 0.0
    %2423 = vmatpush1.msra.mxu0 0.0
    %2424 = vmatprep.subr.mxu0 0.0
    %2425 = vmatpush1.msra.mxu0 0.0
    %2426 = vmatprep.subr.mxu0 0.0
    %2427 = vmatpush1.msra.mxu0 0.0
    %2428 = vmatprep.mubr.f32.mxu0 0.0
    %v2429 = vand.u32 %v1266, 4294901760
    %2430 = vmatmul.mubr.f32.gmra.mrb[0].mxu0 %v2429
    %v2431 = vpop.f32.mrb[0].mxu0
    %v2432 = vadd.f32 %v2262, %v2431
    %v2433 = vpop.f32.mrb[0].mxu0
    %v2434 = vadd.f32 %v2264, %v2433
    %2435 = vmatprep.mubr.f32.mxu0 0.0
    %v2436 = vand.u32 %v1269, 4294901760
    %2437 = vmatmul.mubr.f32.gmra.mrb[0].mxu0 %v2436
    %v2438 = vpop.f32.mrb[0].mxu0
    %v2439 = vadd.f32 %v2269, %v2438
    %v2440 = vpop.f32.mrb[0].mxu0
    %v2441 = vadd.f32 %v2271, %v2440
    %2442 = vmatprep.mubr.f32.mxu0 0.0
    %v2443 = vand.u32 %v1272, 4294901760
    %2444 = vmatmul.mubr.f32.gmra.mrb[0].mxu0 %v2443
    %v2445 = vpop.f32.mrb[0].mxu0
    %v2446 = vadd.f32 %v2276, %v2445
    %v2447 = vpop.f32.mrb[0].mxu0
    %v2448 = vadd.f32 %v2278, %v2447
    %2449 = vmatprep.mubr.f32.mxu0 0.0
    %v2450 = vand.u32 %v1275, 4294901760
    %2451 = vmatmul.mubr.f32.gmra.mrb[0].mxu0 %v2450
    %v2452 = vpop.f32.mrb[0].mxu0
    %v2453 = vadd.f32 %v2283, %v2452
    %v2454 = vpop.f32.mrb[0].mxu0
    %v2455 = vadd.f32 %v2285, %v2454
    %2456 = vmatprep.mubr.f32.mxu0 0.0
    %v2457 = vand.u32 %v1278, 4294901760
    %2458 = vmatmul.mubr.f32.gmra.mrb[0].mxu0 %v2457
    %v2459 = vpop.f32.mrb[0].mxu0
    %v2460 = vadd.f32 %v2290, %v2459
    %v2461 = vpop.f32.mrb[0].mxu0
    %v2462 = vadd.f32 %v2292, %v2461
    %2463 = vmatprep.mubr.f32.mxu0 0.0
    %v2464 = vand.u32 %v1281, 4294901760
    %2465 = vmatmul.mubr.f32.gmra.mrb[0].mxu0 %v2464
    %v2466 = vpop.f32.mrb[0].mxu0
    %v2467 = vadd.f32 %v2297, %v2466
    %v2468 = vpop.f32.mrb[0].mxu0
    %v2469 = vadd.f32 %v2299, %v2468
    %2470 = vmatprep.mubr.f32.mxu0 0.0
    %v2471 = vand.u32 %v1284, 4294901760
    %2472 = vmatmul.mubr.f32.gmra.mrb[0].mxu0 %v2471
    %v2473 = vpop.f32.mrb[0].mxu0
    %v2474 = vadd.f32 %v2304, %v2473
    %v2475 = vpop.f32.mrb[0].mxu0
    %v2476 = vadd.f32 %v2306, %v2475
    %2477 = vmatprep.mubr.f32.mxu0 0.0
    %v2478 = vand.u32 %v1287, 4294901760
    %2479 = vmatmul.mubr.f32.gmra.mrb[0].mxu0 %v2478
    %v2480 = vpop.f32.mrb[0].mxu0
    %v2481 = vadd.f32 %v2311, %v2480
    %v2482 = vpop.f32.mrb[0].mxu0
    %v2483 = vadd.f32 %v2313, %v2482
    %2484 = vmatprep.mubr.f32.mxu0 0.0
    %v2485 = vand.u32 %v1290, 4294901760
    %2486 = vmatmul.mubr.f32.gmra.mrb[0].mxu0 %v2485
    %v2487 = vpop.f32.mrb[0].mxu0
    %v2488 = vadd.f32 %v2318, %v2487
    %v2489 = vpop.f32.mrb[0].mxu0
    %v2490 = vadd.f32 %v2320, %v2489
    %2491 = vmatprep.mubr.f32.mxu0 0.0
    %v2492 = vand.u32 %v1293, 4294901760
    %2493 = vmatmul.mubr.f32.gmra.mrb[0].mxu0 %v2492
    %v2494 = vpop.f32.mrb[0].mxu0
    %v2495 = vadd.f32 %v2325, %v2494
    %v2496 = vpop.f32.mrb[0].mxu0
    %v2497 = vadd.f32 %v2327, %v2496
    %2498 = vmatprep.mubr.f32.mxu0 0.0
    %v2499 = vand.u32 %v1296, 4294901760
    %2500 = vmatmul.mubr.f32.gmra.mrb[0].mxu0 %v2499
    %v2501 = vpop.f32.mrb[0].mxu0
    %v2502 = vadd.f32 %v2332, %v2501
    %v2503 = vpop.f32.mrb[0].mxu0
    %v2504 = vadd.f32 %v2334, %v2503
    %2505 = vmatprep.mubr.f32.mxu0 0.0
    %v2506 = vand.u32 %v1299, 4294901760
    %2507 = vmatmul.mubr.f32.gmra.mrb[0].mxu0 %v2506
    %v2508 = vpop.f32.mrb[0].mxu0
    %v2509 = vadd.f32 %v2339, %v2508
    %v2510 = vpop.f32.mrb[0].mxu0
    %v2511 = vadd.f32 %v2341, %v2510
    %2512 = vmatprep.mubr.f32.mxu0 0.0
    %v2513 = vand.u32 %v1302, 4294901760
    %2514 = vmatmul.mubr.f32.gmra.mrb[0].mxu0 %v2513
    %v2515 = vpop.f32.mrb[0].mxu0
    %v2516 = vadd.f32 %v2346, %v2515
    %v2517 = vpop.f32.mrb[0].mxu0
    %v2518 = vadd.f32 %v2348, %v2517
    %2519 = vdwg.mxu0
    %s2520 = sld [smem:[#allocation2 + $0x2]]
    %vm2521 = vcmp.ge.f32.partialorder %v2432, 0.0
    %vm2522 = vcmp.ge.f32.partialorder %v2434, 0.0
    %vm2523 = vcmp.ge.f32.partialorder %v2439, 0.0
    %vm2524 = vcmp.ge.f32.partialorder %v2441, 0.0
    %vm2525 = vcmp.ge.f32.partialorder %v2446, 0.0
    %vm2526 = vcmp.ge.f32.partialorder %v2448, 0.0
    %vm2527 = vcmp.ge.f32.partialorder %v2453, 0.0
    %vm2528 = vcmp.ge.f32.partialorder %v2455, 0.0
    %vm2529 = vcmp.ge.f32.partialorder %v2460, 0.0
    %vm2530 = vcmp.ge.f32.partialorder %v2462, 0.0
    %vm2531 = vcmp.ge.f32.partialorder %v2467, 0.0
    %vm2532 = vcmp.ge.f32.partialorder %v2469, 0.0
    %vm2533 = vcmp.ge.f32.partialorder %v2474, 0.0
    %vm2534 = vcmp.ge.f32.partialorder %v2476, 0.0
    %vm2535 = vcmp.ge.f32.partialorder %v2481, 0.0
    %vm2536 = vcmp.ge.f32.partialorder %v2483, 0.0
    %vm2537 = vcmp.ge.f32.partialorder %v2488, 0.0
    %vm2538 = vcmp.ge.f32.partialorder %v2490, 0.0
    %vm2539 = vcmp.ge.f32.partialorder %v2495, 0.0
    %vm2540 = vcmp.ge.f32.partialorder %v2497, 0.0
    %vm2541 = vcmp.ge.f32.partialorder %v2502, 0.0
    %vm2542 = vcmp.ge.f32.partialorder %v2504, 0.0
    %vm2543 = vcmp.ge.f32.partialorder %v2509, 0.0
    %vm2544 = vcmp.ge.f32.partialorder %v2511, 0.0
    %vm2545 = vcmp.ge.f32.partialorder %v2516, 0.0
    %vm2546 = vcmp.ge.f32.partialorder %v2518, 0.0
    %v2547 = vstv %s2520
    %v2548 = vmul.f32 %v2547, %v2432
    %v2549 = vmul.f32 %v2547, %v2434
    %v2550 = vmul.f32 %v2547, %v2439
    %v2551 = vmul.f32 %v2547, %v2441
    %v2552 = vmul.f32 %v2547, %v2446
    %v2553 = vmul.f32 %v2547, %v2448
    %v2554 = vmul.f32 %v2547, %v2453
    %v2555 = vmul.f32 %v2547, %v2455
    %v2556 = vmul.f32 %v2547, %v2460
    %v2557 = vmul.f32 %v2547, %v2462
    %v2558 = vmul.f32 %v2547, %v2467
    %v2559 = vmul.f32 %v2547, %v2469
    %v2560 = vmul.f32 %v2547, %v2474
    %v2561 = vmul.f32 %v2547, %v2476
    %v2562 = vmul.f32 %v2547, %v2481
    %v2563 = vmul.f32 %v2547, %v2483
    %v2564 = vmul.f32 %v2547, %v2488
    %v2565 = vmul.f32 %v2547, %v2490
    %v2566 = vmul.f32 %v2547, %v2495
    %v2567 = vmul.f32 %v2547, %v2497
    %v2568 = vmul.f32 %v2547, %v2502
    %v2569 = vmul.f32 %v2547, %v2504
    %v2570 = vmul.f32 %v2547, %v2509
    %v2571 = vmul.f32 %v2547, %v2511
    %v2572 = vmul.f32 %v2547, %v2516
    %v2573 = vmul.f32 %v2547, %v2518
    %v2574 = vsel %vm2521, %v2432, %v2548
    %v2575 = vsel %vm2522, %v2434, %v2549
    %v2576 = vsel %vm2523, %v2439, %v2550
    %v2577 = vsel %vm2524, %v2441, %v2551
    %v2578 = vsel %vm2525, %v2446, %v2552
    %v2579 = vsel %vm2526, %v2448, %v2553
    %v2580 = vsel %vm2527, %v2453, %v2554
    %v2581 = vsel %vm2528, %v2455, %v2555
    %v2582 = vsel %vm2529, %v2460, %v2556
    %v2583 = vsel %vm2530, %v2462, %v2557
    %v2584 = vsel %vm2531, %v2467, %v2558
    %v2585 = vsel %vm2532, %v2469, %v2559
    %v2586 = vsel %vm2533, %v2474, %v2560
    %v2587 = vsel %vm2534, %v2476, %v2561
    %v2588 = vsel %vm2535, %v2481, %v2562
    %v2589 = vsel %vm2536, %v2483, %v2563
    %v2590 = vsel %vm2537, %v2488, %v2564
    %v2591 = vsel %vm2538, %v2490, %v2565
    %v2592 = vsel %vm2539, %v2495, %v2566
    %v2593 = vsel %vm2540, %v2497, %v2567
    %v2594 = vsel %vm2541, %v2502, %v2568
    %v2595 = vsel %vm2542, %v2504, %v2569
    %v2596 = vsel %vm2543, %v2509, %v2570
    %v2597 = vsel %vm2544, %v2511, %v2571
    %v2598 = vsel %vm2545, %v2516, %v2572
    %v2599 = vsel %vm2546, %v2518, %v2573
    %v2600 = vld [vmem:[%s8] sm:$0xff]
    %v2601 = vld [vmem:[%s8 + $0x8] sm:$0xff]
    %v2602 = vld [vmem:[%s8 + $0x10] sm:$0xff]
    %v2603 = vld [vmem:[%s8 + $0x18] sm:$0xff]
    %v2604 = vld [vmem:[%s8 + $0x20] sm:$0xff]
    %v2605 = vld [vmem:[%s8 + $0x28] sm:$0xff]
    %v2606 = vld [vmem:[%s8 + $0x30] sm:$0x3]
    %v2607 = vld [vmem:[%s9] sm:$0xff]
    %v2608 = vld [vmem:[%s9 + $0x8] sm:$0xff]
    %v2609 = vld [vmem:[%s9 + $0x10] sm:$0xff]
    %v2610 = vld [vmem:[%s9 + $0x18] sm:$0xff]
    %v2611 = vld [vmem:[%s9 + $0x20] sm:$0xff]
    %v2612 = vld [vmem:[%s9 + $0x28] sm:$0xff]
    %v2613 = vld [vmem:[%s9 + $0x30] sm:$0x3]
    %2615 = vset.pattern.permute.xlu0 0
    %2616 = vperm.xlu0 %2615, %v2607
    %v2617 = vpop.permute.xlu0 %2616
    %2620 = vset.pattern.permute.xlu0 0
    %2621 = vperm.xlu0 %2620, %v2608
    %v2622 = vpop.permute.xlu0 %2621
    %2625 = vset.pattern.permute.xlu0 0
    %2626 = vperm.xlu0 %2625, %v2609
    %v2627 = vpop.permute.xlu0 %2626
    %2630 = vset.pattern.permute.xlu0 0
    %2631 = vperm.xlu0 %2630, %v2610
    %v2632 = vpop.permute.xlu0 %2631
    %2635 = vset.pattern.permute.xlu0 0
    %2636 = vperm.xlu0 %2635, %v2611
    %v2637 = vpop.permute.xlu0 %2636
    %2640 = vset.pattern.permute.xlu0 0
    %2641 = vperm.xlu0 %2640, %v2612
    %v2642 = vpop.permute.xlu0 %2641
    %2645 = vset.pattern.permute.xlu0 0
    %2646 = vperm.xlu0 %2645, %v2613
    %v2647 = vpop.permute.xlu0 %2646
    %vm2649 = vcmask 818176
    %v2651 = vsel %vm2649, %v2600, 0
    %v2654 = vsel %vm2649, %v2601, 0
    %v2657 = vsel %vm2649, %v2602, 0
    %v2660 = vsel %vm2649, %v2603, 0
    %v2663 = vsel %vm2649, %v2604, 0
    %v2666 = vsel %vm2649, %v2605, 0
    %v2669 = vsel %vm2649, %v2606, 0
    %vm2671 = vcmask 1043456
    %v2673 = vsel %vm2671, %v2598, 0
    %v2676 = vsel %vm2671, %v2599, 0
    %v2678 = vand.u32 %v2575, 4294901760
    %2679 = vmatprep.subr.mxu0 %v2678
    %v2680 = vand.u32 %v2574, 4294901760
    %2681 = vmatpush1.msra.mxu0 %v2680
    %v2682 = vand.u32 %v2577, 4294901760
    %2683 = vmatprep.subr.mxu0 %v2682
    %v2684 = vand.u32 %v2576, 4294901760
    %2685 = vmatpush1.msra.mxu0 %v2684
    %v2686 = vand.u32 %v2579, 4294901760
    %2687 = vmatprep.subr.mxu0 %v2686
    %v2688 = vand.u32 %v2578, 4294901760
    %2689 = vmatpush1.msra.mxu0 %v2688
    %v2690 = vand.u32 %v2581, 4294901760
    %2691 = vmatprep.subr.mxu0 %v2690
    %v2692 = vand.u32 %v2580, 4294901760
    %2693 = vmatpush1.msra.mxu0 %v2692
    %v2694 = vand.u32 %v2583, 4294901760
    %2695 = vmatprep.subr.mxu0 %v2694
    %v2696 = vand.u32 %v2582, 4294901760
    %2697 = vmatpush1.msra.mxu0 %v2696
    %v2698 = vand.u32 %v2585, 4294901760
    %2699 = vmatprep.subr.mxu0 %v2698
    %v2700 = vand.u32 %v2584, 4294901760
    %2701 = vmatpush1.msra.mxu0 %v2700
    %v2702 = vand.u32 %v2587, 4294901760
    %2703 = vmatprep.subr.mxu0 %v2702
    %v2704 = vand.u32 %v2586, 4294901760
    %2705 = vmatpush1.msra.mxu0 %v2704
    %v2706 = vand.u32 %v2589, 4294901760
    %2707 = vmatprep.subr.mxu0 %v2706
    %v2708 = vand.u32 %v2588, 4294901760
    %2709 = vmatpush1.msra.mxu0 %v2708
    %v2710 = vand.u32 %v2591, 4294901760
    %2711 = vmatprep.subr.mxu0 %v2710
    %v2712 = vand.u32 %v2590, 4294901760
    %2713 = vmatpush1.msra.mxu0 %v2712
    %v2714 = vand.u32 %v2593, 4294901760
    %2715 = vmatprep.subr.mxu0 %v2714
    %v2716 = vand.u32 %v2592, 4294901760
    %2717 = vmatpush1.msra.mxu0 %v2716
    %v2718 = vand.u32 %v2595, 4294901760
    %2719 = vmatprep.subr.mxu0 %v2718
    %v2720 = vand.u32 %v2594, 4294901760
    %2721 = vmatpush1.msra.mxu0 %v2720
    %v2722 = vand.u32 %v2597, 4294901760
    %2723 = vmatprep.subr.mxu0 %v2722
    %v2724 = vand.u32 %v2596, 4294901760
    %2725 = vmatpush1.msra.mxu0 %v2724
    %v2726 = vand.u32 %v2676, 4294901760
    %2727 = vmatprep.subr.mxu0 %v2726
    %v2728 = vand.u32 %v2673, 4294901760
    %2729 = vmatpush1.msra.mxu0 %v2728
    %2730 = vmatprep.subr.mxu0 0.0
    %2731 = vmatpush1.msra.mxu0 0.0
    %2732 = vmatprep.subr.mxu0 0.0
    %2733 = vmatpush1.msra.mxu0 0.0
    %2734 = vmatprep.subr.mxu0 0.0
    %2735 = vmatpush1.msra.mxu0 0.0
    %2736 = vmatprep.subr.mxu0 0.0
    %2737 = vmatpush1.msra.mxu0 0.0
    %2738 = vmatprep.subr.mxu0 0.0
    %2739 = vmatpush1.msra.mxu0 0.0
    %2740 = vmatprep.subr.mxu0 0.0
    %2741 = vmatpush1.msra.mxu0 0.0
    %2742 = vmatprep.subr.mxu0 0.0
    %2743 = vmatpush1.msra.mxu0 0.0
    %2744 = vmatprep.subr.mxu0 0.0
    %2745 = vmatpush1.msra.mxu0 0.0
    %2746 = vmatprep.subr.mxu0 0.0
    %2747 = vmatpush1.msra.mxu0 0.0
    %2748 = vmatprep.subr.mxu0 0.0
    %2749 = vmatpush1.msra.mxu0 0.0
    %2750 = vmatprep.subr.mxu0 0.0
    %2751 = vmatpush1.msra.mxu0 0.0
    %2752 = vmatprep.subr.mxu0 0.0
    %2753 = vmatpush1.msra.mxu0 0.0
    %2754 = vmatprep.subr.mxu0 0.0
    %2755 = vmatpush1.msra.mxu0 0.0
    %2756 = vmatprep.subr.mxu0 0.0
    %2757 = vmatpush1.msra.mxu0 0.0
    %2758 = vmatprep.subr.mxu0 0.0
    %2759 = vmatpush1.msra.mxu0 0.0
    %2760 = vmatprep.subr.mxu0 0.0
    %2761 = vmatpush1.msra.mxu0 0.0
    %2762 = vmatprep.subr.mxu0 0.0
    %2763 = vmatpush1.msra.mxu0 0.0
    %2764 = vmatprep.subr.mxu0 0.0
    %2765 = vmatpush1.msra.mxu0 0.0
    %2766 = vmatprep.subr.mxu0 0.0
    %2767 = vmatpush1.msra.mxu0 0.0
    %2768 = vmatprep.mubr.f32.mxu0 0.0
    %v2769 = vand.u32 %v2651, 4294901760
    %v2770 = vsub.f32 %v2651, %v2769
    %v2771 = vand.u32 %v2770, 4294901760
    %v2772 = vsub.f32 %v2770, %v2771
    %v2773 = vand.u32 %v2772, 4294901760
    %2774 = vmatmul.mubr.f32.gmra.mrb[0].mxu0 %v2773
    %v2775 = vpop.f32.mrb[0].mxu0
    %v2776 = vadd.f32 %v2617, %v2775
    %v2777 = vpop.f32.mrb[0].mxu0
    %v2778 = vadd.f32 %v2617, %v2777
    %2779 = vmatprep.mubr.f32.mxu0 0.0
    %v2780 = vand.u32 %v2654, 4294901760
    %v2781 = vsub.f32 %v2654, %v2780
    %v2782 = vand.u32 %v2781, 4294901760
    %v2783 = vsub.f32 %v2781, %v2782
    %v2784 = vand.u32 %v2783, 4294901760
    %2785 = vmatmul.mubr.f32.gmra.mrb[0].mxu0 %v2784
    %v2786 = vpop.f32.mrb[0].mxu0
    %v2787 = vadd.f32 %v2622, %v2786
    %v2788 = vpop.f32.mrb[0].mxu0
    %v2789 = vadd.f32 %v2622, %v2788
    %2790 = vmatprep.mubr.f32.mxu0 0.0
    %v2791 = vand.u32 %v2657, 4294901760
    %v2792 = vsub.f32 %v2657, %v2791
    %v2793 = vand.u32 %v2792, 4294901760
    %v2794 = vsub.f32 %v2792, %v2793
    %v2795 = vand.u32 %v2794, 4294901760
    %2796 = vmatmul.mubr.f32.gmra.mrb[0].mxu0 %v2795
    %v2797 = vpop.f32.mrb[0].mxu0
    %v2798 = vadd.f32 %v2627, %v2797
    %v2799 = vpop.f32.mrb[0].mxu0
    %v2800 = vadd.f32 %v2627, %v2799
    %2801 = vmatprep.mubr.f32.mxu0 0.0
    %v2802 = vand.u32 %v2660, 4294901760
    %v2803 = vsub.f32 %v2660, %v2802
    %v2804 = vand.u32 %v2803, 4294901760
    %v2805 = vsub.f32 %v2803, %v2804
    %v2806 = vand.u32 %v2805, 4294901760
    %2807 = vmatmul.mubr.f32.gmra.mrb[0].mxu0 %v2806
    %v2808 = vpop.f32.mrb[0].mxu0
    %v2809 = vadd.f32 %v2632, %v2808
    %v2810 = vpop.f32.mrb[0].mxu0
    %v2811 = vadd.f32 %v2632, %v2810
    %2812 = vmatprep.mubr.f32.mxu0 0.0
    %v2813 = vand.u32 %v2663, 4294901760
    %v2814 = vsub.f32 %v2663, %v2813
    %v2815 = vand.u32 %v2814, 4294901760
    %v2816 = vsub.f32 %v2814, %v2815
    %v2817 = vand.u32 %v2816, 4294901760
    %2818 = vmatmul.mubr.f32.gmra.mrb[0].mxu0 %v2817
    %v2819 = vpop.f32.mrb[0].mxu0
    %v2820 = vadd.f32 %v2637, %v2819
    %v2821 = vpop.f32.mrb[0].mxu0
    %v2822 = vadd.f32 %v2637, %v2821
    %2823 = vmatprep.mubr.f32.mxu0 0.0
    %v2824 = vand.u32 %v2666, 4294901760
    %v2825 = vsub.f32 %v2666, %v2824
    %v2826 = vand.u32 %v2825, 4294901760
    %v2827 = vsub.f32 %v2825, %v2826
    %v2828 = vand.u32 %v2827, 4294901760
    %2829 = vmatmul.mubr.f32.gmra.mrb[0].mxu0 %v2828
    %v2830 = vpop.f32.mrb[0].mxu0
    %v2831 = vadd.f32 %v2642, %v2830
    %v2832 = vpop.f32.mrb[0].mxu0
    %v2833 = vadd.f32 %v2642, %v2832
    %2834 = vmatprep.mubr.f32.mxu0 0.0
    %v2835 = vand.u32 %v2669, 4294901760
    %v2836 = vsub.f32 %v2669, %v2835
    %v2837 = vand.u32 %v2836, 4294901760
    %v2838 = vsub.f32 %v2836, %v2837
    %v2839 = vand.u32 %v2838, 4294901760
    %2840 = vmatmul.mubr.f32.gmra.mrb[0].mxu0 %v2839
    %v2841 = vpop.f32.mrb[0].mxu0
    %v2842 = vadd.f32 %v2647, %v2841
    %v2843 = vpop.f32.mrb[0].mxu0
    %v2844 = vadd.f32 %v2647, %v2843
    %2845 = vdwg.mxu0
    %v2846 = vand.u32 %v2575, 4294901760
    %v2847 = vsub.f32 %v2575, %v2846
    %v2848 = vand.u32 %v2847, 4294901760
    %v2849 = vsub.f32 %v2847, %v2848
    %v2850 = vand.u32 %v2849, 4294901760
    %2851 = vmatprep.subr.mxu0 %v2850
    %v2852 = vand.u32 %v2574, 4294901760
    %v2853 = vsub.f32 %v2574, %v2852
    %v2854 = vand.u32 %v2853, 4294901760
    %v2855 = vsub.f32 %v2853, %v2854
    %v2856 = vand.u32 %v2855, 4294901760
    %2857 = vmatpush1.msra.mxu0 %v2856
    %v2858 = vand.u32 %v2577, 4294901760
    %v2859 = vsub.f32 %v2577, %v2858
    %v2860 = vand.u32 %v2859, 4294901760
    %v2861 = vsub.f32 %v2859, %v2860
    %v2862 = vand.u32 %v2861, 4294901760
    %2863 = vmatprep.subr.mxu0 %v2862
    %v2864 = vand.u32 %v2576, 4294901760
    %v2865 = vsub.f32 %v2576, %v2864
    %v2866 = vand.u32 %v2865, 4294901760
    %v2867 = vsub.f32 %v2865, %v2866
    %v2868 = vand.u32 %v2867, 4294901760
    %2869 = vmatpush1.msra.mxu0 %v2868
    %v2870 = vand.u32 %v2579, 4294901760
    %v2871 = vsub.f32 %v2579, %v2870
    %v2872 = vand.u32 %v2871, 4294901760
    %v2873 = vsub.f32 %v2871, %v2872
    %v2874 = vand.u32 %v2873, 4294901760
    %2875 = vmatprep.subr.mxu0 %v2874
    %v2876 = vand.u32 %v2578, 4294901760
    %v2877 = vsub.f32 %v2578, %v2876
    %v2878 = vand.u32 %v2877, 4294901760
    %v2879 = vsub.f32 %v2877, %v2878
    %v2880 = vand.u32 %v2879, 4294901760
    %2881 = vmatpush1.msra.mxu0 %v2880
    %v2882 = vand.u32 %v2581, 4294901760
    %v2883 = vsub.f32 %v2581, %v2882
    %v2884 = vand.u32 %v2883, 4294901760
    %v2885 = vsub.f32 %v2883, %v2884
    %v2886 = vand.u32 %v2885, 4294901760
    %2887 = vmatprep.subr.mxu0 %v2886
    %v2888 = vand.u32 %v2580, 4294901760
    %v2889 = vsub.f32 %v2580, %v2888
    %v2890 = vand.u32 %v2889, 4294901760
    %v2891 = vsub.f32 %v2889, %v2890
    %v2892 = vand.u32 %v2891, 4294901760
    %2893 = vmatpush1.msra.mxu0 %v2892
    %v2894 = vand.u32 %v2583, 4294901760
    %v2895 = vsub.f32 %v2583, %v2894
    %v2896 = vand.u32 %v2895, 4294901760
    %v2897 = vsub.f32 %v2895, %v2896
    %v2898 = vand.u32 %v2897, 4294901760
    %2899 = vmatprep.subr.mxu0 %v2898
    %v2900 = vand.u32 %v2582, 4294901760
    %v2901 = vsub.f32 %v2582, %v2900
    %v2902 = vand.u32 %v2901, 4294901760
    %v2903 = vsub.f32 %v2901, %v2902
    %v2904 = vand.u32 %v2903, 4294901760
    %2905 = vmatpush1.msra.mxu0 %v2904
    %v2906 = vand.u32 %v2585, 4294901760
    %v2907 = vsub.f32 %v2585, %v2906
    %v2908 = vand.u32 %v2907, 4294901760
    %v2909 = vsub.f32 %v2907, %v2908
    %v2910 = vand.u32 %v2909, 4294901760
    %2911 = vmatprep.subr.mxu0 %v2910
    %v2912 = vand.u32 %v2584, 4294901760
    %v2913 = vsub.f32 %v2584, %v2912
    %v2914 = vand.u32 %v2913, 4294901760
    %v2915 = vsub.f32 %v2913, %v2914
    %v2916 = vand.u32 %v2915, 4294901760
    %2917 = vmatpush1.msra.mxu0 %v2916
    %v2918 = vand.u32 %v2587, 4294901760
    %v2919 = vsub.f32 %v2587, %v2918
    %v2920 = vand.u32 %v2919, 4294901760
    %v2921 = vsub.f32 %v2919, %v2920
    %v2922 = vand.u32 %v2921, 4294901760
    %2923 = vmatprep.subr.mxu0 %v2922
    %v2924 = vand.u32 %v2586, 4294901760
    %v2925 = vsub.f32 %v2586, %v2924
    %v2926 = vand.u32 %v2925, 4294901760
    %v2927 = vsub.f32 %v2925, %v2926
    %v2928 = vand.u32 %v2927, 4294901760
    %2929 = vmatpush1.msra.mxu0 %v2928
    %v2930 = vand.u32 %v2589, 4294901760
    %v2931 = vsub.f32 %v2589, %v2930
    %v2932 = vand.u32 %v2931, 4294901760
    %v2933 = vsub.f32 %v2931, %v2932
    %v2934 = vand.u32 %v2933, 4294901760
    %2935 = vmatprep.subr.mxu0 %v2934
    %v2936 = vand.u32 %v2588, 4294901760
    %v2937 = vsub.f32 %v2588, %v2936
    %v2938 = vand.u32 %v2937, 4294901760
    %v2939 = vsub.f32 %v2937, %v2938
    %v2940 = vand.u32 %v2939, 4294901760
    %2941 = vmatpush1.msra.mxu0 %v2940
    %v2942 = vand.u32 %v2591, 4294901760
    %v2943 = vsub.f32 %v2591, %v2942
    %v2944 = vand.u32 %v2943, 4294901760
    %v2945 = vsub.f32 %v2943, %v2944
    %v2946 = vand.u32 %v2945, 4294901760
    %2947 = vmatprep.subr.mxu0 %v2946
    %v2948 = vand.u32 %v2590, 4294901760
    %v2949 = vsub.f32 %v2590, %v2948
    %v2950 = vand.u32 %v2949, 4294901760
    %v2951 = vsub.f32 %v2949, %v2950
    %v2952 = vand.u32 %v2951, 4294901760
    %2953 = vmatpush1.msra.mxu0 %v2952
    %v2954 = vand.u32 %v2593, 4294901760
    %v2955 = vsub.f32 %v2593, %v2954
    %v2956 = vand.u32 %v2955, 4294901760
    %v2957 = vsub.f32 %v2955, %v2956
    %v2958 = vand.u32 %v2957, 4294901760
    %2959 = vmatprep.subr.mxu0 %v2958
    %v2960 = vand.u32 %v2592, 4294901760
    %v2961 = vsub.f32 %v2592, %v2960
    %v2962 = vand.u32 %v2961, 4294901760
    %v2963 = vsub.f32 %v2961, %v2962
    %v2964 = vand.u32 %v2963, 4294901760
    %2965 = vmatpush1.msra.mxu0 %v2964
    %v2966 = vand.u32 %v2595, 4294901760
    %v2967 = vsub.f32 %v2595, %v2966
    %v2968 = vand.u32 %v2967, 4294901760
    %v2969 = vsub.f32 %v2967, %v2968
    %v2970 = vand.u32 %v2969, 4294901760
    %2971 = vmatprep.subr.mxu0 %v2970
    %v2972 = vand.u32 %v2594, 4294901760
    %v2973 = vsub.f32 %v2594, %v2972
    %v2974 = vand.u32 %v2973, 4294901760
    %v2975 = vsub.f32 %v2973, %v2974
    %v2976 = vand.u32 %v2975, 4294901760
    %2977 = vmatpush1.msra.mxu0 %v2976
    %v2978 = vand.u32 %v2597, 4294901760
    %v2979 = vsub.f32 %v2597, %v2978
    %v2980 = vand.u32 %v2979, 4294901760
    %v2981 = vsub.f32 %v2979, %v2980
    %v2982 = vand.u32 %v2981, 4294901760
    %2983 = vmatprep.subr.mxu0 %v2982
    %v2984 = vand.u32 %v2596, 4294901760
    %v2985 = vsub.f32 %v2596, %v2984
    %v2986 = vand.u32 %v2985, 4294901760
    %v2987 = vsub.f32 %v2985, %v2986
    %v2988 = vand.u32 %v2987, 4294901760
    %2989 = vmatpush1.msra.mxu0 %v2988
    %v2990 = vand.u32 %v2676, 4294901760
    %v2991 = vsub.f32 %v2676, %v2990
    %v2992 = vand.u32 %v2991, 4294901760
    %v2993 = vsub.f32 %v2991, %v2992
    %v2994 = vand.u32 %v2993, 4294901760
    %2995 = vmatprep.subr.mxu0 %v2994
    %v2996 = vand.u32 %v2673, 4294901760
    %v2997 = vsub.f32 %v2673, %v2996
    %v2998 = vand.u32 %v2997, 4294901760
    %v2999 = vsub.f32 %v2997, %v2998
    %v3000 = vand.u32 %v2999, 4294901760
    %3001 = vmatpush1.msra.mxu0 %v3000
    %3002 = vmatprep.subr.mxu0 0.0
    %3003 = vmatpush1.msra.mxu0 0.0
    %3004 = vmatprep.subr.mxu0 0.0
    %3005 = vmatpush1.msra.mxu0 0.0
    %3006 = vmatprep.subr.mxu0 0.0
    %3007 = vmatpush1.msra.mxu0 0.0
    %3008 = vmatprep.subr.mxu0 0.0
    %3009 = vmatpush1.msra.mxu0 0.0
    %3010 = vmatprep.subr.mxu0 0.0
    %3011 = vmatpush1.msra.mxu0 0.0
    %3012 = vmatprep.subr.mxu0 0.0
    %3013 = vmatpush1.msra.mxu0 0.0
    %3014 = vmatprep.subr.mxu0 0.0
    %3015 = vmatpush1.msra.mxu0 0.0
    %3016 = vmatprep.subr.mxu0 0.0
    %3017 = vmatpush1.msra.mxu0 0.0
    %3018 = vmatprep.subr.mxu0 0.0
    %3019 = vmatpush1.msra.mxu0 0.0
    %3020 = vmatprep.subr.mxu0 0.0
    %3021 = vmatpush1.msra.mxu0 0.0
    %3022 = vmatprep.subr.mxu0 0.0
    %3023 = vmatpush1.msra.mxu0 0.0
    %3024 = vmatprep.subr.mxu0 0.0
    %3025 = vmatpush1.msra.mxu0 0.0
    %3026 = vmatprep.subr.mxu0 0.0
    %3027 = vmatpush1.msra.mxu0 0.0
    %3028 = vmatprep.subr.mxu0 0.0
    %3029 = vmatpush1.msra.mxu0 0.0
    %3030 = vmatprep.subr.mxu0 0.0
    %3031 = vmatpush1.msra.mxu0 0.0
    %3032 = vmatprep.subr.mxu0 0.0
    %3033 = vmatpush1.msra.mxu0 0.0
    %3034 = vmatprep.subr.mxu0 0.0
    %3035 = vmatpush1.msra.mxu0 0.0
    %3036 = vmatprep.subr.mxu0 0.0
    %3037 = vmatpush1.msra.mxu0 0.0
    %3038 = vmatprep.subr.mxu0 0.0
    %3039 = vmatpush1.msra.mxu0 0.0
    %3040 = vmatprep.mubr.f32.mxu0 0.0
    %v3041 = vand.u32 %v2651, 4294901760
    %3042 = vmatmul.mubr.f32.gmra.mrb[0].mxu0 %v3041
    %v3043 = vpop.f32.mrb[0].mxu0
    %v3044 = vadd.f32 %v2776, %v3043
    %v3045 = vpop.f32.mrb[0].mxu0
    %v3046 = vadd.f32 %v2778, %v3045
    %3047 = vmatprep.mubr.f32.mxu0 0.0
    %v3048 = vand.u32 %v2654, 4294901760
    %3049 = vmatmul.mubr.f32.gmra.mrb[0].mxu0 %v3048
    %v3050 = vpop.f32.mrb[0].mxu0
    %v3051 = vadd.f32 %v2787, %v3050
    %v3052 = vpop.f32.mrb[0].mxu0
    %v3053 = vadd.f32 %v2789, %v3052
    %3054 = vmatprep.mubr.f32.mxu0 0.0
    %v3055 = vand.u32 %v2657, 4294901760
    %3056 = vmatmul.mubr.f32.gmra.mrb[0].mxu0 %v3055
    %v3057 = vpop.f32.mrb[0].mxu0
    %v3058 = vadd.f32 %v2798, %v3057
    %v3059 = vpop.f32.mrb[0].mxu0
    %v3060 = vadd.f32 %v2800, %v3059
    %3061 = vmatprep.mubr.f32.mxu0 0.0
    %v3062 = vand.u32 %v2660, 4294901760
    %3063 = vmatmul.mubr.f32.gmra.mrb[0].mxu0 %v3062
    %v3064 = vpop.f32.mrb[0].mxu0
    %v3065 = vadd.f32 %v2809, %v3064
    %v3066 = vpop.f32.mrb[0].mxu0
    %v3067 = vadd.f32 %v2811, %v3066
    %3068 = vmatprep.mubr.f32.mxu0 0.0
    %v3069 = vand.u32 %v2663, 4294901760
    %3070 = vmatmul.mubr.f32.gmra.mrb[0].mxu0 %v3069
    %v3071 = vpop.f32.mrb[0].mxu0
    %v3072 = vadd.f32 %v2820, %v3071
    %v3073 = vpop.f32.mrb[0].mxu0
    %v3074 = vadd.f32 %v2822, %v3073
    %3075 = vmatprep.mubr.f32.mxu0 0.0
    %v3076 = vand.u32 %v2666, 4294901760
    %3077 = vmatmul.mubr.f32.gmra.mrb[0].mxu0 %v3076
    %v3078 = vpop.f32.mrb[0].mxu0
    %v3079 = vadd.f32 %v2831, %v3078
    %v3080 = vpop.f32.mrb[0].mxu0
    %v3081 = vadd.f32 %v2833, %v3080
    %3082 = vmatprep.mubr.f32.mxu0 0.0
    %v3083 = vand.u32 %v2669, 4294901760
    %3084 = vmatmul.mubr.f32.gmra.mrb[0].mxu0 %v3083
    %v3085 = vpop.f32.mrb[0].mxu0
    %v3086 = vadd.f32 %v2842, %v3085
    %v3087 = vpop.f32.mrb[0].mxu0
    %v3088 = vadd.f32 %v2844, %v3087
    %3089 = vdwg.mxu0
    %v3090 = vand.u32 %v2575, 4294901760
    %v3091 = vsub.f32 %v2575, %v3090
    %3092 = vmatprep.subr.mxu0 %v3091
    %v3093 = vand.u32 %v2574, 4294901760
    %v3094 = vsub.f32 %v2574, %v3093
    %3095 = vmatpush1.msra.mxu0 %v3094
    %v3096 = vand.u32 %v2577, 4294901760
    %v3097 = vsub.f32 %v2577, %v3096
    %3098 = vmatprep.subr.mxu0 %v3097
    %v3099 = vand.u32 %v2576, 4294901760
    %v3100 = vsub.f32 %v2576, %v3099
    %3101 = vmatpush1.msra.mxu0 %v3100
    %v3102 = vand.u32 %v2579, 4294901760
    %v3103 = vsub.f32 %v2579, %v3102
    %3104 = vmatprep.subr.mxu0 %v3103
    %v3105 = vand.u32 %v2578, 4294901760
    %v3106 = vsub.f32 %v2578, %v3105
    %3107 = vmatpush1.msra.mxu0 %v3106
    %v3108 = vand.u32 %v2581, 4294901760
    %v3109 = vsub.f32 %v2581, %v3108
    %3110 = vmatprep.subr.mxu0 %v3109
    %v3111 = vand.u32 %v2580, 4294901760
    %v3112 = vsub.f32 %v2580, %v3111
    %3113 = vmatpush1.msra.mxu0 %v3112
    %v3114 = vand.u32 %v2583, 4294901760
    %v3115 = vsub.f32 %v2583, %v3114
    %3116 = vmatprep.subr.mxu0 %v3115
    %v3117 = vand.u32 %v2582, 4294901760
    %v3118 = vsub.f32 %v2582, %v3117
    %3119 = vmatpush1.msra.mxu0 %v3118
    %v3120 = vand.u32 %v2585, 4294901760
    %v3121 = vsub.f32 %v2585, %v3120
    %3122 = vmatprep.subr.mxu0 %v3121
    %v3123 = vand.u32 %v2584, 4294901760
    %v3124 = vsub.f32 %v2584, %v3123
    %3125 = vmatpush1.msra.mxu0 %v3124
    %v3126 = vand.u32 %v2587, 4294901760
    %v3127 = vsub.f32 %v2587, %v3126
    %3128 = vmatprep.subr.mxu0 %v3127
    %v3129 = vand.u32 %v2586, 4294901760
    %v3130 = vsub.f32 %v2586, %v3129
    %3131 = vmatpush1.msra.mxu0 %v3130
    %v3132 = vand.u32 %v2589, 4294901760
    %v3133 = vsub.f32 %v2589, %v3132
    %3134 = vmatprep.subr.mxu0 %v3133
    %v3135 = vand.u32 %v2588, 4294901760
    %v3136 = vsub.f32 %v2588, %v3135
    %3137 = vmatpush1.msra.mxu0 %v3136
    %v3138 = vand.u32 %v2591, 4294901760
    %v3139 = vsub.f32 %v2591, %v3138
    %3140 = vmatprep.subr.mxu0 %v3139
    %v3141 = vand.u32 %v2590, 4294901760
    %v3142 = vsub.f32 %v2590, %v3141
    %3143 = vmatpush1.msra.mxu0 %v3142
    %v3144 = vand.u32 %v2593, 4294901760
    %v3145 = vsub.f32 %v2593, %v3144
    %3146 = vmatprep.subr.mxu0 %v3145
    %v3147 = vand.u32 %v2592, 4294901760
    %v3148 = vsub.f32 %v2592, %v3147
    %3149 = vmatpush1.msra.mxu0 %v3148
    %v3150 = vand.u32 %v2595, 4294901760
    %v3151 = vsub.f32 %v2595, %v3150
    %3152 = vmatprep.subr.mxu0 %v3151
    %v3153 = vand.u32 %v2594, 4294901760
    %v3154 = vsub.f32 %v2594, %v3153
    %3155 = vmatpush1.msra.mxu0 %v3154
    %v3156 = vand.u32 %v2597, 4294901760
    %v3157 = vsub.f32 %v2597, %v3156
    %3158 = vmatprep.subr.mxu0 %v3157
    %v3159 = vand.u32 %v2596, 4294901760
    %v3160 = vsub.f32 %v2596, %v3159
    %3161 = vmatpush1.msra.mxu0 %v3160
    %v3162 = vand.u32 %v2676, 4294901760
    %v3163 = vsub.f32 %v2676, %v3162
    %3164 = vmatprep.subr.mxu0 %v3163
    %v3165 = vand.u32 %v2673, 4294901760
    %v3166 = vsub.f32 %v2673, %v3165
    %3167 = vmatpush1.msra.mxu0 %v3166
    %3168 = vmatprep.subr.mxu0 0.0
    %3169 = vmatpush1.msra.mxu0 0.0
    %3170 = vmatprep.subr.mxu0 0.0
    %3171 = vmatpush1.msra.mxu0 0.0
    %3172 = vmatprep.subr.mxu0 0.0
    %3173 = vmatpush1.msra.mxu0 0.0
    %3174 = vmatprep.subr.mxu0 0.0
    %3175 = vmatpush1.msra.mxu0 0.0
    %3176 = vmatprep.subr.mxu0 0.0
    %3177 = vmatpush1.msra.mxu0 0.0
    %3178 = vmatprep.subr.mxu0 0.0
    %3179 = vmatpush1.msra.mxu0 0.0
    %3180 = vmatprep.subr.mxu0 0.0
    %3181 = vmatpush1.msra.mxu0 0.0
    %3182 = vmatprep.subr.mxu0 0.0
    %3183 = vmatpush1.msra.mxu0 0.0
    %3184 = vmatprep.subr.mxu0 0.0
    %3185 = vmatpush1.msra.mxu0 0.0
    %3186 = vmatprep.subr.mxu0 0.0
    %3187 = vmatpush1.msra.mxu0 0.0
    %3188 = vmatprep.subr.mxu0 0.0
    %3189 = vmatpush1.msra.mxu0 0.0
    %3190 = vmatprep.subr.mxu0 0.0
    %3191 = vmatpush1.msra.mxu0 0.0
    %3192 = vmatprep.subr.mxu0 0.0
    %3193 = vmatpush1.msra.mxu0 0.0
    %3194 = vmatprep.subr.mxu0 0.0
    %3195 = vmatpush1.msra.mxu0 0.0
    %3196 = vmatprep.subr.mxu0 0.0
    %3197 = vmatpush1.msra.mxu0 0.0
    %3198 = vmatprep.subr.mxu0 0.0
    %3199 = vmatpush1.msra.mxu0 0.0
    %3200 = vmatprep.subr.mxu0 0.0
    %3201 = vmatpush1.msra.mxu0 0.0
    %3202 = vmatprep.subr.mxu0 0.0
    %3203 = vmatpush1.msra.mxu0 0.0
    %3204 = vmatprep.subr.mxu0 0.0
    %3205 = vmatpush1.msra.mxu0 0.0
    %3206 = vmatprep.mubr.f32.mxu0 0.0
    %v3207 = vand.u32 %v2651, 4294901760
    %v3208 = vsub.f32 %v2651, %v3207
    %3209 = vmatmul.mubr.f32.gmra.mrb[0].mxu0 %v3208
    %v3210 = vpop.f32.mrb[0].mxu0
    %v3211 = vadd.f32 %v3044, %v3210
    %v3212 = vpop.f32.mrb[0].mxu0
    %v3213 = vadd.f32 %v3046, %v3212
    %3214 = vmatprep.mubr.f32.mxu0 0.0
    %v3215 = vand.u32 %v2654, 4294901760
    %v3216 = vsub.f32 %v2654, %v3215
    %3217 = vmatmul.mubr.f32.gmra.mrb[0].mxu0 %v3216
    %v3218 = vpop.f32.mrb[0].mxu0
    %v3219 = vadd.f32 %v3051, %v3218
    %v3220 = vpop.f32.mrb[0].mxu0
    %v3221 = vadd.f32 %v3053, %v3220
    %3222 = vmatprep.mubr.f32.mxu0 0.0
    %v3223 = vand.u32 %v2657, 4294901760
    %v3224 = vsub.f32 %v2657, %v3223
    %3225 = vmatmul.mubr.f32.gmra.mrb[0].mxu0 %v3224
    %v3226 = vpop.f32.mrb[0].mxu0
    %v3227 = vadd.f32 %v3058, %v3226
    %v3228 = vpop.f32.mrb[0].mxu0
    %v3229 = vadd.f32 %v3060, %v3228
    %3230 = vmatprep.mubr.f32.mxu0 0.0
    %v3231 = vand.u32 %v2660, 4294901760
    %v3232 = vsub.f32 %v2660, %v3231
    %3233 = vmatmul.mubr.f32.gmra.mrb[0].mxu0 %v3232
    %v3234 = vpop.f32.mrb[0].mxu0
    %v3235 = vadd.f32 %v3065, %v3234
    %v3236 = vpop.f32.mrb[0].mxu0
    %v3237 = vadd.f32 %v3067, %v3236
    %3238 = vmatprep.mubr.f32.mxu0 0.0
    %v3239 = vand.u32 %v2663, 4294901760
    %v3240 = vsub.f32 %v2663, %v3239
    %3241 = vmatmul.mubr.f32.gmra.mrb[0].mxu0 %v3240
    %v3242 = vpop.f32.mrb[0].mxu0
    %v3243 = vadd.f32 %v3072, %v3242
    %v3244 = vpop.f32.mrb[0].mxu0
    %v3245 = vadd.f32 %v3074, %v3244
    %3246 = vmatprep.mubr.f32.mxu0 0.0
    %v3247 = vand.u32 %v2666, 4294901760
    %v3248 = vsub.f32 %v2666, %v3247
    %3249 = vmatmul.mubr.f32.gmra.mrb[0].mxu0 %v3248
    %v3250 = vpop.f32.mrb[0].mxu0
    %v3251 = vadd.f32 %v3079, %v3250
    %v3252 = vpop.f32.mrb[0].mxu0
    %v3253 = vadd.f32 %v3081, %v3252
    %3254 = vmatprep.mubr.f32.mxu0 0.0
    %v3255 = vand.u32 %v2669, 4294901760
    %v3256 = vsub.f32 %v2669, %v3255
    %3257 = vmatmul.mubr.f32.gmra.mrb[0].mxu0 %v3256
    %v3258 = vpop.f32.mrb[0].mxu0
    %v3259 = vadd.f32 %v3086, %v3258
    %v3260 = vpop.f32.mrb[0].mxu0
    %v3261 = vadd.f32 %v3088, %v3260
    %3262 = vdwg.mxu0
    %v3263 = vand.u32 %v2575, 4294901760
    %3264 = vmatprep.subr.mxu0 %v3263
    %v3265 = vand.u32 %v2574, 4294901760
    %3266 = vmatpush1.msra.mxu0 %v3265
    %v3267 = vand.u32 %v2577, 4294901760
    %3268 = vmatprep.subr.mxu0 %v3267
    %v3269 = vand.u32 %v2576, 4294901760
    %3270 = vmatpush1.msra.mxu0 %v3269
    %v3271 = vand.u32 %v2579, 4294901760
    %3272 = vmatprep.subr.mxu0 %v3271
    %v3273 = vand.u32 %v2578, 4294901760
    %3274 = vmatpush1.msra.mxu0 %v3273
    %v3275 = vand.u32 %v2581, 4294901760
    %3276 = vmatprep.subr.mxu0 %v3275
    %v3277 = vand.u32 %v2580, 4294901760
    %3278 = vmatpush1.msra.mxu0 %v3277
    %v3279 = vand.u32 %v2583, 4294901760
    %3280 = vmatprep.subr.mxu0 %v3279
    %v3281 = vand.u32 %v2582, 4294901760
    %3282 = vmatpush1.msra.mxu0 %v3281
    %v3283 = vand.u32 %v2585, 4294901760
    %3284 = vmatprep.subr.mxu0 %v3283
    %v3285 = vand.u32 %v2584, 4294901760
    %3286 = vmatpush1.msra.mxu0 %v3285
    %v3287 = vand.u32 %v2587, 4294901760
    %3288 = vmatprep.subr.mxu0 %v3287
    %v3289 = vand.u32 %v2586, 4294901760
    %3290 = vmatpush1.msra.mxu0 %v3289
    %v3291 = vand.u32 %v2589, 4294901760
    %3292 = vmatprep.subr.mxu0 %v3291
    %v3293 = vand.u32 %v2588, 4294901760
    %3294 = vmatpush1.msra.mxu0 %v3293
    %v3295 = vand.u32 %v2591, 4294901760
    %3296 = vmatprep.subr.mxu0 %v3295
    %v3297 = vand.u32 %v2590, 4294901760
    %3298 = vmatpush1.msra.mxu0 %v3297
    %v3299 = vand.u32 %v2593, 4294901760
    %3300 = vmatprep.subr.mxu0 %v3299
    %v3301 = vand.u32 %v2592, 4294901760
    %3302 = vmatpush1.msra.mxu0 %v3301
    %v3303 = vand.u32 %v2595, 4294901760
    %3304 = vmatprep.subr.mxu0 %v3303
    %v3305 = vand.u32 %v2594, 4294901760
    %3306 = vmatpush1.msra.mxu0 %v3305
    %v3307 = vand.u32 %v2597, 4294901760
    %3308 = vmatprep.subr.mxu0 %v3307
    %v3309 = vand.u32 %v2596, 4294901760
    %3310 = vmatpush1.msra.mxu0 %v3309
    %v3311 = vand.u32 %v2676, 4294901760
    %3312 = vmatprep.subr.mxu0 %v3311
    %v3313 = vand.u32 %v2673, 4294901760
    %3314 = vmatpush1.msra.mxu0 %v3313
    %3315 = vmatprep.subr.mxu0 0.0
    %3316 = vmatpush1.msra.mxu0 0.0
    %3317 = vmatprep.subr.mxu0 0.0
    %3318 = vmatpush1.msra.mxu0 0.0
    %3319 = vmatprep.subr.mxu0 0.0
    %3320 = vmatpush1.msra.mxu0 0.0
    %3321 = vmatprep.subr.mxu0 0.0
    %3322 = vmatpush1.msra.mxu0 0.0
    %3323 = vmatprep.subr.mxu0 0.0
    %3324 = vmatpush1.msra.mxu0 0.0
    %3325 = vmatprep.subr.mxu0 0.0
    %3326 = vmatpush1.msra.mxu0 0.0
    %3327 = vmatprep.subr.mxu0 0.0
    %3328 = vmatpush1.msra.mxu0 0.0
    %3329 = vmatprep.subr.mxu0 0.0
    %3330 = vmatpush1.msra.mxu0 0.0
    %3331 = vmatprep.subr.mxu0 0.0
    %3332 = vmatpush1.msra.mxu0 0.0
    %3333 = vmatprep.subr.mxu0 0.0
    %3334 = vmatpush1.msra.mxu0 0.0
    %3335 = vmatprep.subr.mxu0 0.0
    %3336 = vmatpush1.msra.mxu0 0.0
    %3337 = vmatprep.subr.mxu0 0.0
    %3338 = vmatpush1.msra.mxu0 0.0
    %3339 = vmatprep.subr.mxu0 0.0
    %3340 = vmatpush1.msra.mxu0 0.0
    %3341 = vmatprep.subr.mxu0 0.0
    %3342 = vmatpush1.msra.mxu0 0.0
    %3343 = vmatprep.subr.mxu0 0.0
    %3344 = vmatpush1.msra.mxu0 0.0
    %3345 = vmatprep.subr.mxu0 0.0
    %3346 = vmatpush1.msra.mxu0 0.0
    %3347 = vmatprep.subr.mxu0 0.0
    %3348 = vmatpush1.msra.mxu0 0.0
    %3349 = vmatprep.subr.mxu0 0.0
    %3350 = vmatpush1.msra.mxu0 0.0
    %3351 = vmatprep.subr.mxu0 0.0
    %3352 = vmatpush1.msra.mxu0 0.0
    %3353 = vmatprep.mubr.f32.mxu0 0.0
    %v3354 = vand.u32 %v2651, 4294901760
    %v3355 = vsub.f32 %v2651, %v3354
    %v3356 = vand.u32 %v3355, 4294901760
    %3357 = vmatmul.mubr.f32.gmra.mrb[0].mxu0 %v3356
    %v3358 = vpop.f32.mrb[0].mxu0
    %v3359 = vadd.f32 %v3211, %v3358
    %v3360 = vpop.f32.mrb[0].mxu0
    %v3361 = vadd.f32 %v3213, %v3360
    %3362 = vmatprep.mubr.f32.mxu0 0.0
    %v3363 = vand.u32 %v2654, 4294901760
    %v3364 = vsub.f32 %v2654, %v3363
    %v3365 = vand.u32 %v3364, 4294901760
    %3366 = vmatmul.mubr.f32.gmra.mrb[0].mxu0 %v3365
    %v3367 = vpop.f32.mrb[0].mxu0
    %v3368 = vadd.f32 %v3219, %v3367
    %v3369 = vpop.f32.mrb[0].mxu0
    %v3370 = vadd.f32 %v3221, %v3369
    %3371 = vmatprep.mubr.f32.mxu0 0.0
    %v3372 = vand.u32 %v2657, 4294901760
    %v3373 = vsub.f32 %v2657, %v3372
    %v3374 = vand.u32 %v3373, 4294901760
    %3375 = vmatmul.mubr.f32.gmra.mrb[0].mxu0 %v3374
    %v3376 = vpop.f32.mrb[0].mxu0
    %v3377 = vadd.f32 %v3227, %v3376
    %v3378 = vpop.f32.mrb[0].mxu0
    %v3379 = vadd.f32 %v3229, %v3378
    %3380 = vmatprep.mubr.f32.mxu0 0.0
    %v3381 = vand.u32 %v2660, 4294901760
    %v3382 = vsub.f32 %v2660, %v3381
    %v3383 = vand.u32 %v3382, 4294901760
    %3384 = vmatmul.mubr.f32.gmra.mrb[0].mxu0 %v3383
    %v3385 = vpop.f32.mrb[0].mxu0
    %v3386 = vadd.f32 %v3235, %v3385
    %v3387 = vpop.f32.mrb[0].mxu0
    %v3388 = vadd.f32 %v3237, %v3387
    %3389 = vmatprep.mubr.f32.mxu0 0.0
    %v3390 = vand.u32 %v2663, 4294901760
    %v3391 = vsub.f32 %v2663, %v3390
    %v3392 = vand.u32 %v3391, 4294901760
    %3393 = vmatmul.mubr.f32.gmra.mrb[0].mxu0 %v3392
    %v3394 = vpop.f32.mrb[0].mxu0
    %v3395 = vadd.f32 %v3243, %v3394
    %v3396 = vpop.f32.mrb[0].mxu0
    %v3397 = vadd.f32 %v3245, %v3396
    %3398 = vmatprep.mubr.f32.mxu0 0.0
    %v3399 = vand.u32 %v2666, 4294901760
    %v3400 = vsub.f32 %v2666, %v3399
    %v3401 = vand.u32 %v3400, 4294901760
    %3402 = vmatmul.mubr.f32.gmra.mrb[0].mxu0 %v3401
    %v3403 = vpop.f32.mrb[0].mxu0
    %v3404 = vadd.f32 %v3251, %v3403
    %v3405 = vpop.f32.mrb[0].mxu0
    %v3406 = vadd.f32 %v3253, %v3405
    %3407 = vmatprep.mubr.f32.mxu0 0.0
    %v3408 = vand.u32 %v2669, 4294901760
    %v3409 = vsub.f32 %v2669, %v3408
    %v3410 = vand.u32 %v3409, 4294901760
    %3411 = vmatmul.mubr.f32.gmra.mrb[0].mxu0 %v3410
    %v3412 = vpop.f32.mrb[0].mxu0
    %v3413 = vadd.f32 %v3259, %v3412
    %v3414 = vpop.f32.mrb[0].mxu0
    %v3415 = vadd.f32 %v3261, %v3414
    %3416 = vdwg.mxu0
    %v3417 = vand.u32 %v2575, 4294901760
    %v3418 = vsub.f32 %v2575, %v3417
    %v3419 = vand.u32 %v3418, 4294901760
    %3420 = vmatprep.subr.mxu0 %v3419
    %v3421 = vand.u32 %v2574, 4294901760
    %v3422 = vsub.f32 %v2574, %v3421
    %v3423 = vand.u32 %v3422, 4294901760
    %3424 = vmatpush1.msra.mxu0 %v3423
    %v3425 = vand.u32 %v2577, 4294901760
    %v3426 = vsub.f32 %v2577, %v3425
    %v3427 = vand.u32 %v3426, 4294901760
    %3428 = vmatprep.subr.mxu0 %v3427
    %v3429 = vand.u32 %v2576, 4294901760
    %v3430 = vsub.f32 %v2576, %v3429
    %v3431 = vand.u32 %v3430, 4294901760
    %3432 = vmatpush1.msra.mxu0 %v3431
    %v3433 = vand.u32 %v2579, 4294901760
    %v3434 = vsub.f32 %v2579, %v3433
    %v3435 = vand.u32 %v3434, 4294901760
    %3436 = vmatprep.subr.mxu0 %v3435
    %v3437 = vand.u32 %v2578, 4294901760
    %v3438 = vsub.f32 %v2578, %v3437
    %v3439 = vand.u32 %v3438, 4294901760
    %3440 = vmatpush1.msra.mxu0 %v3439
    %v3441 = vand.u32 %v2581, 4294901760
    %v3442 = vsub.f32 %v2581, %v3441
    %v3443 = vand.u32 %v3442, 4294901760
    %3444 = vmatprep.subr.mxu0 %v3443
    %v3445 = vand.u32 %v2580, 4294901760
    %v3446 = vsub.f32 %v2580, %v3445
    %v3447 = vand.u32 %v3446, 4294901760
    %3448 = vmatpush1.msra.mxu0 %v3447
    %v3449 = vand.u32 %v2583, 4294901760
    %v3450 = vsub.f32 %v2583, %v3449
    %v3451 = vand.u32 %v3450, 4294901760
    %3452 = vmatprep.subr.mxu0 %v3451
    %v3453 = vand.u32 %v2582, 4294901760
    %v3454 = vsub.f32 %v2582, %v3453
    %v3455 = vand.u32 %v3454, 4294901760
    %3456 = vmatpush1.msra.mxu0 %v3455
    %v3457 = vand.u32 %v2585, 4294901760
    %v3458 = vsub.f32 %v2585, %v3457
    %v3459 = vand.u32 %v3458, 4294901760
    %3460 = vmatprep.subr.mxu0 %v3459
    %v3461 = vand.u32 %v2584, 4294901760
    %v3462 = vsub.f32 %v2584, %v3461
    %v3463 = vand.u32 %v3462, 4294901760
    %3464 = vmatpush1.msra.mxu0 %v3463
    %v3465 = vand.u32 %v2587, 4294901760
    %v3466 = vsub.f32 %v2587, %v3465
    %v3467 = vand.u32 %v3466, 4294901760
    %3468 = vmatprep.subr.mxu0 %v3467
    %v3469 = vand.u32 %v2586, 4294901760
    %v3470 = vsub.f32 %v2586, %v3469
    %v3471 = vand.u32 %v3470, 4294901760
    %3472 = vmatpush1.msra.mxu0 %v3471
    %v3473 = vand.u32 %v2589, 4294901760
    %v3474 = vsub.f32 %v2589, %v3473
    %v3475 = vand.u32 %v3474, 4294901760
    %3476 = vmatprep.subr.mxu0 %v3475
    %v3477 = vand.u32 %v2588, 4294901760
    %v3478 = vsub.f32 %v2588, %v3477
    %v3479 = vand.u32 %v3478, 4294901760
    %3480 = vmatpush1.msra.mxu0 %v3479
    %v3481 = vand.u32 %v2591, 4294901760
    %v3482 = vsub.f32 %v2591, %v3481
    %v3483 = vand.u32 %v3482, 4294901760
    %3484 = vmatprep.subr.mxu0 %v3483
    %v3485 = vand.u32 %v2590, 4294901760
    %v3486 = vsub.f32 %v2590, %v3485
    %v3487 = vand.u32 %v3486, 4294901760
    %3488 = vmatpush1.msra.mxu0 %v3487
    %v3489 = vand.u32 %v2593, 4294901760
    %v3490 = vsub.f32 %v2593, %v3489
    %v3491 = vand.u32 %v3490, 4294901760
    %3492 = vmatprep.subr.mxu0 %v3491
    %v3493 = vand.u32 %v2592, 4294901760
    %v3494 = vsub.f32 %v2592, %v3493
    %v3495 = vand.u32 %v3494, 4294901760
    %3496 = vmatpush1.msra.mxu0 %v3495
    %v3497 = vand.u32 %v2595, 4294901760
    %v3498 = vsub.f32 %v2595, %v3497
    %v3499 = vand.u32 %v3498, 4294901760
    %3500 = vmatprep.subr.mxu0 %v3499
    %v3501 = vand.u32 %v2594, 4294901760
    %v3502 = vsub.f32 %v2594, %v3501
    %v3503 = vand.u32 %v3502, 4294901760
    %3504 = vmatpush1.msra.mxu0 %v3503
    %v3505 = vand.u32 %v2597, 4294901760
    %v3506 = vsub.f32 %v2597, %v3505
    %v3507 = vand.u32 %v3506, 4294901760
    %3508 = vmatprep.subr.mxu0 %v3507
    %v3509 = vand.u32 %v2596, 4294901760
    %v3510 = vsub.f32 %v2596, %v3509
    %v3511 = vand.u32 %v3510, 4294901760
    %3512 = vmatpush1.msra.mxu0 %v3511
    %v3513 = vand.u32 %v2676, 4294901760
    %v3514 = vsub.f32 %v2676, %v3513
    %v3515 = vand.u32 %v3514, 4294901760
    %3516 = vmatprep.subr.mxu0 %v3515
    %v3517 = vand.u32 %v2673, 4294901760
    %v3518 = vsub.f32 %v2673, %v3517
    %v3519 = vand.u32 %v3518, 4294901760
    %3520 = vmatpush1.msra.mxu0 %v3519
    %3521 = vmatprep.subr.mxu0 0.0
    %3522 = vmatpush1.msra.mxu0 0.0
    %3523 = vmatprep.subr.mxu0 0.0
    %3524 = vmatpush1.msra.mxu0 0.0
    %3525 = vmatprep.subr.mxu0 0.0
    %3526 = vmatpush1.msra.mxu0 0.0
    %3527 = vmatprep.subr.mxu0 0.0
    %3528 = vmatpush1.msra.mxu0 0.0
    %3529 = vmatprep.subr.mxu0 0.0
    %3530 = vmatpush1.msra.mxu0 0.0
    %3531 = vmatprep.subr.mxu0 0.0
    %3532 = vmatpush1.msra.mxu0 0.0
    %3533 = vmatprep.subr.mxu0 0.0
    %3534 = vmatpush1.msra.mxu0 0.0
    %3535 = vmatprep.subr.mxu0 0.0
    %3536 = vmatpush1.msra.mxu0 0.0
    %3537 = vmatprep.subr.mxu0 0.0
    %3538 = vmatpush1.msra.mxu0 0.0
    %3539 = vmatprep.subr.mxu0 0.0
    %3540 = vmatpush1.msra.mxu0 0.0
    %3541 = vmatprep.subr.mxu0 0.0
    %3542 = vmatpush1.msra.mxu0 0.0
    %3543 = vmatprep.subr.mxu0 0.0
    %3544 = vmatpush1.msra.mxu0 0.0
    %3545 = vmatprep.subr.mxu0 0.0
    %3546 = vmatpush1.msra.mxu0 0.0
    %3547 = vmatprep.subr.mxu0 0.0
    %3548 = vmatpush1.msra.mxu0 0.0
    %3549 = vmatprep.subr.mxu0 0.0
    %3550 = vmatpush1.msra.mxu0 0.0
    %3551 = vmatprep.subr.mxu0 0.0
    %3552 = vmatpush1.msra.mxu0 0.0
    %3553 = vmatprep.subr.mxu0 0.0
    %3554 = vmatpush1.msra.mxu0 0.0
    %3555 = vmatprep.subr.mxu0 0.0
    %3556 = vmatpush1.msra.mxu0 0.0
    %3557 = vmatprep.subr.mxu0 0.0
    %3558 = vmatpush1.msra.mxu0 0.0
    %3559 = vmatprep.mubr.f32.mxu0 0.0
    %v3560 = vand.u32 %v2651, 4294901760
    %3561 = vmatmul.mubr.f32.gmra.mrb[0].mxu0 %v3560
    %v3562 = vpop.f32.mrb[0].mxu0
    %v3563 = vadd.f32 %v3359, %v3562
    %v3564 = vpop.f32.mrb[0].mxu0
    %v3565 = vadd.f32 %v3361, %v3564
    %3566 = vmatprep.mubr.f32.mxu0 0.0
    %v3567 = vand.u32 %v2654, 4294901760
    %3568 = vmatmul.mubr.f32.gmra.mrb[0].mxu0 %v3567
    %v3569 = vpop.f32.mrb[0].mxu0
    %v3570 = vadd.f32 %v3368, %v3569
    %v3571 = vpop.f32.mrb[0].mxu0
    %v3572 = vadd.f32 %v3370, %v3571
    %3573 = vmatprep.mubr.f32.mxu0 0.0
    %v3574 = vand.u32 %v2657, 4294901760
    %3575 = vmatmul.mubr.f32.gmra.mrb[0].mxu0 %v3574
    %v3576 = vpop.f32.mrb[0].mxu0
    %v3577 = vadd.f32 %v3377, %v3576
    %v3578 = vpop.f32.mrb[0].mxu0
    %v3579 = vadd.f32 %v3379, %v3578
    %3580 = vmatprep.mubr.f32.mxu0 0.0
    %v3581 = vand.u32 %v2660, 4294901760
    %3582 = vmatmul.mubr.f32.gmra.mrb[0].mxu0 %v3581
    %v3583 = vpop.f32.mrb[0].mxu0
    %v3584 = vadd.f32 %v3386, %v3583
    %v3585 = vpop.f32.mrb[0].mxu0
    %v3586 = vadd.f32 %v3388, %v3585
    %3587 = vmatprep.mubr.f32.mxu0 0.0
    %v3588 = vand.u32 %v2663, 4294901760
    %3589 = vmatmul.mubr.f32.gmra.mrb[0].mxu0 %v3588
    %v3590 = vpop.f32.mrb[0].mxu0
    %v3591 = vadd.f32 %v3395, %v3590
    %v3592 = vpop.f32.mrb[0].mxu0
    %v3593 = vadd.f32 %v3397, %v3592
    %3594 = vmatprep.mubr.f32.mxu0 0.0
    %v3595 = vand.u32 %v2666, 4294901760
    %3596 = vmatmul.mubr.f32.gmra.mrb[0].mxu0 %v3595
    %v3597 = vpop.f32.mrb[0].mxu0
    %v3598 = vadd.f32 %v3404, %v3597
    %v3599 = vpop.f32.mrb[0].mxu0
    %v3600 = vadd.f32 %v3406, %v3599
    %3601 = vmatprep.mubr.f32.mxu0 0.0
    %v3602 = vand.u32 %v2669, 4294901760
    %3603 = vmatmul.mubr.f32.gmra.mrb[0].mxu0 %v3602
    %v3604 = vpop.f32.mrb[0].mxu0
    %v3605 = vadd.f32 %v3413, %v3604
    %v3606 = vpop.f32.mrb[0].mxu0
    %v3607 = vadd.f32 %v3415, %v3606
    %3608 = vdwg.mxu0
    %v3609 = vand.u32 %v2575, 4294901760
    %3610 = vmatprep.subr.mxu0 %v3609
    %v3611 = vand.u32 %v2574, 4294901760
    %3612 = vmatpush1.msra.mxu0 %v3611
    %v3613 = vand.u32 %v2577, 4294901760
    %3614 = vmatprep.subr.mxu0 %v3613
    %v3615 = vand.u32 %v2576, 4294901760
    %3616 = vmatpush1.msra.mxu0 %v3615
    %v3617 = vand.u32 %v2579, 4294901760
    %3618 = vmatprep.subr.mxu0 %v3617
    %v3619 = vand.u32 %v2578, 4294901760
    %3620 = vmatpush1.msra.mxu0 %v3619
    %v3621 = vand.u32 %v2581, 4294901760
    %3622 = vmatprep.subr.mxu0 %v3621
    %v3623 = vand.u32 %v2580, 4294901760
    %3624 = vmatpush1.msra.mxu0 %v3623
    %v3625 = vand.u32 %v2583, 4294901760
    %3626 = vmatprep.subr.mxu0 %v3625
    %v3627 = vand.u32 %v2582, 4294901760
    %3628 = vmatpush1.msra.mxu0 %v3627
    %v3629 = vand.u32 %v2585, 4294901760
    %3630 = vmatprep.subr.mxu0 %v3629
    %v3631 = vand.u32 %v2584, 4294901760
    %3632 = vmatpush1.msra.mxu0 %v3631
    %v3633 = vand.u32 %v2587, 4294901760
    %3634 = vmatprep.subr.mxu0 %v3633
    %v3635 = vand.u32 %v2586, 4294901760
    %3636 = vmatpush1.msra.mxu0 %v3635
    %v3637 = vand.u32 %v2589, 4294901760
    %3638 = vmatprep.subr.mxu0 %v3637
    %v3639 = vand.u32 %v2588, 4294901760
    %3640 = vmatpush1.msra.mxu0 %v3639
    %v3641 = vand.u32 %v2591, 4294901760
    %3642 = vmatprep.subr.mxu0 %v3641
    %v3643 = vand.u32 %v2590, 4294901760
    %3644 = vmatpush1.msra.mxu0 %v3643
    %v3645 = vand.u32 %v2593, 4294901760
    %3646 = vmatprep.subr.mxu0 %v3645
    %v3647 = vand.u32 %v2592, 4294901760
    %3648 = vmatpush1.msra.mxu0 %v3647
    %v3649 = vand.u32 %v2595, 4294901760
    %3650 = vmatprep.subr.mxu0 %v3649
    %v3651 = vand.u32 %v2594, 4294901760
    %3652 = vmatpush1.msra.mxu0 %v3651
    %v3653 = vand.u32 %v2597, 4294901760
    %3654 = vmatprep.subr.mxu0 %v3653
    %v3655 = vand.u32 %v2596, 4294901760
    %3656 = vmatpush1.msra.mxu0 %v3655
    %v3657 = vand.u32 %v2676, 4294901760
    %3658 = vmatprep.subr.mxu0 %v3657
    %v3659 = vand.u32 %v2673, 4294901760
    %3660 = vmatpush1.msra.mxu0 %v3659
    %3661 = vmatprep.subr.mxu0 0.0
    %3662 = vmatpush1.msra.mxu0 0.0
    %3663 = vmatprep.subr.mxu0 0.0
    %3664 = vmatpush1.msra.mxu0 0.0
    %3665 = vmatprep.subr.mxu0 0.0
    %3666 = vmatpush1.msra.mxu0 0.0
    %3667 = vmatprep.subr.mxu0 0.0
    %3668 = vmatpush1.msra.mxu0 0.0
    %3669 = vmatprep.subr.mxu0 0.0
    %3670 = vmatpush1.msra.mxu0 0.0
    %3671 = vmatprep.subr.mxu0 0.0
    %3672 = vmatpush1.msra.mxu0 0.0
    %3673 = vmatprep.subr.mxu0 0.0
    %3674 = vmatpush1.msra.mxu0 0.0
    %3675 = vmatprep.subr.mxu0 0.0
    %3676 = vmatpush1.msra.mxu0 0.0
    %3677 = vmatprep.subr.mxu0 0.0
    %3678 = vmatpush1.msra.mxu0 0.0
    %3679 = vmatprep.subr.mxu0 0.0
    %3680 = vmatpush1.msra.mxu0 0.0
    %3681 = vmatprep.subr.mxu0 0.0
    %3682 = vmatpush1.msra.mxu0 0.0
    %3683 = vmatprep.subr.mxu0 0.0
    %3684 = vmatpush1.msra.mxu0 0.0
    %3685 = vmatprep.subr.mxu0 0.0
    %3686 = vmatpush1.msra.mxu0 0.0
    %3687 = vmatprep.subr.mxu0 0.0
    %3688 = vmatpush1.msra.mxu0 0.0
    %3689 = vmatprep.subr.mxu0 0.0
    %3690 = vmatpush1.msra.mxu0 0.0
    %3691 = vmatprep.subr.mxu0 0.0
    %3692 = vmatpush1.msra.mxu0 0.0
    %3693 = vmatprep.subr.mxu0 0.0
    %3694 = vmatpush1.msra.mxu0 0.0
    %3695 = vmatprep.subr.mxu0 0.0
    %3696 = vmatpush1.msra.mxu0 0.0
    %3697 = vmatprep.subr.mxu0 0.0
    %3698 = vmatpush1.msra.mxu0 0.0
    %3699 = vmatprep.mubr.f32.mxu0 0.0
    %v3700 = vand.u32 %v2651, 4294901760
    %3701 = vmatmul.mubr.f32.gmra.mrb[0].mxu0 %v3700
    %v3702 = vpop.f32.mrb[0].mxu0
    %v3703 = vadd.f32 %v3563, %v3702
    %v3704 = vpop.f32.mrb[0].mxu0
    %v3705 = vadd.f32 %v3565, %v3704
    %3706 = vmatprep.mubr.f32.mxu0 0.0
    %v3707 = vand.u32 %v2654, 4294901760
    %3708 = vmatmul.mubr.f32.gmra.mrb[0].mxu0 %v3707
    %v3709 = vpop.f32.mrb[0].mxu0
    %v3710 = vadd.f32 %v3570, %v3709
    %v3711 = vpop.f32.mrb[0].mxu0
    %v3712 = vadd.f32 %v3572, %v3711
    %3713 = vmatprep.mubr.f32.mxu0 0.0
    %v3714 = vand.u32 %v2657, 4294901760
    %3715 = vmatmul.mubr.f32.gmra.mrb[0].mxu0 %v3714
    %v3716 = vpop.f32.mrb[0].mxu0
    %v3717 = vadd.f32 %v3577, %v3716
    %v3718 = vpop.f32.mrb[0].mxu0
    %v3719 = vadd.f32 %v3579, %v3718
    %3720 = vmatprep.mubr.f32.mxu0 0.0
    %v3721 = vand.u32 %v2660, 4294901760
    %3722 = vmatmul.mubr.f32.gmra.mrb[0].mxu0 %v3721
    %v3723 = vpop.f32.mrb[0].mxu0
    %v3724 = vadd.f32 %v3584, %v3723
    %v3725 = vpop.f32.mrb[0].mxu0
    %v3726 = vadd.f32 %v3586, %v3725
    %3727 = vmatprep.mubr.f32.mxu0 0.0
    %v3728 = vand.u32 %v2663, 4294901760
    %3729 = vmatmul.mubr.f32.gmra.mrb[0].mxu0 %v3728
    %v3730 = vpop.f32.mrb[0].mxu0
    %v3731 = vadd.f32 %v3591, %v3730
    %v3732 = vpop.f32.mrb[0].mxu0
    %v3733 = vadd.f32 %v3593, %v3732
    %3734 = vmatprep.mubr.f32.mxu0 0.0
    %v3735 = vand.u32 %v2666, 4294901760
    %3736 = vmatmul.mubr.f32.gmra.mrb[0].mxu0 %v3735
    %v3737 = vpop.f32.mrb[0].mxu0
    %v3738 = vadd.f32 %v3598, %v3737
    %v3739 = vpop.f32.mrb[0].mxu0
    %v3740 = vadd.f32 %v3600, %v3739
    %3741 = vmatprep.mubr.f32.mxu0 0.0
    %v3742 = vand.u32 %v2669, 4294901760
    %3743 = vmatmul.mubr.f32.gmra.mrb[0].mxu0 %v3742
    %v3744 = vpop.f32.mrb[0].mxu0
    %v3745 = vadd.f32 %v3605, %v3744
    %v3746 = vpop.f32.mrb[0].mxu0
    %v3747 = vadd.f32 %v3607, %v3746
    %3748 = vdwg.mxu0
    %s3749 = sld [smem:[#allocation2 + $0x3]]
    %vm3750 = vcmp.ge.f32.partialorder %v3703, 0.0
    %vm3751 = vcmp.ge.f32.partialorder %v3705, 0.0
    %vm3752 = vcmp.ge.f32.partialorder %v3710, 0.0
    %vm3753 = vcmp.ge.f32.partialorder %v3712, 0.0
    %vm3754 = vcmp.ge.f32.partialorder %v3717, 0.0
    %vm3755 = vcmp.ge.f32.partialorder %v3719, 0.0
    %vm3756 = vcmp.ge.f32.partialorder %v3724, 0.0
    %vm3757 = vcmp.ge.f32.partialorder %v3726, 0.0
    %vm3758 = vcmp.ge.f32.partialorder %v3731, 0.0
    %vm3759 = vcmp.ge.f32.partialorder %v3733, 0.0
    %vm3760 = vcmp.ge.f32.partialorder %v3738, 0.0
    %vm3761 = vcmp.ge.f32.partialorder %v3740, 0.0
    %vm3762 = vcmp.ge.f32.partialorder %v3745, 0.0
    %vm3763 = vcmp.ge.f32.partialorder %v3747, 0.0
    %v3764 = vstv %s3749
    %v3765 = vmul.f32 %v3764, %v3703
    %v3766 = vmul.f32 %v3764, %v3705
    %v3767 = vmul.f32 %v3764, %v3710
    %v3768 = vmul.f32 %v3764, %v3712
    %v3769 = vmul.f32 %v3764, %v3717
    %v3770 = vmul.f32 %v3764, %v3719
    %v3771 = vmul.f32 %v3764, %v3724
    %v3772 = vmul.f32 %v3764, %v3726
    %v3773 = vmul.f32 %v3764, %v3731
    %v3774 = vmul.f32 %v3764, %v3733
    %v3775 = vmul.f32 %v3764, %v3738
    %v3776 = vmul.f32 %v3764, %v3740
    %v3777 = vmul.f32 %v3764, %v3745
    %v3778 = vmul.f32 %v3764, %v3747
    %v3779 = vsel %vm3750, %v3703, %v3765
    %v3780 = vsel %vm3751, %v3705, %v3766
    %v3781 = vsel %vm3752, %v3710, %v3767
    %v3782 = vsel %vm3753, %v3712, %v3768
    %v3783 = vsel %vm3754, %v3717, %v3769
    %v3784 = vsel %vm3755, %v3719, %v3770
    %v3785 = vsel %vm3756, %v3724, %v3771
    %v3786 = vsel %vm3757, %v3726, %v3772
    %v3787 = vsel %vm3758, %v3731, %v3773
    %v3788 = vsel %vm3759, %v3733, %v3774
    %v3789 = vsel %vm3760, %v3738, %v3775
    %v3790 = vsel %vm3761, %v3740, %v3776
    %v3791 = vsel %vm3762, %v3745, %v3777
    %v3792 = vsel %vm3763, %v3747, %v3778
    %v3793 = vld [vmem:[%s10] sm:$0xff]
    %v3794 = vld [vmem:[%s10 + $0x8] sm:$0xff]
    %v3795 = vld [vmem:[%s10 + $0x10] sm:$0xff]
    %v3796 = vld [vmem:[%s10 + $0x18] sm:$0xff]
    %v3797 = vld [vmem:[%s11] sm:$0xff]
    %v3798 = vld [vmem:[%s11 + $0x8] sm:$0xff]
    %v3799 = vld [vmem:[%s11 + $0x10] sm:$0xff]
    %v3800 = vld [vmem:[%s11 + $0x18] sm:$0xff]
    %3802 = vset.pattern.permute.xlu0 0
    %3803 = vperm.xlu0 %3802, %v3797
    %v3804 = vpop.permute.xlu0 %3803
    %3807 = vset.pattern.permute.xlu0 0
    %3808 = vperm.xlu0 %3807, %v3798
    %v3809 = vpop.permute.xlu0 %3808
    %3812 = vset.pattern.permute.xlu0 0
    %3813 = vperm.xlu0 %3812, %v3799
    %v3814 = vpop.permute.xlu0 %3813
    %3817 = vset.pattern.permute.xlu0 0
    %3818 = vperm.xlu0 %3817, %v3800
    %v3819 = vpop.permute.xlu0 %3818
    %v3822 = vsel %vm1264, %v3793, 0
    %v3825 = vsel %vm1264, %v3794, 0
    %v3828 = vsel %vm1264, %v3795, 0
    %v3831 = vsel %vm1264, %v3796, 0
    %v3834 = vsel %vm1304, %v3791, 0
    %v3837 = vsel %vm1304, %v3792, 0
    %v3839 = vand.u32 %v3780, 4294901760
    %3840 = vmatprep.subr.mxu0 %v3839
    %v3841 = vand.u32 %v3779, 4294901760
    %3842 = vmatpush1.msra.mxu0 %v3841
    %v3843 = vand.u32 %v3782, 4294901760
    %3844 = vmatprep.subr.mxu0 %v3843
    %v3845 = vand.u32 %v3781, 4294901760
    %3846 = vmatpush1.msra.mxu0 %v3845
    %v3847 = vand.u32 %v3784, 4294901760
    %3848 = vmatprep.subr.mxu0 %v3847
    %v3849 = vand.u32 %v3783, 4294901760
    %3850 = vmatpush1.msra.mxu0 %v3849
    %v3851 = vand.u32 %v3786, 4294901760
    %3852 = vmatprep.subr.mxu0 %v3851
    %v3853 = vand.u32 %v3785, 4294901760
    %3854 = vmatpush1.msra.mxu0 %v3853
    %v3855 = vand.u32 %v3788, 4294901760
    %3856 = vmatprep.subr.mxu0 %v3855
    %v3857 = vand.u32 %v3787, 4294901760
    %3858 = vmatpush1.msra.mxu0 %v3857
    %v3859 = vand.u32 %v3790, 4294901760
    %3860 = vmatprep.subr.mxu0 %v3859
    %v3861 = vand.u32 %v3789, 4294901760
    %3862 = vmatpush1.msra.mxu0 %v3861
    %v3863 = vand.u32 %v3837, 4294901760
    %3864 = vmatprep.subr.mxu0 %v3863
    %v3865 = vand.u32 %v3834, 4294901760
    %3866 = vmatpush1.msra.mxu0 %v3865
    %3867 = vmatprep.subr.mxu0 0.0
    %3868 = vmatpush1.msra.mxu0 0.0
    %3869 = vmatprep.subr.mxu0 0.0
    %3870 = vmatpush1.msra.mxu0 0.0
    %3871 = vmatprep.subr.mxu0 0.0
    %3872 = vmatpush1.msra.mxu0 0.0
    %3873 = vmatprep.subr.mxu0 0.0
    %3874 = vmatpush1.msra.mxu0 0.0
    %3875 = vmatprep.subr.mxu0 0.0
    %3876 = vmatpush1.msra.mxu0 0.0
    %3877 = vmatprep.subr.mxu0 0.0
    %3878 = vmatpush1.msra.mxu0 0.0
    %3879 = vmatprep.subr.mxu0 0.0
    %3880 = vmatpush1.msra.mxu0 0.0
    %3881 = vmatprep.subr.mxu0 0.0
    %3882 = vmatpush1.msra.mxu0 0.0
    %3883 = vmatprep.subr.mxu0 0.0
    %3884 = vmatpush1.msra.mxu0 0.0
    %3885 = vmatprep.subr.mxu0 0.0
    %3886 = vmatpush1.msra.mxu0 0.0
    %3887 = vmatprep.subr.mxu0 0.0
    %3888 = vmatpush1.msra.mxu0 0.0
    %3889 = vmatprep.subr.mxu0 0.0
    %3890 = vmatpush1.msra.mxu0 0.0
    %3891 = vmatprep.subr.mxu0 0.0
    %3892 = vmatpush1.msra.mxu0 0.0
    %3893 = vmatprep.subr.mxu0 0.0
    %3894 = vmatpush1.msra.mxu0 0.0
    %3895 = vmatprep.subr.mxu0 0.0
    %3896 = vmatpush1.msra.mxu0 0.0
    %3897 = vmatprep.subr.mxu0 0.0
    %3898 = vmatpush1.msra.mxu0 0.0
    %3899 = vmatprep.subr.mxu0 0.0
    %3900 = vmatpush1.msra.mxu0 0.0
    %3901 = vmatprep.subr.mxu0 0.0
    %3902 = vmatpush1.msra.mxu0 0.0
    %3903 = vmatprep.subr.mxu0 0.0
    %3904 = vmatpush1.msra.mxu0 0.0
    %3905 = vmatprep.subr.mxu0 0.0
    %3906 = vmatpush1.msra.mxu0 0.0
    %3907 = vmatprep.subr.mxu0 0.0
    %3908 = vmatpush1.msra.mxu0 0.0
    %3909 = vmatprep.subr.mxu0 0.0
    %3910 = vmatpush1.msra.mxu0 0.0
    %3911 = vmatprep.subr.mxu0 0.0
    %3912 = vmatpush1.msra.mxu0 0.0
    %3913 = vmatprep.subr.mxu0 0.0
    %3914 = vmatpush1.msra.mxu0 0.0
    %3915 = vmatprep.subr.mxu0 0.0
    %3916 = vmatpush1.msra.mxu0 0.0
    %3917 = vmatprep.mubr.f32.mxu0 0.0
    %v3918 = vand.u32 %v3822, 4294901760
    %v3919 = vsub.f32 %v3822, %v3918
    %v3920 = vand.u32 %v3919, 4294901760
    %v3921 = vsub.f32 %v3919, %v3920
    %v3922 = vand.u32 %v3921, 4294901760
    %3923 = vmatmul.mubr.f32.gmra.mrb[0].mxu0 %v3922
    %v3924 = vpop.f32.mrb[0].mxu0
    %v3925 = vadd.f32 %v3804, %v3924
    %v3926 = vpop.f32.mrb[0].mxu0
    %v3927 = vadd.f32 %v3804, %v3926
    %3928 = vmatprep.mubr.f32.mxu0 0.0
    %v3929 = vand.u32 %v3825, 4294901760
    %v3930 = vsub.f32 %v3825, %v3929
    %v3931 = vand.u32 %v3930, 4294901760
    %v3932 = vsub.f32 %v3930, %v3931
    %v3933 = vand.u32 %v3932, 4294901760
    %3934 = vmatmul.mubr.f32.gmra.mrb[0].mxu0 %v3933
    %v3935 = vpop.f32.mrb[0].mxu0
    %v3936 = vadd.f32 %v3809, %v3935
    %v3937 = vpop.f32.mrb[0].mxu0
    %v3938 = vadd.f32 %v3809, %v3937
    %3939 = vmatprep.mubr.f32.mxu0 0.0
    %v3940 = vand.u32 %v3828, 4294901760
    %v3941 = vsub.f32 %v3828, %v3940
    %v3942 = vand.u32 %v3941, 4294901760
    %v3943 = vsub.f32 %v3941, %v3942
    %v3944 = vand.u32 %v3943, 4294901760
    %3945 = vmatmul.mubr.f32.gmra.mrb[0].mxu0 %v3944
    %v3946 = vpop.f32.mrb[0].mxu0
    %v3947 = vadd.f32 %v3814, %v3946
    %v3948 = vpop.f32.mrb[0].mxu0
    %v3949 = vadd.f32 %v3814, %v3948
    %3950 = vmatprep.mubr.f32.mxu0 0.0
    %v3951 = vand.u32 %v3831, 4294901760
    %v3952 = vsub.f32 %v3831, %v3951
    %v3953 = vand.u32 %v3952, 4294901760
    %v3954 = vsub.f32 %v3952, %v3953
    %v3955 = vand.u32 %v3954, 4294901760
    %3956 = vmatmul.mubr.f32.gmra.mrb[0].mxu0 %v3955
    %v3957 = vpop.f32.mrb[0].mxu0
    %v3958 = vadd.f32 %v3819, %v3957
    %v3959 = vpop.f32.mrb[0].mxu0
    %v3960 = vadd.f32 %v3819, %v3959
    %3961 = vdwg.mxu0
    %v3962 = vand.u32 %v3780, 4294901760
    %v3963 = vsub.f32 %v3780, %v3962
    %v3964 = vand.u32 %v3963, 4294901760
    %v3965 = vsub.f32 %v3963, %v3964
    %v3966 = vand.u32 %v3965, 4294901760
    %3967 = vmatprep.subr.mxu0 %v3966
    %v3968 = vand.u32 %v3779, 4294901760
    %v3969 = vsub.f32 %v3779, %v3968
    %v3970 = vand.u32 %v3969, 4294901760
    %v3971 = vsub.f32 %v3969, %v3970
    %v3972 = vand.u32 %v3971, 4294901760
    %3973 = vmatpush1.msra.mxu0 %v3972
    %v3974 = vand.u32 %v3782, 4294901760
    %v3975 = vsub.f32 %v3782, %v3974
    %v3976 = vand.u32 %v3975, 4294901760
    %v3977 = vsub.f32 %v3975, %v3976
    %v3978 = vand.u32 %v3977, 4294901760
    %3979 = vmatprep.subr.mxu0 %v3978
    %v3980 = vand.u32 %v3781, 4294901760
    %v3981 = vsub.f32 %v3781, %v3980
    %v3982 = vand.u32 %v3981, 4294901760
    %v3983 = vsub.f32 %v3981, %v3982
    %v3984 = vand.u32 %v3983, 4294901760
    %3985 = vmatpush1.msra.mxu0 %v3984
    %v3986 = vand.u32 %v3784, 4294901760
    %v3987 = vsub.f32 %v3784, %v3986
    %v3988 = vand.u32 %v3987, 4294901760
    %v3989 = vsub.f32 %v3987, %v3988
    %v3990 = vand.u32 %v3989, 4294901760
    %3991 = vmatprep.subr.mxu0 %v3990
    %v3992 = vand.u32 %v3783, 4294901760
    %v3993 = vsub.f32 %v3783, %v3992
    %v3994 = vand.u32 %v3993, 4294901760
    %v3995 = vsub.f32 %v3993, %v3994
    %v3996 = vand.u32 %v3995, 4294901760
    %3997 = vmatpush1.msra.mxu0 %v3996
    %v3998 = vand.u32 %v3786, 4294901760
    %v3999 = vsub.f32 %v3786, %v3998
    %v4000 = vand.u32 %v3999, 4294901760
    %v4001 = vsub.f32 %v3999, %v4000
    %v4002 = vand.u32 %v4001, 4294901760
    %4003 = vmatprep.subr.mxu0 %v4002
    %v4004 = vand.u32 %v3785, 4294901760
    %v4005 = vsub.f32 %v3785, %v4004
    %v4006 = vand.u32 %v4005, 4294901760
    %v4007 = vsub.f32 %v4005, %v4006
    %v4008 = vand.u32 %v4007, 4294901760
    %4009 = vmatpush1.msra.mxu0 %v4008
    %v4010 = vand.u32 %v3788, 4294901760
    %v4011 = vsub.f32 %v3788, %v4010
    %v4012 = vand.u32 %v4011, 4294901760
    %v4013 = vsub.f32 %v4011, %v4012
    %v4014 = vand.u32 %v4013, 4294901760
    %4015 = vmatprep.subr.mxu0 %v4014
    %v4016 = vand.u32 %v3787, 4294901760
    %v4017 = vsub.f32 %v3787, %v4016
    %v4018 = vand.u32 %v4017, 4294901760
    %v4019 = vsub.f32 %v4017, %v4018
    %v4020 = vand.u32 %v4019, 4294901760
    %4021 = vmatpush1.msra.mxu0 %v4020
    %v4022 = vand.u32 %v3790, 4294901760
    %v4023 = vsub.f32 %v3790, %v4022
    %v4024 = vand.u32 %v4023, 4294901760
    %v4025 = vsub.f32 %v4023, %v4024
    %v4026 = vand.u32 %v4025, 4294901760
    %4027 = vmatprep.subr.mxu0 %v4026
    %v4028 = vand.u32 %v3789, 4294901760
    %v4029 = vsub.f32 %v3789, %v4028
    %v4030 = vand.u32 %v4029, 4294901760
    %v4031 = vsub.f32 %v4029, %v4030
    %v4032 = vand.u32 %v4031, 4294901760
    %4033 = vmatpush1.msra.mxu0 %v4032
    %v4034 = vand.u32 %v3837, 4294901760
    %v4035 = vsub.f32 %v3837, %v4034
    %v4036 = vand.u32 %v4035, 4294901760
    %v4037 = vsub.f32 %v4035, %v4036
    %v4038 = vand.u32 %v4037, 4294901760
    %4039 = vmatprep.subr.mxu0 %v4038
    %v4040 = vand.u32 %v3834, 4294901760
    %v4041 = vsub.f32 %v3834, %v4040
    %v4042 = vand.u32 %v4041, 4294901760
    %v4043 = vsub.f32 %v4041, %v4042
    %v4044 = vand.u32 %v4043, 4294901760
    %4045 = vmatpush1.msra.mxu0 %v4044
    %4046 = vmatprep.subr.mxu0 0.0
    %4047 = vmatpush1.msra.mxu0 0.0
    %4048 = vmatprep.subr.mxu0 0.0
    %4049 = vmatpush1.msra.mxu0 0.0
    %4050 = vmatprep.subr.mxu0 0.0
    %4051 = vmatpush1.msra.mxu0 0.0
    %4052 = vmatprep.subr.mxu0 0.0
    %4053 = vmatpush1.msra.mxu0 0.0
    %4054 = vmatprep.subr.mxu0 0.0
    %4055 = vmatpush1.msra.mxu0 0.0
    %4056 = vmatprep.subr.mxu0 0.0
    %4057 = vmatpush1.msra.mxu0 0.0
    %4058 = vmatprep.subr.mxu0 0.0
    %4059 = vmatpush1.msra.mxu0 0.0
    %4060 = vmatprep.subr.mxu0 0.0
    %4061 = vmatpush1.msra.mxu0 0.0
    %4062 = vmatprep.subr.mxu0 0.0
    %4063 = vmatpush1.msra.mxu0 0.0
    %4064 = vmatprep.subr.mxu0 0.0
    %4065 = vmatpush1.msra.mxu0 0.0
    %4066 = vmatprep.subr.mxu0 0.0
    %4067 = vmatpush1.msra.mxu0 0.0
    %4068 = vmatprep.subr.mxu0 0.0
    %4069 = vmatpush1.msra.mxu0 0.0
    %4070 = vmatprep.subr.mxu0 0.0
    %4071 = vmatpush1.msra.mxu0 0.0
    %4072 = vmatprep.subr.mxu0 0.0
    %4073 = vmatpush1.msra.mxu0 0.0
    %4074 = vmatprep.subr.mxu0 0.0
    %4075 = vmatpush1.msra.mxu0 0.0
    %4076 = vmatprep.subr.mxu0 0.0
    %4077 = vmatpush1.msra.mxu0 0.0
    %4078 = vmatprep.subr.mxu0 0.0
    %4079 = vmatpush1.msra.mxu0 0.0
    %4080 = vmatprep.subr.mxu0 0.0
    %4081 = vmatpush1.msra.mxu0 0.0
    %4082 = vmatprep.subr.mxu0 0.0
    %4083 = vmatpush1.msra.mxu0 0.0
    %4084 = vmatprep.subr.mxu0 0.0
    %4085 = vmatpush1.msra.mxu0 0.0
    %4086 = vmatprep.subr.mxu0 0.0
    %4087 = vmatpush1.msra.mxu0 0.0
    %4088 = vmatprep.subr.mxu0 0.0
    %4089 = vmatpush1.msra.mxu0 0.0
    %4090 = vmatprep.subr.mxu0 0.0
    %4091 = vmatpush1.msra.mxu0 0.0
    %4092 = vmatprep.subr.mxu0 0.0
    %4093 = vmatpush1.msra.mxu0 0.0
    %4094 = vmatprep.subr.mxu0 0.0
    %4095 = vmatpush1.msra.mxu0 0.0
    %4096 = vmatprep.mubr.f32.mxu0 0.0
    %v4097 = vand.u32 %v3822, 4294901760
    %4098 = vmatmul.mubr.f32.gmra.mrb[0].mxu0 %v4097
    %v4099 = vpop.f32.mrb[0].mxu0
    %v4100 = vadd.f32 %v3925, %v4099
    %v4101 = vpop.f32.mrb[0].mxu0
    %v4102 = vadd.f32 %v3927, %v4101
    %4103 = vmatprep.mubr.f32.mxu0 0.0
    %v4104 = vand.u32 %v3825, 4294901760
    %4105 = vmatmul.mubr.f32.gmra.mrb[0].mxu0 %v4104
    %v4106 = vpop.f32.mrb[0].mxu0
    %v4107 = vadd.f32 %v3936, %v4106
    %v4108 = vpop.f32.mrb[0].mxu0
    %v4109 = vadd.f32 %v3938, %v4108
    %4110 = vmatprep.mubr.f32.mxu0 0.0
    %v4111 = vand.u32 %v3828, 4294901760
    %4112 = vmatmul.mubr.f32.gmra.mrb[0].mxu0 %v4111
    %v4113 = vpop.f32.mrb[0].mxu0
    %v4114 = vadd.f32 %v3947, %v4113
    %v4115 = vpop.f32.mrb[0].mxu0
    %v4116 = vadd.f32 %v3949, %v4115
    %4117 = vmatprep.mubr.f32.mxu0 0.0
    %v4118 = vand.u32 %v3831, 4294901760
    %4119 = vmatmul.mubr.f32.gmra.mrb[0].mxu0 %v4118
    %v4120 = vpop.f32.mrb[0].mxu0
    %v4121 = vadd.f32 %v3958, %v4120
    %v4122 = vpop.f32.mrb[0].mxu0
    %v4123 = vadd.f32 %v3960, %v4122
    %4124 = vdwg.mxu0
    %v4125 = vand.u32 %v3780, 4294901760
    %v4126 = vsub.f32 %v3780, %v4125
    %4127 = vmatprep.subr.mxu0 %v4126
    %v4128 = vand.u32 %v3779, 4294901760
    %v4129 = vsub.f32 %v3779, %v4128
    %4130 = vmatpush1.msra.mxu0 %v4129
    %v4131 = vand.u32 %v3782, 4294901760
    %v4132 = vsub.f32 %v3782, %v4131
    %4133 = vmatprep.subr.mxu0 %v4132
    %v4134 = vand.u32 %v3781, 4294901760
    %v4135 = vsub.f32 %v3781, %v4134
    %4136 = vmatpush1.msra.mxu0 %v4135
    %v4137 = vand.u32 %v3784, 4294901760
    %v4138 = vsub.f32 %v3784, %v4137
    %4139 = vmatprep.subr.mxu0 %v4138
    %v4140 = vand.u32 %v3783, 4294901760
    %v4141 = vsub.f32 %v3783, %v4140
    %4142 = vmatpush1.msra.mxu0 %v4141
    %v4143 = vand.u32 %v3786, 4294901760
    %v4144 = vsub.f32 %v3786, %v4143
    %4145 = vmatprep.subr.mxu0 %v4144
    %v4146 = vand.u32 %v3785, 4294901760
    %v4147 = vsub.f32 %v3785, %v4146
    %4148 = vmatpush1.msra.mxu0 %v4147
    %v4149 = vand.u32 %v3788, 4294901760
    %v4150 = vsub.f32 %v3788, %v4149
    %4151 = vmatprep.subr.mxu0 %v4150
    %v4152 = vand.u32 %v3787, 4294901760
    %v4153 = vsub.f32 %v3787, %v4152
    %4154 = vmatpush1.msra.mxu0 %v4153
    %v4155 = vand.u32 %v3790, 4294901760
    %v4156 = vsub.f32 %v3790, %v4155
    %4157 = vmatprep.subr.mxu0 %v4156
    %v4158 = vand.u32 %v3789, 4294901760
    %v4159 = vsub.f32 %v3789, %v4158
    %4160 = vmatpush1.msra.mxu0 %v4159
    %v4161 = vand.u32 %v3837, 4294901760
    %v4162 = vsub.f32 %v3837, %v4161
    %4163 = vmatprep.subr.mxu0 %v4162
    %v4164 = vand.u32 %v3834, 4294901760
    %v4165 = vsub.f32 %v3834, %v4164
    %4166 = vmatpush1.msra.mxu0 %v4165
    %4167 = vmatprep.subr.mxu0 0.0
    %4168 = vmatpush1.msra.mxu0 0.0
    %4169 = vmatprep.subr.mxu0 0.0
    %4170 = vmatpush1.msra.mxu0 0.0
    %4171 = vmatprep.subr.mxu0 0.0
    %4172 = vmatpush1.msra.mxu0 0.0
    %4173 = vmatprep.subr.mxu0 0.0
    %4174 = vmatpush1.msra.mxu0 0.0
    %4175 = vmatprep.subr.mxu0 0.0
    %4176 = vmatpush1.msra.mxu0 0.0
    %4177 = vmatprep.subr.mxu0 0.0
    %4178 = vmatpush1.msra.mxu0 0.0
    %4179 = vmatprep.subr.mxu0 0.0
    %4180 = vmatpush1.msra.mxu0 0.0
    %4181 = vmatprep.subr.mxu0 0.0
    %4182 = vmatpush1.msra.mxu0 0.0
    %4183 = vmatprep.subr.mxu0 0.0
    %4184 = vmatpush1.msra.mxu0 0.0
    %4185 = vmatprep.subr.mxu0 0.0
    %4186 = vmatpush1.msra.mxu0 0.0
    %4187 = vmatprep.subr.mxu0 0.0
    %4188 = vmatpush1.msra.mxu0 0.0
    %4189 = vmatprep.subr.mxu0 0.0
    %4190 = vmatpush1.msra.mxu0 0.0
    %4191 = vmatprep.subr.mxu0 0.0
    %4192 = vmatpush1.msra.mxu0 0.0
    %4193 = vmatprep.subr.mxu0 0.0
    %4194 = vmatpush1.msra.mxu0 0.0
    %4195 = vmatprep.subr.mxu0 0.0
    %4196 = vmatpush1.msra.mxu0 0.0
    %4197 = vmatprep.subr.mxu0 0.0
    %4198 = vmatpush1.msra.mxu0 0.0
    %4199 = vmatprep.subr.mxu0 0.0
    %4200 = vmatpush1.msra.mxu0 0.0
    %4201 = vmatprep.subr.mxu0 0.0
    %4202 = vmatpush1.msra.mxu0 0.0
    %4203 = vmatprep.subr.mxu0 0.0
    %4204 = vmatpush1.msra.mxu0 0.0
    %4205 = vmatprep.subr.mxu0 0.0
    %4206 = vmatpush1.msra.mxu0 0.0
    %4207 = vmatprep.subr.mxu0 0.0
    %4208 = vmatpush1.msra.mxu0 0.0
    %4209 = vmatprep.subr.mxu0 0.0
    %4210 = vmatpush1.msra.mxu0 0.0
    %4211 = vmatprep.subr.mxu0 0.0
    %4212 = vmatpush1.msra.mxu0 0.0
    %4213 = vmatprep.subr.mxu0 0.0
    %4214 = vmatpush1.msra.mxu0 0.0
    %4215 = vmatprep.subr.mxu0 0.0
    %4216 = vmatpush1.msra.mxu0 0.0
    %4217 = vmatprep.mubr.f32.mxu0 0.0
    %v4218 = vand.u32 %v3822, 4294901760
    %v4219 = vsub.f32 %v3822, %v4218
    %4220 = vmatmul.mubr.f32.gmra.mrb[0].mxu0 %v4219
    %v4221 = vpop.f32.mrb[0].mxu0
    %v4222 = vadd.f32 %v4100, %v4221
    %v4223 = vpop.f32.mrb[0].mxu0
    %v4224 = vadd.f32 %v4102, %v4223
    %4225 = vmatprep.mubr.f32.mxu0 0.0
    %v4226 = vand.u32 %v3825, 4294901760
    %v4227 = vsub.f32 %v3825, %v4226
    %4228 = vmatmul.mubr.f32.gmra.mrb[0].mxu0 %v4227
    %v4229 = vpop.f32.mrb[0].mxu0
    %v4230 = vadd.f32 %v4107, %v4229
    %v4231 = vpop.f32.mrb[0].mxu0
    %v4232 = vadd.f32 %v4109, %v4231
    %4233 = vmatprep.mubr.f32.mxu0 0.0
    %v4234 = vand.u32 %v3828, 4294901760
    %v4235 = vsub.f32 %v3828, %v4234
    %4236 = vmatmul.mubr.f32.gmra.mrb[0].mxu0 %v4235
    %v4237 = vpop.f32.mrb[0].mxu0
    %v4238 = vadd.f32 %v4114, %v4237
    %v4239 = vpop.f32.mrb[0].mxu0
    %v4240 = vadd.f32 %v4116, %v4239
    %4241 = vmatprep.mubr.f32.mxu0 0.0
    %v4242 = vand.u32 %v3831, 4294901760
    %v4243 = vsub.f32 %v3831, %v4242
    %4244 = vmatmul.mubr.f32.gmra.mrb[0].mxu0 %v4243
    %v4245 = vpop.f32.mrb[0].mxu0
    %v4246 = vadd.f32 %v4121, %v4245
    %v4247 = vpop.f32.mrb[0].mxu0
    %v4248 = vadd.f32 %v4123, %v4247
    %4249 = vdwg.mxu0
    %v4250 = vand.u32 %v3780, 4294901760
    %4251 = vmatprep.subr.mxu0 %v4250
    %v4252 = vand.u32 %v3779, 4294901760
    %4253 = vmatpush1.msra.mxu0 %v4252
    %v4254 = vand.u32 %v3782, 4294901760
    %4255 = vmatprep.subr.mxu0 %v4254
    %v4256 = vand.u32 %v3781, 4294901760
    %4257 = vmatpush1.msra.mxu0 %v4256
    %v4258 = vand.u32 %v3784, 4294901760
    %4259 = vmatprep.subr.mxu0 %v4258
    %v4260 = vand.u32 %v3783, 4294901760
    %4261 = vmatpush1.msra.mxu0 %v4260
    %v4262 = vand.u32 %v3786, 4294901760
    %4263 = vmatprep.subr.mxu0 %v4262
    %v4264 = vand.u32 %v3785, 4294901760
    %4265 = vmatpush1.msra.mxu0 %v4264
    %v4266 = vand.u32 %v3788, 4294901760
    %4267 = vmatprep.subr.mxu0 %v4266
    %v4268 = vand.u32 %v3787, 4294901760
    %4269 = vmatpush1.msra.mxu0 %v4268
    %v4270 = vand.u32 %v3790, 4294901760
    %4271 = vmatprep.subr.mxu0 %v4270
    %v4272 = vand.u32 %v3789, 4294901760
    %4273 = vmatpush1.msra.mxu0 %v4272
    %v4274 = vand.u32 %v3837, 4294901760
    %4275 = vmatprep.subr.mxu0 %v4274
    %v4276 = vand.u32 %v3834, 4294901760
    %4277 = vmatpush1.msra.mxu0 %v4276
    %4278 = vmatprep.subr.mxu0 0.0
    %4279 = vmatpush1.msra.mxu0 0.0
    %4280 = vmatprep.subr.mxu0 0.0
    %4281 = vmatpush1.msra.mxu0 0.0
    %4282 = vmatprep.subr.mxu0 0.0
    %4283 = vmatpush1.msra.mxu0 0.0
    %4284 = vmatprep.subr.mxu0 0.0
    %4285 = vmatpush1.msra.mxu0 0.0
    %4286 = vmatprep.subr.mxu0 0.0
    %4287 = vmatpush1.msra.mxu0 0.0
    %4288 = vmatprep.subr.mxu0 0.0
    %4289 = vmatpush1.msra.mxu0 0.0
    %4290 = vmatprep.subr.mxu0 0.0
    %4291 = vmatpush1.msra.mxu0 0.0
    %4292 = vmatprep.subr.mxu0 0.0
    %4293 = vmatpush1.msra.mxu0 0.0
    %4294 = vmatprep.subr.mxu0 0.0
    %4295 = vmatpush1.msra.mxu0 0.0
    %4296 = vmatprep.subr.mxu0 0.0
    %4297 = vmatpush1.msra.mxu0 0.0
    %4298 = vmatprep.subr.mxu0 0.0
    %4299 = vmatpush1.msra.mxu0 0.0
    %4300 = vmatprep.subr.mxu0 0.0
    %4301 = vmatpush1.msra.mxu0 0.0
    %4302 = vmatprep.subr.mxu0 0.0
    %4303 = vmatpush1.msra.mxu0 0.0
    %4304 = vmatprep.subr.mxu0 0.0
    %4305 = vmatpush1.msra.mxu0 0.0
    %4306 = vmatprep.subr.mxu0 0.0
    %4307 = vmatpush1.msra.mxu0 0.0
    %4308 = vmatprep.subr.mxu0 0.0
    %4309 = vmatpush1.msra.mxu0 0.0
    %4310 = vmatprep.subr.mxu0 0.0
    %4311 = vmatpush1.msra.mxu0 0.0
    %4312 = vmatprep.subr.mxu0 0.0
    %4313 = vmatpush1.msra.mxu0 0.0
    %4314 = vmatprep.subr.mxu0 0.0
    %4315 = vmatpush1.msra.mxu0 0.0
    %4316 = vmatprep.subr.mxu0 0.0
    %4317 = vmatpush1.msra.mxu0 0.0
    %4318 = vmatprep.subr.mxu0 0.0
    %4319 = vmatpush1.msra.mxu0 0.0
    %4320 = vmatprep.subr.mxu0 0.0
    %4321 = vmatpush1.msra.mxu0 0.0
    %4322 = vmatprep.subr.mxu0 0.0
    %4323 = vmatpush1.msra.mxu0 0.0
    %4324 = vmatprep.subr.mxu0 0.0
    %4325 = vmatpush1.msra.mxu0 0.0
    %4326 = vmatprep.subr.mxu0 0.0
    %4327 = vmatpush1.msra.mxu0 0.0
    %4328 = vmatprep.mubr.f32.mxu0 0.0
    %v4329 = vand.u32 %v3822, 4294901760
    %v4330 = vsub.f32 %v3822, %v4329
    %v4331 = vand.u32 %v4330, 4294901760
    %4332 = vmatmul.mubr.f32.gmra.mrb[0].mxu0 %v4331
    %v4333 = vpop.f32.mrb[0].mxu0
    %v4334 = vadd.f32 %v4222, %v4333
    %v4335 = vpop.f32.mrb[0].mxu0
    %v4336 = vadd.f32 %v4224, %v4335
    %4337 = vmatprep.mubr.f32.mxu0 0.0
    %v4338 = vand.u32 %v3825, 4294901760
    %v4339 = vsub.f32 %v3825, %v4338
    %v4340 = vand.u32 %v4339, 4294901760
    %4341 = vmatmul.mubr.f32.gmra.mrb[0].mxu0 %v4340
    %v4342 = vpop.f32.mrb[0].mxu0
    %v4343 = vadd.f32 %v4230, %v4342
    %v4344 = vpop.f32.mrb[0].mxu0
    %v4345 = vadd.f32 %v4232, %v4344
    %4346 = vmatprep.mubr.f32.mxu0 0.0
    %v4347 = vand.u32 %v3828, 4294901760
    %v4348 = vsub.f32 %v3828, %v4347
    %v4349 = vand.u32 %v4348, 4294901760
    %4350 = vmatmul.mubr.f32.gmra.mrb[0].mxu0 %v4349
    %v4351 = vpop.f32.mrb[0].mxu0
    %v4352 = vadd.f32 %v4238, %v4351
    %v4353 = vpop.f32.mrb[0].mxu0
    %v4354 = vadd.f32 %v4240, %v4353
    %4355 = vmatprep.mubr.f32.mxu0 0.0
    %v4356 = vand.u32 %v3831, 4294901760
    %v4357 = vsub.f32 %v3831, %v4356
    %v4358 = vand.u32 %v4357, 4294901760
    %4359 = vmatmul.mubr.f32.gmra.mrb[0].mxu0 %v4358
    %v4360 = vpop.f32.mrb[0].mxu0
    %v4361 = vadd.f32 %v4246, %v4360
    %v4362 = vpop.f32.mrb[0].mxu0
    %v4363 = vadd.f32 %v4248, %v4362
    %4364 = vdwg.mxu0
    %v4365 = vand.u32 %v3780, 4294901760
    %v4366 = vsub.f32 %v3780, %v4365
    %v4367 = vand.u32 %v4366, 4294901760
    %4368 = vmatprep.subr.mxu0 %v4367
    %v4369 = vand.u32 %v3779, 4294901760
    %v4370 = vsub.f32 %v3779, %v4369
    %v4371 = vand.u32 %v4370, 4294901760
    %4372 = vmatpush1.msra.mxu0 %v4371
    %v4373 = vand.u32 %v3782, 4294901760
    %v4374 = vsub.f32 %v3782, %v4373
    %v4375 = vand.u32 %v4374, 4294901760
    %4376 = vmatprep.subr.mxu0 %v4375
    %v4377 = vand.u32 %v3781, 4294901760
    %v4378 = vsub.f32 %v3781, %v4377
    %v4379 = vand.u32 %v4378, 4294901760
    %4380 = vmatpush1.msra.mxu0 %v4379
    %v4381 = vand.u32 %v3784, 4294901760
    %v4382 = vsub.f32 %v3784, %v4381
    %v4383 = vand.u32 %v4382, 4294901760
    %4384 = vmatprep.subr.mxu0 %v4383
    %v4385 = vand.u32 %v3783, 4294901760
    %v4386 = vsub.f32 %v3783, %v4385
    %v4387 = vand.u32 %v4386, 4294901760
    %4388 = vmatpush1.msra.mxu0 %v4387
    %v4389 = vand.u32 %v3786, 4294901760
    %v4390 = vsub.f32 %v3786, %v4389
    %v4391 = vand.u32 %v4390, 4294901760
    %4392 = vmatprep.subr.mxu0 %v4391
    %v4393 = vand.u32 %v3785, 4294901760
    %v4394 = vsub.f32 %v3785, %v4393
    %v4395 = vand.u32 %v4394, 4294901760
    %4396 = vmatpush1.msra.mxu0 %v4395
    %v4397 = vand.u32 %v3788, 4294901760
    %v4398 = vsub.f32 %v3788, %v4397
    %v4399 = vand.u32 %v4398, 4294901760
    %4400 = vmatprep.subr.mxu0 %v4399
    %v4401 = vand.u32 %v3787, 4294901760
    %v4402 = vsub.f32 %v3787, %v4401
    %v4403 = vand.u32 %v4402, 4294901760
    %4404 = vmatpush1.msra.mxu0 %v4403
    %v4405 = vand.u32 %v3790, 4294901760
    %v4406 = vsub.f32 %v3790, %v4405
    %v4407 = vand.u32 %v4406, 4294901760
    %4408 = vmatprep.subr.mxu0 %v4407
    %v4409 = vand.u32 %v3789, 4294901760
    %v4410 = vsub.f32 %v3789, %v4409
    %v4411 = vand.u32 %v4410, 4294901760
    %4412 = vmatpush1.msra.mxu0 %v4411
    %v4413 = vand.u32 %v3837, 4294901760
    %v4414 = vsub.f32 %v3837, %v4413
    %v4415 = vand.u32 %v4414, 4294901760
    %4416 = vmatprep.subr.mxu0 %v4415
    %v4417 = vand.u32 %v3834, 4294901760
    %v4418 = vsub.f32 %v3834, %v4417
    %v4419 = vand.u32 %v4418, 4294901760
    %4420 = vmatpush1.msra.mxu0 %v4419
    %4421 = vmatprep.subr.mxu0 0.0
    %4422 = vmatpush1.msra.mxu0 0.0
    %4423 = vmatprep.subr.mxu0 0.0
    %4424 = vmatpush1.msra.mxu0 0.0
    %4425 = vmatprep.subr.mxu0 0.0
    %4426 = vmatpush1.msra.mxu0 0.0
    %4427 = vmatprep.subr.mxu0 0.0
    %4428 = vmatpush1.msra.mxu0 0.0
    %4429 = vmatprep.subr.mxu0 0.0
    %4430 = vmatpush1.msra.mxu0 0.0
    %4431 = vmatprep.subr.mxu0 0.0
    %4432 = vmatpush1.msra.mxu0 0.0
    %4433 = vmatprep.subr.mxu0 0.0
    %4434 = vmatpush1.msra.mxu0 0.0
    %4435 = vmatprep.subr.mxu0 0.0
    %4436 = vmatpush1.msra.mxu0 0.0
    %4437 = vmatprep.subr.mxu0 0.0
    %4438 = vmatpush1.msra.mxu0 0.0
    %4439 = vmatprep.subr.mxu0 0.0
    %4440 = vmatpush1.msra.mxu0 0.0
    %4441 = vmatprep.subr.mxu0 0.0
    %4442 = vmatpush1.msra.mxu0 0.0
    %4443 = vmatprep.subr.mxu0 0.0
    %4444 = vmatpush1.msra.mxu0 0.0
    %4445 = vmatprep.subr.mxu0 0.0
    %4446 = vmatpush1.msra.mxu0 0.0
    %4447 = vmatprep.subr.mxu0 0.0
    %4448 = vmatpush1.msra.mxu0 0.0
    %4449 = vmatprep.subr.mxu0 0.0
    %4450 = vmatpush1.msra.mxu0 0.0
    %4451 = vmatprep.subr.mxu0 0.0
    %4452 = vmatpush1.msra.mxu0 0.0
    %4453 = vmatprep.subr.mxu0 0.0
    %4454 = vmatpush1.msra.mxu0 0.0
    %4455 = vmatprep.subr.mxu0 0.0
    %4456 = vmatpush1.msra.mxu0 0.0
    %4457 = vmatprep.subr.mxu0 0.0
    %4458 = vmatpush1.msra.mxu0 0.0
    %4459 = vmatprep.subr.mxu0 0.0
    %4460 = vmatpush1.msra.mxu0 0.0
    %4461 = vmatprep.subr.mxu0 0.0
    %4462 = vmatpush1.msra.mxu0 0.0
    %4463 = vmatprep.subr.mxu0 0.0
    %4464 = vmatpush1.msra.mxu0 0.0
    %4465 = vmatprep.subr.mxu0 0.0
    %4466 = vmatpush1.msra.mxu0 0.0
    %4467 = vmatprep.subr.mxu0 0.0
    %4468 = vmatpush1.msra.mxu0 0.0
    %4469 = vmatprep.subr.mxu0 0.0
    %4470 = vmatpush1.msra.mxu0 0.0
    %4471 = vmatprep.mubr.f32.mxu0 0.0
    %v4472 = vand.u32 %v3822, 4294901760
    %4473 = vmatmul.mubr.f32.gmra.mrb[0].mxu0 %v4472
    %v4474 = vpop.f32.mrb[0].mxu0
    %v4475 = vadd.f32 %v4334, %v4474
    %v4476 = vpop.f32.mrb[0].mxu0
    %v4477 = vadd.f32 %v4336, %v4476
    %4478 = vmatprep.mubr.f32.mxu0 0.0
    %v4479 = vand.u32 %v3825, 4294901760
    %4480 = vmatmul.mubr.f32.gmra.mrb[0].mxu0 %v4479
    %v4481 = vpop.f32.mrb[0].mxu0
    %v4482 = vadd.f32 %v4343, %v4481
    %v4483 = vpop.f32.mrb[0].mxu0
    %v4484 = vadd.f32 %v4345, %v4483
    %4485 = vmatprep.mubr.f32.mxu0 0.0
    %v4486 = vand.u32 %v3828, 4294901760
    %4487 = vmatmul.mubr.f32.gmra.mrb[0].mxu0 %v4486
    %v4488 = vpop.f32.mrb[0].mxu0
    %v4489 = vadd.f32 %v4352, %v4488
    %v4490 = vpop.f32.mrb[0].mxu0
    %v4491 = vadd.f32 %v4354, %v4490
    %4492 = vmatprep.mubr.f32.mxu0 0.0
    %v4493 = vand.u32 %v3831, 4294901760
    %4494 = vmatmul.mubr.f32.gmra.mrb[0].mxu0 %v4493
    %v4495 = vpop.f32.mrb[0].mxu0
    %v4496 = vadd.f32 %v4361, %v4495
    %v4497 = vpop.f32.mrb[0].mxu0
    %v4498 = vadd.f32 %v4363, %v4497
    %4499 = vdwg.mxu0
    %v4500 = vand.u32 %v3780, 4294901760
    %4501 = vmatprep.subr.mxu0 %v4500
    %v4502 = vand.u32 %v3779, 4294901760
    %4503 = vmatpush1.msra.mxu0 %v4502
    %v4504 = vand.u32 %v3782, 4294901760
    %4505 = vmatprep.subr.mxu0 %v4504
    %v4506 = vand.u32 %v3781, 4294901760
    %4507 = vmatpush1.msra.mxu0 %v4506
    %v4508 = vand.u32 %v3784, 4294901760
    %4509 = vmatprep.subr.mxu0 %v4508
    %v4510 = vand.u32 %v3783, 4294901760
    %4511 = vmatpush1.msra.mxu0 %v4510
    %v4512 = vand.u32 %v3786, 4294901760
    %4513 = vmatprep.subr.mxu0 %v4512
    %v4514 = vand.u32 %v3785, 4294901760
    %4515 = vmatpush1.msra.mxu0 %v4514
    %v4516 = vand.u32 %v3788, 4294901760
    %4517 = vmatprep.subr.mxu0 %v4516
    %v4518 = vand.u32 %v3787, 4294901760
    %4519 = vmatpush1.msra.mxu0 %v4518
    %v4520 = vand.u32 %v3790, 4294901760
    %4521 = vmatprep.subr.mxu0 %v4520
    %v4522 = vand.u32 %v3789, 4294901760
    %4523 = vmatpush1.msra.mxu0 %v4522
    %v4524 = vand.u32 %v3837, 4294901760
    %4525 = vmatprep.subr.mxu0 %v4524
    %v4526 = vand.u32 %v3834, 4294901760
    %4527 = vmatpush1.msra.mxu0 %v4526
    %4528 = vmatprep.subr.mxu0 0.0
    %4529 = vmatpush1.msra.mxu0 0.0
    %4530 = vmatprep.subr.mxu0 0.0
    %4531 = vmatpush1.msra.mxu0 0.0
    %4532 = vmatprep.subr.mxu0 0.0
    %4533 = vmatpush1.msra.mxu0 0.0
    %4534 = vmatprep.subr.mxu0 0.0
    %4535 = vmatpush1.msra.mxu0 0.0
    %4536 = vmatprep.subr.mxu0 0.0
    %4537 = vmatpush1.msra.mxu0 0.0
    %4538 = vmatprep.subr.mxu0 0.0
    %4539 = vmatpush1.msra.mxu0 0.0
    %4540 = vmatprep.subr.mxu0 0.0
    %4541 = vmatpush1.msra.mxu0 0.0
    %4542 = vmatprep.subr.mxu0 0.0
    %4543 = vmatpush1.msra.mxu0 0.0
    %4544 = vmatprep.subr.mxu0 0.0
    %4545 = vmatpush1.msra.mxu0 0.0
    %4546 = vmatprep.subr.mxu0 0.0
    %4547 = vmatpush1.msra.mxu0 0.0
    %4548 = vmatprep.subr.mxu0 0.0
    %4549 = vmatpush1.msra.mxu0 0.0
    %4550 = vmatprep.subr.mxu0 0.0
    %4551 = vmatpush1.msra.mxu0 0.0
    %4552 = vmatprep.subr.mxu0 0.0
    %4553 = vmatpush1.msra.mxu0 0.0
    %4554 = vmatprep.subr.mxu0 0.0
    %4555 = vmatpush1.msra.mxu0 0.0
    %4556 = vmatprep.subr.mxu0 0.0
    %4557 = vmatpush1.msra.mxu0 0.0
    %4558 = vmatprep.subr.mxu0 0.0
    %4559 = vmatpush1.msra.mxu0 0.0
    %4560 = vmatprep.subr.mxu0 0.0
    %4561 = vmatpush1.msra.mxu0 0.0
    %4562 = vmatprep.subr.mxu0 0.0
    %4563 = vmatpush1.msra.mxu0 0.0
    %4564 = vmatprep.subr.mxu0 0.0
    %4565 = vmatpush1.msra.mxu0 0.0
    %4566 = vmatprep.subr.mxu0 0.0
    %4567 = vmatpush1.msra.mxu0 0.0
    %4568 = vmatprep.subr.mxu0 0.0
    %4569 = vmatpush1.msra.mxu0 0.0
    %4570 = vmatprep.subr.mxu0 0.0
    %4571 = vmatpush1.msra.mxu0 0.0
    %4572 = vmatprep.subr.mxu0 0.0
    %4573 = vmatpush1.msra.mxu0 0.0
    %4574 = vmatprep.subr.mxu0 0.0
    %4575 = vmatpush1.msra.mxu0 0.0
    %4576 = vmatprep.subr.mxu0 0.0
    %4577 = vmatpush1.msra.mxu0 0.0
    %4578 = vmatprep.mubr.f32.mxu0 0.0
    %v4579 = vand.u32 %v3822, 4294901760
    %4580 = vmatmul.mubr.f32.gmra.mrb[0].mxu0 %v4579
    %v4581 = vpop.f32.mrb[0].mxu0
    %v4582 = vadd.f32 %v4475, %v4581
    %v4583 = vpop.f32.mrb[0].mxu0
    %v4584 = vadd.f32 %v4477, %v4583
    %4585 = vmatprep.mubr.f32.mxu0 0.0
    %v4586 = vand.u32 %v3825, 4294901760
    %4587 = vmatmul.mubr.f32.gmra.mrb[0].mxu0 %v4586
    %v4588 = vpop.f32.mrb[0].mxu0
    %v4589 = vadd.f32 %v4482, %v4588
    %v4590 = vpop.f32.mrb[0].mxu0
    %v4591 = vadd.f32 %v4484, %v4590
    %4592 = vmatprep.mubr.f32.mxu0 0.0
    %v4593 = vand.u32 %v3828, 4294901760
    %4594 = vmatmul.mubr.f32.gmra.mrb[0].mxu0 %v4593
    %v4595 = vpop.f32.mrb[0].mxu0
    %v4596 = vadd.f32 %v4489, %v4595
    %v4597 = vpop.f32.mrb[0].mxu0
    %v4598 = vadd.f32 %v4491, %v4597
    %4599 = vmatprep.mubr.f32.mxu0 0.0
    %v4600 = vand.u32 %v3831, 4294901760
    %4601 = vmatmul.mubr.f32.gmra.mrb[0].mxu0 %v4600
    %v4602 = vpop.f32.mrb[0].mxu0
    %v4603 = vadd.f32 %v4496, %v4602
    %v4604 = vpop.f32.mrb[0].mxu0
    %v4605 = vadd.f32 %v4498, %v4604
    %4606 = vdwg.mxu0
    %4607 = vxpose.xlu0.b32.start [1/16] %v4582, 128
    %4608 = vxpose.xlu0.b32.cont [2/16] %v4589, 128
    %4609 = vxpose.xlu0.b32.cont [3/16] %v4596, 128
    %4610 = vxpose.xlu0.b32.cont [4/16] %v4603, 128
    %4611 = vxpose.xlu0.b32.cont [5/16] 0.0, 128
    %4612 = vxpose.xlu0.b32.cont [6/16] 0.0, 128
    %4613 = vxpose.xlu0.b32.cont [7/16] 0.0, 128
    %4614 = vxpose.xlu0.b32.cont [8/16] 0.0, 128
    %4615 = vxpose.xlu0.b32.cont [9/16] 0.0, 128
    %4616 = vxpose.xlu0.b32.cont [10/16] 0.0, 128
    %4617 = vxpose.xlu0.b32.cont [11/16] 0.0, 128
    %4618 = vxpose.xlu0.b32.cont [12/16] 0.0, 128
    %4619 = vxpose.xlu0.b32.cont [13/16] 0.0, 128
    %4620 = vxpose.xlu0.b32.cont [14/16] 0.0, 128
    %4621 = vxpose.xlu0.b32.cont [15/16] 0.0, 128
    %4622 = vxpose.xlu0.b32.end [16/16] 0.0, 128
    %v4623 = vpop.trf.xlu0
    %v4624 = vpop.trf.xlu0
    %v4625 = vpop.trf.xlu0
    %v4626 = vpop.trf.xlu0
    %v4627 = vpop.trf.xlu0
    %v4628 = vpop.trf.xlu0
    %v4629 = vpop.trf.xlu0
    %v4630 = vpop.trf.xlu0
    %v4631 = vpop.trf.xlu0
    %v4632 = vpop.trf.xlu0
    %v4633 = vpop.trf.xlu0
    %v4634 = vpop.trf.xlu0
    %v4635 = vpop.trf.xlu0
    %v4636 = vpop.trf.xlu0
    %v4637 = vpop.trf.xlu0
    %v4638 = vpop.trf.xlu0
    %4639 = vxpose.xlu0.b32.start [1/16] %v4584, 128
    %4640 = vxpose.xlu0.b32.cont [2/16] %v4591, 128
    %4641 = vxpose.xlu0.b32.cont [3/16] %v4598, 128
    %4642 = vxpose.xlu0.b32.cont [4/16] %v4605, 128
    %4643 = vxpose.xlu0.b32.cont [5/16] 0.0, 128
    %4644 = vxpose.xlu0.b32.cont [6/16] 0.0, 128
    %4645 = vxpose.xlu0.b32.cont [7/16] 0.0, 128
    %4646 = vxpose.xlu0.b32.cont [8/16] 0.0, 128
    %4647 = vxpose.xlu0.b32.cont [9/16] 0.0, 128
    %4648 = vxpose.xlu0.b32.cont [10/16] 0.0, 128
    %4649 = vxpose.xlu0.b32.cont [11/16] 0.0, 128
    %4650 = vxpose.xlu0.b32.cont [12/16] 0.0, 128
    %4651 = vxpose.xlu0.b32.cont [13/16] 0.0, 128
    %4652 = vxpose.xlu0.b32.cont [14/16] 0.0, 128
    %4653 = vxpose.xlu0.b32.cont [15/16] 0.0, 128
    %4654 = vxpose.xlu0.b32.end [16/16] 0.0, 128
    %v4655 = vpop.trf.xlu0
    %v4656 = vpop.trf.xlu0
    %v4657 = vpop.trf.xlu0
    %v4658 = vpop.trf.xlu0
    %v4659 = vpop.trf.xlu0
    %v4660 = vpop.trf.xlu0
    %v4661 = vpop.trf.xlu0
    %v4662 = vpop.trf.xlu0
    %v4663 = vpop.trf.xlu0
    %v4664 = vpop.trf.xlu0
    %v4665 = vpop.trf.xlu0
    %v4666 = vpop.trf.xlu0
    %v4667 = vpop.trf.xlu0
    %v4668 = vpop.trf.xlu0
    %v4669 = vpop.trf.xlu0
    %v4670 = vpop.trf.xlu0
    %vm4671 = vcmask 261120
    %4672 = vst.msk [vmem:[%s12] sm:$0xff] %vm4671, %v4623
    %4673 = vst.msk [vmem:[%s12 + $0x8] sm:$0xff] %vm4671, %v4624
    %4674 = vst.msk [vmem:[%s12 + $0x10] sm:$0xff] %vm4671, %v4625
    %4675 = vst.msk [vmem:[%s12 + $0x18] sm:$0xff] %vm4671, %v4626
    %4676 = vst.msk [vmem:[%s12 + $0x20] sm:$0xff] %vm4671, %v4627
    %4677 = vst.msk [vmem:[%s12 + $0x28] sm:$0xff] %vm4671, %v4628
    %4678 = vst.msk [vmem:[%s12 + $0x30] sm:$0xff] %vm4671, %v4629
    %4679 = vst.msk [vmem:[%s12 + $0x38] sm:$0xff] %vm4671, %v4630
    %4680 = vst.msk [vmem:[%s12 + $0x40] sm:$0xff] %vm4671, %v4631
    %4681 = vst.msk [vmem:[%s12 + $0x48] sm:$0xff] %vm4671, %v4632
    %4682 = vst.msk [vmem:[%s12 + $0x50] sm:$0xff] %vm4671, %v4633
    %4683 = vst.msk [vmem:[%s12 + $0x58] sm:$0xff] %vm4671, %v4634
    %4684 = vst.msk [vmem:[%s12 + $0x60] sm:$0xff] %vm4671, %v4635
    %4685 = vst.msk [vmem:[%s12 + $0x68] sm:$0xff] %vm4671, %v4636
    %4686 = vst.msk [vmem:[%s12 + $0x70] sm:$0xff] %vm4671, %v4637
    %4687 = vst.msk [vmem:[%s12 + $0x78] sm:$0xff] %vm4671, %v4638
    %4688 = vst.msk [vmem:[%s12 + $0x80] sm:$0xff] %vm4671, %v4655
    %4689 = vst.msk [vmem:[%s12 + $0x88] sm:$0xff] %vm4671, %v4656
    %4690 = vst.msk [vmem:[%s12 + $0x90] sm:$0xff] %vm4671, %v4657
    %4691 = vst.msk [vmem:[%s12 + $0x98] sm:$0xff] %vm4671, %v4658
    %4692 = vst.msk [vmem:[%s12 + $0xa0] sm:$0xff] %vm4671, %v4659
    %4693 = vst.msk [vmem:[%s12 + $0xa8] sm:$0xff] %vm4671, %v4660
    %4694 = vst.msk [vmem:[%s12 + $0xb0] sm:$0xff] %vm4671, %v4661
    %4695 = vst.msk [vmem:[%s12 + $0xb8] sm:$0xff] %vm4671, %v4662
    %4696 = vst.msk [vmem:[%s12 + $0xc0] sm:$0xff] %vm4671, %v4663
    %4697 = vst.msk [vmem:[%s12 + $0xc8] sm:$0xff] %vm4671, %v4664
    %4698 = vst.msk [vmem:[%s12 + $0xd0] sm:$0xff] %vm4671, %v4665
    %4699 = vst.msk [vmem:[%s12 + $0xd8] sm:$0xff] %vm4671, %v4666
    %4700 = vst.msk [vmem:[%s12 + $0xe0] sm:$0xff] %vm4671, %v4667
    %4701 = vst.msk [vmem:[%s12 + $0xe8] sm:$0xff] %vm4671, %v4668
    %4702 = vst.msk [vmem:[%s12 + $0xf0] sm:$0xff] %vm4671, %v4669
    %4703 = vst.msk [vmem:[%s12 + $0xf8] sm:$0xff] %vm4671, %v4670
    // Predicated region
    $region54: #{pod_nn_forward.1} parent=1 // pred_check
      _
    $region55: #{pod_nn_forward.1} parent=1 // pred_check_branch
      %4705 = sbr.rel (0) target = $region57
    $region56: #{pod_nn_forward.1} parent=1 // pred_region
      _
    $region57: #{pod_nn_forward.1} parent=1 // pred_fallthru
      _
    // Predicated region
    $region58: #{pod_nn_forward.1} parent=1 // pred_check
      _
    $region59: #{pod_nn_forward.1} parent=1 // pred_check_branch
      %4707 = sbr.rel (0) target = $region61
    $region60: #{pod_nn_forward.1} parent=1 // pred_region
      _
    $region61: #{pod_nn_forward.1} parent=1 // pred_fallthru
      _
    %4708 = vsyncpa [#allocation3], 1

</llo_original>
